<compile_context>
chip_gen: v5e
topology: v5e:2x2
jax: 0.10.0
libtpu: 0.0.40
codegen_flags: <defaults>
</compile_context>

<pallas_src>
import functools

import numpy as np

import jax
import jax.numpy as jnp
from jax.experimental import pallas as pl
from jax.experimental.pallas import tpu as pltpu


_IDX_SENTINEL = np.int32(2 ** 30)   # padded edges: matches no real node id


def _round_up(v, m):
    return ((v + m - 1) // m) * m


def _scaled_scatter_kernel(blk_tbl_ref, nblk_ref,        # scalar prefetch (SMEM)
                           index_ref, x_ref,             # VMEM input tiles
                           o_ref, *scratch,              # output + optional acc
                           inv_sqrt_avg, n_blk):
    # index_ref: (1, e_blk) int32   -- dst node id per (dst-sorted) edge
    # x_ref    : (e_blk, D)         -- dst-sorted edge features (bf16 stream)
    # o_ref    : (n_blk, D)         -- node rows of this node tile
    # scratch  : optional (n_blk, D) f32 accumulator (only if o_ref isn't f32)
    acc_ref = scratch[0] if scratch else o_ref
    i = pl.program_id(0)
    j = pl.program_id(1)

    @pl.when(j == 0)
    def _():
        acc_ref[...] = jnp.zeros_like(acc_ref)

    # Only the first nblk_ref[i] edge-block steps carry this node tile's
    # edges.  Later steps re-use the clamped last block index (DMA elided by
    # the pipeline) and skip all compute here.
    @pl.when(j < nblk_ref[i])
    def _():
        n0 = i * n_blk
        node_ids = n0 + jax.lax.broadcasted_iota(jnp.int32, (n_blk, 1), 0)
        edge_dst = index_ref[...]                              # (1, e_blk)
        # (n_blk,1) == (1,e_blk) -> (n_blk, e_blk); exact 0/1 in bf16.  Edges
        # whose destination lies outside this node tile (block-boundary
        # overlap, sentinel-padded edges) never match and contribute zero;
        # padded x rows are already zeroed by the gather fill.
        one_hot = (node_ids == edge_dst).astype(x_ref.dtype)
        acc_ref[...] += jnp.dot(one_hot, x_ref[...],
                                preferred_element_type=jnp.float32)

    @pl.when(j == pl.num_programs(1) - 1)
    def _():
        if scratch:
            o_ref[...] = (acc_ref[...] * inv_sqrt_avg).astype(o_ref.dtype)
        else:
            o_ref[...] = o_ref[...] * inv_sqrt_avg


def scaled_scatter(x, index, num_nodes, avg_aggregate_num,
                   *, n_blk=256, e_blk=2048, stream_bf16=True):
    """out[n] = (sum over edges e with index[e]==n of x[e]) / sqrt(avg).

    Edges with index outside [0, num_nodes) are silently dropped (masked
    scatter semantics).  Edges are bucketed by destination on the host and
    the per-node-tile edge-block schedule is passed via scalar prefetch, so
    each node tile only streams its own edge range.
    """
    E, D = x.shape
    assert index.shape == (E,)
    num_nodes = int(num_nodes)
    assert num_nodes >= 1 and E >= 1

    # ---- tile sizes: 8/128 aligned, never larger than the padded problem ----
    n_blk = max(8, min(n_blk, _round_up(num_nodes, 8)))
    e_blk = max(128, min(e_blk, _round_up(E, 128)))
    e_pad = _round_up(E, e_blk)
    n_e_blocks = e_pad // e_blk
    num_node_tiles = -(-num_nodes // n_blk)

    # ---- host-side bucketing: sort edges by destination and build the
    # per-node-tile edge-block schedule consumed by the index_maps ----
    idx_np = np.asarray(jax.device_get(index)).astype(np.int64)
    perm = np.argsort(idx_np, kind='stable')
    sorted_idx = idx_np[perm]

    tile_ids = np.arange(num_node_tiles, dtype=np.int64)
    starts = np.searchsorted(sorted_idx, tile_ids * n_blk, side='left')
    ends = np.searchsorted(sorted_idx, (tile_ids + 1) * n_blk, side='left')
    start_blk = starts // e_blk
    end_blk = -(-ends // e_blk)
    nblk = np.where(ends > starts, end_blk - start_blk, 0).astype(np.int32)
    max_nblk = max(int(nblk.max()), 1)

    js = np.arange(max_nblk, dtype=np.int64)[None, :]
    clamped = np.minimum(js, np.maximum(nblk[:, None].astype(np.int64) - 1, 0))
    blk_tbl = np.minimum(start_blk[:, None] + clamped, n_e_blocks - 1)
    blk_tbl = blk_tbl.astype(np.int32).reshape(-1)      # (tiles * max_nblk,)

    # ---- device-side inputs: gather into sorted order, pad tail rows with
    # zeros and cast for streaming, all in one pass (no jnp.pad copy of x) ----
    perm_pad = np.full((e_pad,), E, dtype=np.int32)     # E == out of range
    perm_pad[:E] = perm
    x_sorted = jnp.take(x, jnp.asarray(perm_pad), axis=0,
                        mode='fill', fill_value=0)

    if jnp.issubdtype(x.dtype, jnp.floating):
        stream_dtype = jnp.bfloat16 if stream_bf16 else x.dtype
    else:
        stream_dtype = jnp.float32   # exact for int features; v7x has no int MXU
    x_sorted = x_sorted.astype(stream_dtype)

    idx_pad = np.full((e_pad,), _IDX_SENTINEL, dtype=np.int32)
    idx_pad[:E] = sorted_idx
    index2d = jnp.asarray(idx_pad).reshape(1, e_pad)

    out_dtype = x.dtype
    needs_scratch = jnp.dtype(out_dtype) != jnp.dtype(jnp.float32)
    inv_sqrt_avg = float(1.0 / (float(avg_aggregate_num) ** 0.5))

    kernel = functools.partial(_scaled_scatter_kernel,
                               inv_sqrt_avg=inv_sqrt_avg, n_blk=n_blk)

    grid = (num_node_tiles, max_nblk)

    out = pl.pallas_call(
        kernel,
        out_shape=jax.ShapeDtypeStruct((num_nodes, D), out_dtype),
        grid_spec=pltpu.PrefetchScalarGridSpec(
            num_scalar_prefetch=2,
            grid=grid,
            in_specs=[
                # dst-sorted edge index tile (lane dim = edges)
                pl.BlockSpec((1, e_blk),
                             lambda i, j, blk, nb: (0, blk[i * max_nblk + j])),
                # dst-sorted edge feature tile
                pl.BlockSpec((e_blk, D),
                             lambda i, j, blk, nb: (blk[i * max_nblk + j], 0)),
            ],
            out_specs=pl.BlockSpec((n_blk, D),
                                   lambda i, j, blk, nb: (i, 0)),
            scratch_shapes=([pltpu.VMEM((n_blk, D), jnp.float32)]
                            if needs_scratch else []),
        ),
        compiler_params=pltpu.CompilerParams(
            dimension_semantics=("parallel", "arbitrary")),
        # VMEM footprint is small (~2-3 MiB at 256x2048xD=128); set
        # vmem_limit_bytes here if D grows to the full Equiformer irreps width.
    )(jnp.asarray(blk_tbl), jnp.asarray(nblk), index2d, x_sorted)

    return out


if __name__ == "__main__":
    key = jax.random.PRNGKey(0)
    k_x, k_idx = jax.random.split(key)

    # Small synthetic graph: E edges aggregated onto N nodes, feature dim D.
    # Shapes deliberately NOT multiples of the tile sizes to exercise the
    # ragged node tile, padded edge blocks, and skipped edge-block steps.
    E, D, N = 3000, 128, 600
    avg_aggregate_num = 10   # module "parameter" (deterministic, no checkpoint)

    x = jax.random.normal(k_x, (E, D), dtype=jnp.float32)
    index = jax.random.randint(k_idx, (E,), 0, N, dtype=jnp.int32)

    scale = 1.0 / jnp.sqrt(jnp.float32(avg_aggregate_num))
    ref_bf16 = jax.ops.segment_sum(
        x.astype(jnp.bfloat16).astype(jnp.float32), index,
        num_segments=N) * scale
    ref_f32 = jax.ops.segment_sum(x, index, num_segments=N) * scale

    # --- fast path: bf16 streaming + f32 accumulation, default tiles ---
    out = jax.block_until_ready(
        scaled_scatter(x, index, N, avg_aggregate_num))
    assert out.shape == (N, D)
    assert jnp.allclose(out, ref_bf16, atol=1e-5, rtol=1e-5), \
        "bf16-stream path mismatch vs reference"

    # --- small tiles: exercises multi-tile schedule / skipped edge steps ---
    out_small = jax.block_until_ready(
        scaled_scatter(x, index, N, avg_aggregate_num, n_blk=128, e_blk=512))
    assert jnp.allclose(out_small, ref_bf16, atol=1e-5, rtol=1e-5), \
        "small-tile path mismatch vs reference"

    # --- exact path: f32 streaming / f32 MXU operands ---
    out_f32 = jax.block_until_ready(
        scaled_scatter(x, index, N, avg_aggregate_num, stream_bf16=False))
    assert jnp.allclose(out_f32, ref_f32, atol=1e-4, rtol=1e-4), \
        "f32 path mismatch vs reference"

    print("KERNEL_OK")
</pallas_src>

<mosaic_0001>
module attributes {stable_mosaic.version = 11 : i64} {
  func.func @_scaled_scatter_kernel(%arg0: i32, %arg1: i32, %arg2: memref<6xi32, #tpu.memory_space<smem>>, %arg3: memref<3xi32, #tpu.memory_space<smem>>, %arg4: memref<1x2048xi32, #tpu.memory_space<vmem>>, %arg5: memref<2048x128xbf16, #tpu.memory_space<vmem>>, %arg6: memref<256x128xf32, #tpu.memory_space<vmem>>) attributes {dimension_semantics = [#tpu.dimension_semantics<parallel>, #tpu.dimension_semantics<arbitrary>], iteration_bounds = array<i64: 3, 2>, scalar_prefetch = 2 : i64, scratch_operands = 0 : i64, tpu.core_type = #tpu.core_type<tc>, window_params = [{transform_indices = @transform_0, window_bounds = array<i64: 1, 2048>}, {transform_indices = @transform_1, window_bounds = array<i64: 2048, 128>}, {transform_indices = @transform_2, window_bounds = array<i64: 256, 128>}]} {
    %c0_i32 = arith.constant 0 : i32
    %0 = arith.cmpi eq, %arg1, %c0_i32 : i32
    %1 = arith.extui %0 : i1 to i32
    %c0_i32_0 = arith.constant 0 : i32
    %2 = arith.cmpi ne, %1, %c0_i32_0 : i32
    scf.if %2 {
      %cst = arith.constant 0.000000e+00 : f32
      %11 = vector.broadcast %cst : f32 to vector<256x128xf32>
      %c0 = arith.constant 0 : index
      %c0_3 = arith.constant 0 : index
      %12 = vector.load %arg6[%c0, %c0_3] : memref<256x128xf32, #tpu.memory_space<vmem>>, vector<256x128xf32>
      tpu.vector_store %arg6[%c0, %c0_3], %11 {strides = array<i32>} : memref<256x128xf32, #tpu.memory_space<vmem>>, vector<256x128xf32>,
    } else {
    }
    %3 = arith.index_cast %arg0 : i32 to index
    %4 = memref.load %arg3[%3] : memref<3xi32, #tpu.memory_space<smem>>
    %5 = arith.cmpi slt, %arg1, %4 : i32
    %6 = arith.extui %5 : i1 to i32
    %c0_i32_1 = arith.constant 0 : i32
    %7 = arith.cmpi ne, %6, %c0_i32_1 : i32
    scf.if %7 {
      %c256_i32 = arith.constant 256 : i32
      %11 = arith.muli %arg0, %c256_i32 : i32
      %12 = tpu.iota {dimensions = array<i32: 0>} : vector<256x1xi32>
      %13 = vector.broadcast %11 : i32 to vector<256x1xi32>
      %14 = arith.addi %13, %12 : vector<256x1xi32>
      %c0 = arith.constant 0 : index
      %c0_3 = arith.constant 0 : index
      %15 = vector.load %arg4[%c0, %c0_3] : memref<1x2048xi32, #tpu.memory_space<vmem>>, vector<1x2048xi32>
      %16 = vector.broadcast %14 : vector<256x1xi32> to vector<256x2048xi32>
      %17 = vector.broadcast %15 : vector<1x2048xi32> to vector<256x2048xi32>
      %18 = arith.cmpi eq, %16, %17 : vector<256x2048xi32>
      %19 = arith.extui %18 : vector<256x2048xi1> to vector<256x2048xi32>
      %20 = arith.sitofp %19 : vector<256x2048xi32> to vector<256x2048xf32>
      %21 = arith.truncf %20 : vector<256x2048xf32> to vector<256x2048xbf16>
      %c0_4 = arith.constant 0 : index
      %c0_5 = arith.constant 0 : index
      %22 = vector.load %arg6[%c0_4, %c0_5] : memref<256x128xf32, #tpu.memory_space<vmem>>, vector<256x128xf32>
      %c0_6 = arith.constant 0 : index
      %c0_7 = arith.constant 0 : index
      %23 = vector.load %arg5[%c0_6, %c0_7] : memref<2048x128xbf16, #tpu.memory_space<vmem>>, vector<2048x128xbf16>
      %cst = arith.constant dense<0.000000e+00> : vector<256x128xf32>
      %24 = tpu.matmul %21, %23, %cst {dimension_numbers = #tpu.dot_dimension_numbers<[1], [0], [0], [1], [0, 0, 1, 1], [], []>} : vector<256x2048xbf16>, vector<2048x128xbf16>, vector<256x128xf32> -> vector<256x128xf32>
      %25 = arith.addf %22, %24 : vector<256x128xf32>
      %c0_8 = arith.constant 0 : index
      %c0_9 = arith.constant 0 : index
      %26 = vector.load %arg6[%c0_8, %c0_9] : memref<256x128xf32, #tpu.memory_space<vmem>>, vector<256x128xf32>
      tpu.vector_store %arg6[%c0_8, %c0_9], %25 {strides = array<i32>} : memref<256x128xf32, #tpu.memory_space<vmem>>, vector<256x128xf32>,
    } else {
    }
    %c1_i32 = arith.constant 1 : i32
    %8 = arith.cmpi eq, %arg1, %c1_i32 : i32
    %9 = arith.extui %8 : i1 to i32
    %c0_i32_2 = arith.constant 0 : i32
    %10 = arith.cmpi ne, %9, %c0_i32_2 : i32
    scf.if %10 {
      %c0 = arith.constant 0 : index
      %c0_3 = arith.constant 0 : index
      %11 = vector.load %arg6[%c0, %c0_3] : memref<256x128xf32, #tpu.memory_space<vmem>>, vector<256x128xf32>
      %cst = arith.constant 0.316227764 : f32
      %12 = vector.broadcast %cst : f32 to vector<256x128xf32>
      %13 = arith.mulf %11, %12 : vector<256x128xf32>
      %c0_4 = arith.constant 0 : index
      %c0_5 = arith.constant 0 : index
      %14 = vector.load %arg6[%c0_4, %c0_5] : memref<256x128xf32, #tpu.memory_space<vmem>>, vector<256x128xf32>
      tpu.vector_store %arg6[%c0_4, %c0_5], %13 {strides = array<i32>} : memref<256x128xf32, #tpu.memory_space<vmem>>, vector<256x128xf32>,
    } else {
    }
    return
  }
  func.func @transform_0(%arg0: i32, %arg1: i32, %arg2: memref<6xi32, #tpu.memory_space<smem>>, %arg3: memref<3xi32, #tpu.memory_space<smem>>) -> (i32, i32) {
    %c2_i32 = arith.constant 2 : i32
    %0 = arith.muli %arg0, %c2_i32 : i32
    %1 = arith.addi %0, %arg1 : i32
    %2 = arith.index_cast %1 : i32 to index
    %3 = memref.load %arg2[%2] : memref<6xi32, #tpu.memory_space<smem>>
    %c0_i32 = arith.constant 0 : i32
    %c0_i32_0 = arith.constant 0 : i32
    return %c0_i32, %3 : i32, i32
  }
  func.func @transform_1(%arg0: i32, %arg1: i32, %arg2: memref<6xi32, #tpu.memory_space<smem>>, %arg3: memref<3xi32, #tpu.memory_space<smem>>) -> (i32, i32) {
    %c2_i32 = arith.constant 2 : i32
    %0 = arith.muli %arg0, %c2_i32 : i32
    %1 = arith.addi %0, %arg1 : i32
    %2 = arith.index_cast %1 : i32 to index
    %3 = memref.load %arg2[%2] : memref<6xi32, #tpu.memory_space<smem>>
    %c0_i32 = arith.constant 0 : i32
    %c0_i32_0 = arith.constant 0 : i32
    return %3, %c0_i32 : i32, i32
  }
  func.func @transform_2(%arg0: i32, %arg1: i32, %arg2: memref<6xi32, #tpu.memory_space<smem>>, %arg3: memref<3xi32, #tpu.memory_space<smem>>) -> (i32, i32) {
    %c0_i32 = arith.constant 0 : i32
    %c0_i32_0 = arith.constant 0 : i32
    return %arg0, %c0_i32 : i32, i32
  }
}

</mosaic_0001>

<llo_original>
// kernel: tpu_custom_call.1
$region0: #{tpu_custom_call.1}
  #allocation0 [shape = 'u32[]', space=smem, size = 0x4, offset = 0x4, fixed_abs, tag = 'smem constant byte address 0x4 - core index']
  #allocation1 [shape = 'u32[72,128]{1,0:T(1,128)}', space=vmem, size = 0x9000, scoped, tag = 'internal scratch']
  #allocation2 [shape = 's32[1]{0}', space=sflag, size = 0x4, scoped, tag = 'scoped memory for tpu_custom_call.1']
  #allocation3 [shape = 'u8[512]{0}', space=smem, size = 0x200, scoped, tag = 'prefetched SMEM operand 0']
  #allocation4 [shape = 'u8[512]{0}', space=smem, size = 0x200, scoped, tag = 'prefetched SMEM operand 1']
  %s0 = inlined_call_operand.hbm [shape: s32[6], index: 0, kind: input, shape index: {}]
  %s1 = inlined_call_operand.hbm [shape: s32[3], index: 1, kind: input, shape index: {}]
  %s2 = inlined_call_operand.hbm [shape: s32[1,4096], index: 2, kind: input, shape index: {}]
  %s3 = inlined_call_operand.hbm [shape: bf16[4096,128], index: 3, kind: input, shape index: {}]
  %s4 = inlined_call_operand.hbm [shape: f32[600,128], index: 4, kind: output, shape index: {}]
  %s5 = sld [smem:[#allocation0]]
  $region61: #{tpu_custom_call.1} parent=0
    _
  %s7 = ssub.s32 1, %s5
  %s8 = scalar_select 0, %s7, %s5
  %s10 = sshll.u32 %s0, 4
  %s11 = int_to_ptr.hbm [resolvable:$true] %s10
  %13 = dma.hbm_to_smem %s11, 16, [#allocation3], [#allocation2]
  %s15 = sshll.u32 %s1, 4
  %s16 = int_to_ptr.hbm [resolvable:$true] %s15
  %18 = dma.hbm_to_smem %s16, 16, [#allocation4], [#allocation2]
  %20 = dma.done [#allocation2], 32
  %21 = sfence
  $region1: #{tpu_custom_call.1} parent=0
    #allocation5 [shape = 'u8[16384]{0}', space=vmem, size = 0x4000, scoped, tag = 'input window, operand 2']
    #allocation6 [shape = 's32[2]{0}', space=sflag, size = 0x8, scoped, tag = 'scoped memory for tpu_custom_call.1']
    #allocation7 [shape = 's32[2]{0}', space=sflag, size = 0x8, scoped, tag = 'scoped memory for tpu_custom_call.1']
    #allocation8 [shape = 'u8[1048576]{0}', space=vmem, size = 0x100000, scoped, tag = 'input window, operand 3']
    #allocation9 [shape = 's32[2]{0}', space=sflag, size = 0x8, scoped, tag = 'scoped memory for tpu_custom_call.1']
    #allocation10 [shape = 'u8[262144]{0}', space=vmem, size = 0x40000, scoped, tag = 'output window, operand 0']
    %22 = vsyncpa [#allocation6], 0
    %s23 = scalar_lea.sflag [#allocation6], 1
    %24 = vsyncpa %s23, 0
    %25 = vsyncpa [#allocation9], 0
    %s26 = scalar_lea.sflag [#allocation9], 1
    %27 = vsyncpa %s26, 0
    %28 = vsyncpa [#allocation7], 0
    %s29 = scalar_lea.sflag [#allocation7], 1
    %30 = vsyncpa %s29, 0
    loop: start=0, step=1, limit=8
    $region2: #{tpu_custom_call.1} parent=1 // loop_pre_header
      _
    $region3: #{tpu_custom_call.1} parent=1 // loop_header
      %s32 = sphi 0, %s36
      %p33 = scmp.ge.s32.totalorder %s32, 8
      %s39 = sphi 0, %s51
      %s40 = sphi 0, %s47
      %s41 = sphi 0, %s39
      %s42 = sphi 0, %s40
      %s43 = sphi 0, %s41
      %s44 = sphi 0, %s42
      %s60 = sphi 0, %s62
      %s63 = sphi 0, %s60
      %s64 = sphi 0, %s63
      %s80 = sphi 0, %s64
      %s92 = sphi 0, %s94
      %s95 = sphi 0, %s92
      %s96 = sphi 0, %s95
      %s112 = sphi 0, %s96
      %s118 = sphi 0, %s120
      %s121 = sphi 0, %s118
      %s122 = sphi 0, %s121
      %s138 = sphi 0, %s122
    $region4: #{tpu_custom_call.1} parent=1 // loop_header_branch
      %35 = sbr.rel (%p33) target = $region8
    $region5: #{tpu_custom_call.1} parent=1 // loop_body
      %s37 = ssub.s32 %s32, 1
      %s38 = ssub.s32 %s32, 2
      %s45 = sadd.s32 1, %s40
      %p46 = scmp.ge.s32.totalorder %s45, 2
      %s47 = scalar_select %p46, 0, %s45
      %s48 = sadd.s32 1, %s39
      %s49 = scalar_select %p46, %s48, %s39
      %p50 = scmp.ge.s32.totalorder %s49, 3
      %s51 = scalar_select %p50, 0, %s49
      %s52 = smul.u32 %s39, 2
      %s53 = sadd.s32 %s52, %s40
      %s54 = sld [smem:[#allocation3 + %s53]]
      %s55 = smul.u32 %s51, 2
      %s56 = sadd.s32 %s55, %s47
      %s57 = sld [smem:[#allocation3 + %s56]]
      %s58 = ssub.s32 %s54, %s57
      %p59 = scmp.eq.s32.totalorder %s58, 0
      %s61 = sadd.s32 %s60, 1
      %s62 = scalar_select %p59, %s60, %s61
      %p65 = pneg %p59
      %p66 = scmp.eq.s32.totalorder %s32, 5
      %p67 = por %p65, %p66
      %p68 = scmp.ne.s32.totalorder %s60, %s63
      %p69 = scmp.eq.s32.totalorder %s32, 0
      %p70 = por %p68, %p69
      %p71 = scmp.ne.s32.totalorder %s60, %s63
      %p72 = scmp.eq.s32.totalorder %s37, 5
      %p73 = por %p71, %p72
      %p74 = scmp.ne.s32.totalorder %s63, %s64
      %p75 = scmp.eq.s32.totalorder %s37, 0
      %p76 = por %p74, %p75
      %p77 = scmp.ne.s32.totalorder %s63, %s64
      %p78 = scmp.eq.s32.totalorder %s38, 5
      %p79 = por %p77, %p78
      %p81 = scmp.ne.s32.totalorder %s64, %s80
      %p82 = scmp.eq.s32.totalorder %s38, 0
      %p83 = por %p81, %p82
      %s84 = smul.u32 %s39, 2
      %s85 = sadd.s32 %s84, %s40
      %s86 = sld [smem:[#allocation3 + %s85]]
      %s87 = smul.u32 %s51, 2
      %s88 = sadd.s32 %s87, %s47
      %s89 = sld [smem:[#allocation3 + %s88]]
      %s90 = ssub.s32 %s86, %s89
      %p91 = scmp.eq.s32.totalorder %s90, 0
      %s93 = sadd.s32 %s92, 1
      %s94 = scalar_select %p91, %s92, %s93
      %p97 = pneg %p91
      %p98 = scmp.eq.s32.totalorder %s32, 5
      %p99 = por %p97, %p98
      %p100 = scmp.ne.s32.totalorder %s92, %s95
      %p101 = scmp.eq.s32.totalorder %s32, 0
      %p102 = por %p100, %p101
      %p103 = scmp.ne.s32.totalorder %s92, %s95
      %p104 = scmp.eq.s32.totalorder %s37, 5
      %p105 = por %p103, %p104
      %p106 = scmp.ne.s32.totalorder %s95, %s96
      %p107 = scmp.eq.s32.totalorder %s37, 0
      %p108 = por %p106, %p107
      %p109 = scmp.ne.s32.totalorder %s95, %s96
      %p110 = scmp.eq.s32.totalorder %s38, 5
      %p111 = por %p109, %p110
      %p113 = scmp.ne.s32.totalorder %s96, %s112
      %p114 = scmp.eq.s32.totalorder %s38, 0
      %p115 = por %p113, %p114
      %s116 = ssub.s32 %s39, %s51
      %p117 = scmp.eq.s32.totalorder %s116, 0
      %s119 = sadd.s32 %s118, 1
      %s120 = scalar_select %p117, %s118, %s119
      %p123 = pneg %p117
      %p124 = scmp.eq.s32.totalorder %s32, 5
      %p125 = por %p123, %p124
      %p126 = scmp.ne.s32.totalorder %s118, %s121
      %p127 = scmp.eq.s32.totalorder %s32, 0
      %p128 = por %p126, %p127
      %p129 = scmp.ne.s32.totalorder %s118, %s121
      %p130 = scmp.eq.s32.totalorder %s37, 5
      %p131 = por %p129, %p130
      %p132 = scmp.ne.s32.totalorder %s121, %s122
      %p133 = scmp.eq.s32.totalorder %s37, 0
      %p134 = por %p132, %p133
      %p135 = scmp.ne.s32.totalorder %s121, %s122
      %p136 = scmp.eq.s32.totalorder %s38, 5
      %p137 = por %p135, %p136
      %p139 = scmp.ne.s32.totalorder %s122, %s138
      %p140 = scmp.eq.s32.totalorder %s38, 0
      %p141 = por %p139, %p140
      %p142 = scmp.le.s32.totalorder 1, %s32
      %p143 = scmp.lt.s32.totalorder %s32, 7
      %p144 = pnand %p142, %p143
      %p145 = pneg %p144
      // Predicated region
      $region9: #{tpu_custom_call.1} parent=5 // pred_check
        _
      $region10: #{tpu_custom_call.1} parent=5 // pred_check_branch
        %147 = sbr.rel (%p144) target = $region12
      $region11: #{tpu_custom_call.1} parent=5 // pred_region
        %s148 = ssub.s32 %s32, 1
      $region12: #{tpu_custom_call.1} parent=5 // pred_fallthru
        _
      %p149 = scmp.lt.s32.totalorder %s32, 6
      // Predicated region
      $region13: #{tpu_custom_call.1} parent=5 // pred_check
        %p150 = pneg %p149
      $region14: #{tpu_custom_call.1} parent=5 // pred_check_branch
        %152 = sbr.rel (%p150) target = $region16
      $region15: #{tpu_custom_call.1} parent=5 // pred_region
        // Predicated region
        $region17: #{tpu_custom_call.1} parent=15 // pred_check
          %p153 = pneg %p70
        $region18: #{tpu_custom_call.1} parent=15 // pred_check_branch
          %155 = sbr.rel (%p153) target = $region20
        $region19: #{tpu_custom_call.1} parent=15 // pred_region
          %s156 = sand.u32 %s60, 1
          %s157 = scalar_lea.sflag [#allocation6], %s156
          %s158 = sand.u32 %s60, 1
          %s159 = smul.addr %s158, 16
          %s160 = scalar_lea.vmem [#allocation5], %s159
          %s161 = smul.u32 %s39, 2
          %s162 = sadd.s32 %s161, %s40
          %s163 = sld [smem:[#allocation3 + %s162]]
          %s164 = smul.u32 16, %s163
          %166 = vsyncadd %s157, 0
          %s167 = scalar_lea.hbm %s2, %s164
          %s169 = sshll.u32 %s167, 4
          %s170 = int_to_ptr.hbm [resolvable:$true] %s169
          %s171 = sshll.u32 %s160, 4
          %s172 = int_to_ptr.vmem [resolvable:$true] %s171
          %174 = dma.hbm_to_vmem [thread:$0]  %s170, 256, %s172, %s157
        $region20: #{tpu_custom_call.1} parent=15 // pred_fallthru
          _
        // Predicated region
        $region21: #{tpu_custom_call.1} parent=15 // pred_check
          %p175 = pneg %p102
        $region22: #{tpu_custom_call.1} parent=15 // pred_check_branch
          %177 = sbr.rel (%p175) target = $region24
        $region23: #{tpu_custom_call.1} parent=15 // pred_region
          %s178 = sand.u32 %s92, 1
          %s179 = scalar_lea.sflag [#allocation9], %s178
          %s180 = sand.u32 %s92, 1
          %s181 = smul.addr %s180, 1024
          %s182 = scalar_lea.vmem [#allocation8], %s181
          %s183 = smul.u32 %s39, 2
          %s184 = sadd.s32 %s183, %s40
          %s185 = sld [smem:[#allocation3 + %s184]]
          %s186 = smul.u32 256, %s185
          %188 = vsyncadd %s179, 0
          %s189 = smul.addr %s186, 4
          %s190 = scalar_lea.hbm %s3, %s189
          %s191 = sshll.u32 %s190, 4
          %s192 = int_to_ptr.hbm [resolvable:$true] %s191
          %s193 = sshll.u32 %s182, 4
          %s194 = int_to_ptr.vmem [resolvable:$true] %s193
          %199 = dma.hbm_to_vmem [thread:$0]  %s192, 16384, %s194, %s179, 64, 64, 4
        $region24: #{tpu_custom_call.1} parent=15 // pred_fallthru
          _
      $region16: #{tpu_custom_call.1} parent=5 // pred_fallthru
        _
      %p200 = scmp.le.s32.totalorder 1, %s32
      %p201 = scmp.lt.s32.totalorder %s32, 7
      %p202 = pnand %p200, %p201
      %p203 = pneg %p202
      // Predicated region
      $region25: #{tpu_custom_call.1} parent=5 // pred_check
        _
      $region26: #{tpu_custom_call.1} parent=5 // pred_check_branch
        %205 = sbr.rel (%p202) target = $region28
      $region27: #{tpu_custom_call.1} parent=5 // pred_region
        %s206 = ssub.s32 %s32, 1
        %s207 = sand.u32 %s63, 1
        %s208 = scalar_lea.sflag [#allocation6], %s207
        %s209 = sand.u32 %s63, 1
        %s210 = smul.addr %s209, 16
        %s211 = scalar_lea.vmem [#allocation5], %s210
        // Predicated region
        $region29: #{tpu_custom_call.1} parent=27 // pred_check
          %p212 = pneg %p76
        $region30: #{tpu_custom_call.1} parent=27 // pred_check_branch
          %214 = sbr.rel (%p212) target = $region32
        $region31: #{tpu_custom_call.1} parent=27 // pred_region
          %216 = dma.done %s208, 256
        $region32: #{tpu_custom_call.1} parent=27 // pred_fallthru
          _
        %s217 = sand.u32 %s95, 1
        %s218 = scalar_lea.sflag [#allocation9], %s217
        %s219 = sand.u32 %s95, 1
        %s220 = smul.addr %s219, 1024
        %s221 = scalar_lea.vmem [#allocation8], %s220
        // Predicated region
        $region33: #{tpu_custom_call.1} parent=27 // pred_check
          %p222 = pneg %p108
        $region34: #{tpu_custom_call.1} parent=27 // pred_check_branch
          %224 = sbr.rel (%p222) target = $region36
        $region35: #{tpu_custom_call.1} parent=27 // pred_region
          %226 = dma.done %s218, 16384
        $region36: #{tpu_custom_call.1} parent=27 // pred_fallthru
          _
        %s227 = sand.u32 %s63, 1
        %s228 = scalar_lea.sflag [#allocation6], %s227
        %s229 = sand.u32 %s63, 1
        %s230 = smul.addr %s229, 16
        %s231 = scalar_lea.vmem [#allocation5], %s230
        %p232 = pneg %p76
        %p233 = pneg %p73
        %s234 = sand.u32 %s95, 1
        %s235 = scalar_lea.sflag [#allocation9], %s234
        %s236 = sand.u32 %s95, 1
        %s237 = smul.addr %s236, 1024
        %s238 = scalar_lea.vmem [#allocation8], %s237
        %p239 = pneg %p108
        %p240 = pneg %p105
        %p241 = pneg %p134
        %p242 = pneg %p131
        %s243 = sand.u32 %s121, 1
        %s244 = scalar_lea.sflag [#allocation7], %s243
        %s245 = sand.u32 %s121, 1
        %s246 = smul.addr %s245, 256
        %s247 = scalar_lea.vmem [#allocation10], %s246
        %s248 = smul.u32 %s41, 2
        %s249 = sadd.s32 %s248, %s42
        %s250 = sld [smem:[#allocation3 + %s249]]
        %s251 = smul.u32 16, %s250
        %s252 = smul.u32 %s41, 2
        %s253 = sadd.s32 %s252, %s42
        %s254 = sld [smem:[#allocation3 + %s253]]
        %s255 = smul.u32 256, %s254
        %s256 = smul.u32 32, %s41
        %s257 = ssub.s32 75, %s256
        %p258 = scmp.lt.s32.totalorder %s257, 32
        %s259 = scalar_select %p258, %s257, 32
        %s260 = smul.u32 8, %s259
        %p261 = scmp.eq.s32.totalorder %s42, 0
        // Predicated region
        $region37: #{tpu_custom_call.1} parent=27 // pred_check
          %p262 = pneg %p261
        $region38: #{tpu_custom_call.1} parent=27 // pred_check_branch
          %264 = sbr.rel (%p262) target = $region40
        $region39: #{tpu_custom_call.1} parent=27 // pred_region
          %265 = vst [vmem:[%s247] sm:$0xff] 0.0
          %266 = vst [vmem:[%s247 + $0x8] sm:$0xff] 0.0
          %267 = vst [vmem:[%s247 + $0x10] sm:$0xff] 0.0
          %268 = vst [vmem:[%s247 + $0x18] sm:$0xff] 0.0
          %269 = vst [vmem:[%s247 + $0x20] sm:$0xff] 0.0
          %270 = vst [vmem:[%s247 + $0x28] sm:$0xff] 0.0
          %271 = vst [vmem:[%s247 + $0x30] sm:$0xff] 0.0
          %272 = vst [vmem:[%s247 + $0x38] sm:$0xff] 0.0
          %273 = vst [vmem:[%s247 + $0x40] sm:$0xff] 0.0
          %274 = vst [vmem:[%s247 + $0x48] sm:$0xff] 0.0
          %275 = vst [vmem:[%s247 + $0x50] sm:$0xff] 0.0
          %276 = vst [vmem:[%s247 + $0x58] sm:$0xff] 0.0
          %277 = vst [vmem:[%s247 + $0x60] sm:$0xff] 0.0
          %278 = vst [vmem:[%s247 + $0x68] sm:$0xff] 0.0
          %279 = vst [vmem:[%s247 + $0x70] sm:$0xff] 0.0
          %280 = vst [vmem:[%s247 + $0x78] sm:$0xff] 0.0
          %281 = vst [vmem:[%s247 + $0x80] sm:$0xff] 0.0
          %282 = vst [vmem:[%s247 + $0x88] sm:$0xff] 0.0
          %283 = vst [vmem:[%s247 + $0x90] sm:$0xff] 0.0
          %284 = vst [vmem:[%s247 + $0x98] sm:$0xff] 0.0
          %285 = vst [vmem:[%s247 + $0xa0] sm:$0xff] 0.0
          %286 = vst [vmem:[%s247 + $0xa8] sm:$0xff] 0.0
          %287 = vst [vmem:[%s247 + $0xb0] sm:$0xff] 0.0
          %288 = vst [vmem:[%s247 + $0xb8] sm:$0xff] 0.0
          %289 = vst [vmem:[%s247 + $0xc0] sm:$0xff] 0.0
          %290 = vst [vmem:[%s247 + $0xc8] sm:$0xff] 0.0
          %291 = vst [vmem:[%s247 + $0xd0] sm:$0xff] 0.0
          %292 = vst [vmem:[%s247 + $0xd8] sm:$0xff] 0.0
          %293 = vst [vmem:[%s247 + $0xe0] sm:$0xff] 0.0
          %294 = vst [vmem:[%s247 + $0xe8] sm:$0xff] 0.0
          %295 = vst [vmem:[%s247 + $0xf0] sm:$0xff] 0.0
          %296 = vst [vmem:[%s247 + $0xf8] sm:$0xff] 0.0
        $region40: #{tpu_custom_call.1} parent=27 // pred_fallthru
          _
        %s297 = sld [smem:[#allocation4 + %s41]]
        %p298 = scmp.lt.s32.totalorder %s42, %s297
        // Predicated region
        $region41: #{tpu_custom_call.1} parent=27 // pred_check
          %p299 = pneg %p298
        $region42: #{tpu_custom_call.1} parent=27 // pred_check_branch
          %301 = sbr.rel (%p299) target = $region44
        $region43: #{tpu_custom_call.1} parent=27 // pred_region
          %s302 = smul.u32 %s41, 256
          %v303 = vlaneseq
          %v304 = vshrl.u32 %v303, 7
          %v305 = vadd.s32 %v304, 8
          %v306 = vadd.s32 %v304, 16
          %v307 = vadd.s32 %v304, 24
          %v308 = vadd.s32 %v304, 32
          %v309 = vadd.s32 %v304, 40
          %v310 = vadd.s32 %v304, 48
          %v311 = vadd.s32 %v304, 56
          %v312 = vadd.s32 %v304, 64
          %v313 = vadd.s32 %v304, 72
          %v314 = vadd.s32 %v304, 80
          %v315 = vadd.s32 %v304, 88
          %v316 = vadd.s32 %v304, 96
          %v317 = vadd.s32 %v304, 104
          %v318 = vadd.s32 %v304, 112
          %v319 = vadd.s32 %v304, 120
          %v320 = vadd.s32 %v304, 128
          %v321 = vadd.s32 %v304, 136
          %v322 = vadd.s32 %v304, 144
          %v323 = vadd.s32 %v304, 152
          %v324 = vadd.s32 %v304, 160
          %v325 = vadd.s32 %v304, 168
          %v326 = vadd.s32 %v304, 176
          %v327 = vadd.s32 %v304, 184
          %v328 = vadd.s32 %v304, 192
          %v329 = vadd.s32 %v304, 200
          %v330 = vadd.s32 %v304, 208
          %v331 = vadd.s32 %v304, 216
          %v332 = vadd.s32 %v304, 224
          %v333 = vadd.s32 %v304, 232
          %v334 = vadd.s32 %v304, 240
          %v335 = vadd.s32 %v304, 248
          %v336 = vstv %s302
          %v337 = vadd.s32 %v336, %v304
          %v338 = vadd.s32 %v336, %v305
          %v339 = vadd.s32 %v336, %v306
          %v340 = vadd.s32 %v336, %v307
          %v341 = vadd.s32 %v336, %v308
          %v342 = vadd.s32 %v336, %v309
          %v343 = vadd.s32 %v336, %v310
          %v344 = vadd.s32 %v336, %v311
          %v345 = vadd.s32 %v336, %v312
          %v346 = vadd.s32 %v336, %v313
          %v347 = vadd.s32 %v336, %v314
          %v348 = vadd.s32 %v336, %v315
          %v349 = vadd.s32 %v336, %v316
          %v350 = vadd.s32 %v336, %v317
          %v351 = vadd.s32 %v336, %v318
          %v352 = vadd.s32 %v336, %v319
          %v353 = vadd.s32 %v336, %v320
          %v354 = vadd.s32 %v336, %v321
          %v355 = vadd.s32 %v336, %v322
          %v356 = vadd.s32 %v336, %v323
          %v357 = vadd.s32 %v336, %v324
          %v358 = vadd.s32 %v336, %v325
          %v359 = vadd.s32 %v336, %v326
          %v360 = vadd.s32 %v336, %v327
          %v361 = vadd.s32 %v336, %v328
          %v362 = vadd.s32 %v336, %v329
          %v363 = vadd.s32 %v336, %v330
          %v364 = vadd.s32 %v336, %v331
          %v365 = vadd.s32 %v336, %v332
          %v366 = vadd.s32 %v336, %v333
          %v367 = vadd.s32 %v336, %v334
          %v368 = vadd.s32 %v336, %v335
          %v369 = vld [vmem:[%s211] sm:$0xff]
          %v370 = vld [vmem:[%s211 + $0x8] sm:$0xff]
          %v371 = vperm.slane %v369, 0
          %v372 = vperm.slane %v369, 1
          %v373 = vperm.slane %v369, 2
          %v374 = vperm.slane %v369, 3
          %v375 = vperm.slane %v369, 4
          %v376 = vperm.slane %v369, 5
          %v377 = vperm.slane %v369, 6
          %v378 = vperm.slane %v369, 7
          %v379 = vperm.slane %v370, 0
          %v380 = vperm.slane %v370, 1
          %v381 = vperm.slane %v370, 2
          %v382 = vperm.slane %v370, 3
          %v383 = vperm.slane %v370, 4
          %v384 = vperm.slane %v370, 5
          %v385 = vperm.slane %v370, 6
          %v386 = vperm.slane %v370, 7
          %vm387 = vcmp.eq.s32.totalorder %v337, %v371
          %vm388 = vcmp.eq.s32.totalorder %v337, %v372
          %vm389 = vcmp.eq.s32.totalorder %v337, %v373
          %vm390 = vcmp.eq.s32.totalorder %v337, %v374
          %vm391 = vcmp.eq.s32.totalorder %v337, %v375
          %vm392 = vcmp.eq.s32.totalorder %v337, %v376
          %vm393 = vcmp.eq.s32.totalorder %v337, %v377
          %vm394 = vcmp.eq.s32.totalorder %v337, %v378
          %vm395 = vcmp.eq.s32.totalorder %v337, %v379
          %vm396 = vcmp.eq.s32.totalorder %v337, %v380
          %vm397 = vcmp.eq.s32.totalorder %v337, %v381
          %vm398 = vcmp.eq.s32.totalorder %v337, %v382
          %vm399 = vcmp.eq.s32.totalorder %v337, %v383
          %vm400 = vcmp.eq.s32.totalorder %v337, %v384
          %vm401 = vcmp.eq.s32.totalorder %v337, %v385
          %vm402 = vcmp.eq.s32.totalorder %v337, %v386
          %vm403 = vcmp.eq.s32.totalorder %v338, %v371
          %vm404 = vcmp.eq.s32.totalorder %v338, %v372
          %vm405 = vcmp.eq.s32.totalorder %v338, %v373
          %vm406 = vcmp.eq.s32.totalorder %v338, %v374
          %vm407 = vcmp.eq.s32.totalorder %v338, %v375
          %vm408 = vcmp.eq.s32.totalorder %v338, %v376
          %vm409 = vcmp.eq.s32.totalorder %v338, %v377
          %vm410 = vcmp.eq.s32.totalorder %v338, %v378
          %vm411 = vcmp.eq.s32.totalorder %v338, %v379
          %vm412 = vcmp.eq.s32.totalorder %v338, %v380
          %vm413 = vcmp.eq.s32.totalorder %v338, %v381
          %vm414 = vcmp.eq.s32.totalorder %v338, %v382
          %vm415 = vcmp.eq.s32.totalorder %v338, %v383
          %vm416 = vcmp.eq.s32.totalorder %v338, %v384
          %vm417 = vcmp.eq.s32.totalorder %v338, %v385
          %vm418 = vcmp.eq.s32.totalorder %v338, %v386
          %vm419 = vcmp.eq.s32.totalorder %v339, %v371
          %vm420 = vcmp.eq.s32.totalorder %v339, %v372
          %vm421 = vcmp.eq.s32.totalorder %v339, %v373
          %vm422 = vcmp.eq.s32.totalorder %v339, %v374
          %vm423 = vcmp.eq.s32.totalorder %v339, %v375
          %vm424 = vcmp.eq.s32.totalorder %v339, %v376
          %vm425 = vcmp.eq.s32.totalorder %v339, %v377
          %vm426 = vcmp.eq.s32.totalorder %v339, %v378
          %vm427 = vcmp.eq.s32.totalorder %v339, %v379
          %vm428 = vcmp.eq.s32.totalorder %v339, %v380
          %vm429 = vcmp.eq.s32.totalorder %v339, %v381
          %vm430 = vcmp.eq.s32.totalorder %v339, %v382
          %vm431 = vcmp.eq.s32.totalorder %v339, %v383
          %vm432 = vcmp.eq.s32.totalorder %v339, %v384
          %vm433 = vcmp.eq.s32.totalorder %v339, %v385
          %vm434 = vcmp.eq.s32.totalorder %v339, %v386
          %vm435 = vcmp.eq.s32.totalorder %v340, %v371
          %vm436 = vcmp.eq.s32.totalorder %v340, %v372
          %vm437 = vcmp.eq.s32.totalorder %v340, %v373
          %vm438 = vcmp.eq.s32.totalorder %v340, %v374
          %vm439 = vcmp.eq.s32.totalorder %v340, %v375
          %vm440 = vcmp.eq.s32.totalorder %v340, %v376
          %vm441 = vcmp.eq.s32.totalorder %v340, %v377
          %vm442 = vcmp.eq.s32.totalorder %v340, %v378
          %vm443 = vcmp.eq.s32.totalorder %v340, %v379
          %vm444 = vcmp.eq.s32.totalorder %v340, %v380
          %vm445 = vcmp.eq.s32.totalorder %v340, %v381
          %vm446 = vcmp.eq.s32.totalorder %v340, %v382
          %vm447 = vcmp.eq.s32.totalorder %v340, %v383
          %vm448 = vcmp.eq.s32.totalorder %v340, %v384
          %vm449 = vcmp.eq.s32.totalorder %v340, %v385
          %vm450 = vcmp.eq.s32.totalorder %v340, %v386
          %vm451 = vcmp.eq.s32.totalorder %v341, %v371
          %vm452 = vcmp.eq.s32.totalorder %v341, %v372
          %vm453 = vcmp.eq.s32.totalorder %v341, %v373
          %vm454 = vcmp.eq.s32.totalorder %v341, %v374
          %vm455 = vcmp.eq.s32.totalorder %v341, %v375
          %vm456 = vcmp.eq.s32.totalorder %v341, %v376
          %vm457 = vcmp.eq.s32.totalorder %v341, %v377
          %vm458 = vcmp.eq.s32.totalorder %v341, %v378
          %vm459 = vcmp.eq.s32.totalorder %v341, %v379
          %vm460 = vcmp.eq.s32.totalorder %v341, %v380
          %vm461 = vcmp.eq.s32.totalorder %v341, %v381
          %vm462 = vcmp.eq.s32.totalorder %v341, %v382
          %vm463 = vcmp.eq.s32.totalorder %v341, %v383
          %vm464 = vcmp.eq.s32.totalorder %v341, %v384
          %vm465 = vcmp.eq.s32.totalorder %v341, %v385
          %vm466 = vcmp.eq.s32.totalorder %v341, %v386
          %vm467 = vcmp.eq.s32.totalorder %v342, %v371
          %vm468 = vcmp.eq.s32.totalorder %v342, %v372
          %vm469 = vcmp.eq.s32.totalorder %v342, %v373
          %vm470 = vcmp.eq.s32.totalorder %v342, %v374
          %vm471 = vcmp.eq.s32.totalorder %v342, %v375
          %vm472 = vcmp.eq.s32.totalorder %v342, %v376
          %vm473 = vcmp.eq.s32.totalorder %v342, %v377
          %vm474 = vcmp.eq.s32.totalorder %v342, %v378
          %vm475 = vcmp.eq.s32.totalorder %v342, %v379
          %vm476 = vcmp.eq.s32.totalorder %v342, %v380
          %vm477 = vcmp.eq.s32.totalorder %v342, %v381
          %vm478 = vcmp.eq.s32.totalorder %v342, %v382
          %vm479 = vcmp.eq.s32.totalorder %v342, %v383
          %vm480 = vcmp.eq.s32.totalorder %v342, %v384
          %vm481 = vcmp.eq.s32.totalorder %v342, %v385
          %vm482 = vcmp.eq.s32.totalorder %v342, %v386
          %vm483 = vcmp.eq.s32.totalorder %v343, %v371
          %vm484 = vcmp.eq.s32.totalorder %v343, %v372
          %vm485 = vcmp.eq.s32.totalorder %v343, %v373
          %vm486 = vcmp.eq.s32.totalorder %v343, %v374
          %vm487 = vcmp.eq.s32.totalorder %v343, %v375
          %vm488 = vcmp.eq.s32.totalorder %v343, %v376
          %vm489 = vcmp.eq.s32.totalorder %v343, %v377
          %vm490 = vcmp.eq.s32.totalorder %v343, %v378
          %vm491 = vcmp.eq.s32.totalorder %v343, %v379
          %vm492 = vcmp.eq.s32.totalorder %v343, %v380
          %vm493 = vcmp.eq.s32.totalorder %v343, %v381
          %vm494 = vcmp.eq.s32.totalorder %v343, %v382
          %vm495 = vcmp.eq.s32.totalorder %v343, %v383
          %vm496 = vcmp.eq.s32.totalorder %v343, %v384
          %vm497 = vcmp.eq.s32.totalorder %v343, %v385
          %vm498 = vcmp.eq.s32.totalorder %v343, %v386
          %vm499 = vcmp.eq.s32.totalorder %v344, %v371
          %vm500 = vcmp.eq.s32.totalorder %v344, %v372
          %vm501 = vcmp.eq.s32.totalorder %v344, %v373
          %vm502 = vcmp.eq.s32.totalorder %v344, %v374
          %vm503 = vcmp.eq.s32.totalorder %v344, %v375
          %vm504 = vcmp.eq.s32.totalorder %v344, %v376
          %vm505 = vcmp.eq.s32.totalorder %v344, %v377
          %vm506 = vcmp.eq.s32.totalorder %v344, %v378
          %vm507 = vcmp.eq.s32.totalorder %v344, %v379
          %vm508 = vcmp.eq.s32.totalorder %v344, %v380
          %vm509 = vcmp.eq.s32.totalorder %v344, %v381
          %vm510 = vcmp.eq.s32.totalorder %v344, %v382
          %vm511 = vcmp.eq.s32.totalorder %v344, %v383
          %vm512 = vcmp.eq.s32.totalorder %v344, %v384
          %vm513 = vcmp.eq.s32.totalorder %v344, %v385
          %vm514 = vcmp.eq.s32.totalorder %v344, %v386
          %vm515 = vcmp.eq.s32.totalorder %v345, %v371
          %vm516 = vcmp.eq.s32.totalorder %v345, %v372
          %vm517 = vcmp.eq.s32.totalorder %v345, %v373
          %vm518 = vcmp.eq.s32.totalorder %v345, %v374
          %vm519 = vcmp.eq.s32.totalorder %v345, %v375
          %vm520 = vcmp.eq.s32.totalorder %v345, %v376
          %vm521 = vcmp.eq.s32.totalorder %v345, %v377
          %vm522 = vcmp.eq.s32.totalorder %v345, %v378
          %vm523 = vcmp.eq.s32.totalorder %v345, %v379
          %vm524 = vcmp.eq.s32.totalorder %v345, %v380
          %vm525 = vcmp.eq.s32.totalorder %v345, %v381
          %vm526 = vcmp.eq.s32.totalorder %v345, %v382
          %vm527 = vcmp.eq.s32.totalorder %v345, %v383
          %vm528 = vcmp.eq.s32.totalorder %v345, %v384
          %vm529 = vcmp.eq.s32.totalorder %v345, %v385
          %vm530 = vcmp.eq.s32.totalorder %v345, %v386
          %vm531 = vcmp.eq.s32.totalorder %v346, %v371
          %vm532 = vcmp.eq.s32.totalorder %v346, %v372
          %vm533 = vcmp.eq.s32.totalorder %v346, %v373
          %vm534 = vcmp.eq.s32.totalorder %v346, %v374
          %vm535 = vcmp.eq.s32.totalorder %v346, %v375
          %vm536 = vcmp.eq.s32.totalorder %v346, %v376
          %vm537 = vcmp.eq.s32.totalorder %v346, %v377
          %vm538 = vcmp.eq.s32.totalorder %v346, %v378
          %vm539 = vcmp.eq.s32.totalorder %v346, %v379
          %vm540 = vcmp.eq.s32.totalorder %v346, %v380
          %vm541 = vcmp.eq.s32.totalorder %v346, %v381
          %vm542 = vcmp.eq.s32.totalorder %v346, %v382
          %vm543 = vcmp.eq.s32.totalorder %v346, %v383
          %vm544 = vcmp.eq.s32.totalorder %v346, %v384
          %vm545 = vcmp.eq.s32.totalorder %v346, %v385
          %vm546 = vcmp.eq.s32.totalorder %v346, %v386
          %vm547 = vcmp.eq.s32.totalorder %v347, %v371
          %vm548 = vcmp.eq.s32.totalorder %v347, %v372
          %vm549 = vcmp.eq.s32.totalorder %v347, %v373
          %vm550 = vcmp.eq.s32.totalorder %v347, %v374
          %vm551 = vcmp.eq.s32.totalorder %v347, %v375
          %vm552 = vcmp.eq.s32.totalorder %v347, %v376
          %vm553 = vcmp.eq.s32.totalorder %v347, %v377
          %vm554 = vcmp.eq.s32.totalorder %v347, %v378
          %vm555 = vcmp.eq.s32.totalorder %v347, %v379
          %vm556 = vcmp.eq.s32.totalorder %v347, %v380
          %vm557 = vcmp.eq.s32.totalorder %v347, %v381
          %vm558 = vcmp.eq.s32.totalorder %v347, %v382
          %vm559 = vcmp.eq.s32.totalorder %v347, %v383
          %vm560 = vcmp.eq.s32.totalorder %v347, %v384
          %vm561 = vcmp.eq.s32.totalorder %v347, %v385
          %vm562 = vcmp.eq.s32.totalorder %v347, %v386
          %vm563 = vcmp.eq.s32.totalorder %v348, %v371
          %vm564 = vcmp.eq.s32.totalorder %v348, %v372
          %vm565 = vcmp.eq.s32.totalorder %v348, %v373
          %vm566 = vcmp.eq.s32.totalorder %v348, %v374
          %vm567 = vcmp.eq.s32.totalorder %v348, %v375
          %vm568 = vcmp.eq.s32.totalorder %v348, %v376
          %vm569 = vcmp.eq.s32.totalorder %v348, %v377
          %vm570 = vcmp.eq.s32.totalorder %v348, %v378
          %vm571 = vcmp.eq.s32.totalorder %v348, %v379
          %vm572 = vcmp.eq.s32.totalorder %v348, %v380
          %vm573 = vcmp.eq.s32.totalorder %v348, %v381
          %vm574 = vcmp.eq.s32.totalorder %v348, %v382
          %vm575 = vcmp.eq.s32.totalorder %v348, %v383
          %vm576 = vcmp.eq.s32.totalorder %v348, %v384
          %vm577 = vcmp.eq.s32.totalorder %v348, %v385
          %vm578 = vcmp.eq.s32.totalorder %v348, %v386
          %vm579 = vcmp.eq.s32.totalorder %v349, %v371
          %vm580 = vcmp.eq.s32.totalorder %v349, %v372
          %vm581 = vcmp.eq.s32.totalorder %v349, %v373
          %vm582 = vcmp.eq.s32.totalorder %v349, %v374
          %vm583 = vcmp.eq.s32.totalorder %v349, %v375
          %vm584 = vcmp.eq.s32.totalorder %v349, %v376
          %vm585 = vcmp.eq.s32.totalorder %v349, %v377
          %vm586 = vcmp.eq.s32.totalorder %v349, %v378
          %vm587 = vcmp.eq.s32.totalorder %v349, %v379
          %vm588 = vcmp.eq.s32.totalorder %v349, %v380
          %vm589 = vcmp.eq.s32.totalorder %v349, %v381
          %vm590 = vcmp.eq.s32.totalorder %v349, %v382
          %vm591 = vcmp.eq.s32.totalorder %v349, %v383
          %vm592 = vcmp.eq.s32.totalorder %v349, %v384
          %vm593 = vcmp.eq.s32.totalorder %v349, %v385
          %vm594 = vcmp.eq.s32.totalorder %v349, %v386
          %vm595 = vcmp.eq.s32.totalorder %v350, %v371
          %vm596 = vcmp.eq.s32.totalorder %v350, %v372
          %vm597 = vcmp.eq.s32.totalorder %v350, %v373
          %vm598 = vcmp.eq.s32.totalorder %v350, %v374
          %vm599 = vcmp.eq.s32.totalorder %v350, %v375
          %vm600 = vcmp.eq.s32.totalorder %v350, %v376
          %vm601 = vcmp.eq.s32.totalorder %v350, %v377
          %vm602 = vcmp.eq.s32.totalorder %v350, %v378
          %vm603 = vcmp.eq.s32.totalorder %v350, %v379
          %vm604 = vcmp.eq.s32.totalorder %v350, %v380
          %vm605 = vcmp.eq.s32.totalorder %v350, %v381
          %vm606 = vcmp.eq.s32.totalorder %v350, %v382
          %vm607 = vcmp.eq.s32.totalorder %v350, %v383
          %vm608 = vcmp.eq.s32.totalorder %v350, %v384
          %vm609 = vcmp.eq.s32.totalorder %v350, %v385
          %vm610 = vcmp.eq.s32.totalorder %v350, %v386
          %vm611 = vcmp.eq.s32.totalorder %v351, %v371
          %vm612 = vcmp.eq.s32.totalorder %v351, %v372
          %vm613 = vcmp.eq.s32.totalorder %v351, %v373
          %vm614 = vcmp.eq.s32.totalorder %v351, %v374
          %vm615 = vcmp.eq.s32.totalorder %v351, %v375
          %vm616 = vcmp.eq.s32.totalorder %v351, %v376
          %vm617 = vcmp.eq.s32.totalorder %v351, %v377
          %vm618 = vcmp.eq.s32.totalorder %v351, %v378
          %vm619 = vcmp.eq.s32.totalorder %v351, %v379
          %vm620 = vcmp.eq.s32.totalorder %v351, %v380
          %vm621 = vcmp.eq.s32.totalorder %v351, %v381
          %vm622 = vcmp.eq.s32.totalorder %v351, %v382
          %vm623 = vcmp.eq.s32.totalorder %v351, %v383
          %vm624 = vcmp.eq.s32.totalorder %v351, %v384
          %vm625 = vcmp.eq.s32.totalorder %v351, %v385
          %vm626 = vcmp.eq.s32.totalorder %v351, %v386
          %vm627 = vcmp.eq.s32.totalorder %v352, %v371
          %vm628 = vcmp.eq.s32.totalorder %v352, %v372
          %vm629 = vcmp.eq.s32.totalorder %v352, %v373
          %vm630 = vcmp.eq.s32.totalorder %v352, %v374
          %vm631 = vcmp.eq.s32.totalorder %v352, %v375
          %vm632 = vcmp.eq.s32.totalorder %v352, %v376
          %vm633 = vcmp.eq.s32.totalorder %v352, %v377
          %vm634 = vcmp.eq.s32.totalorder %v352, %v378
          %vm635 = vcmp.eq.s32.totalorder %v352, %v379
          %vm636 = vcmp.eq.s32.totalorder %v352, %v380
          %vm637 = vcmp.eq.s32.totalorder %v352, %v381
          %vm638 = vcmp.eq.s32.totalorder %v352, %v382
          %vm639 = vcmp.eq.s32.totalorder %v352, %v383
          %vm640 = vcmp.eq.s32.totalorder %v352, %v384
          %vm641 = vcmp.eq.s32.totalorder %v352, %v385
          %vm642 = vcmp.eq.s32.totalorder %v352, %v386
          %vm643 = vcmp.eq.s32.totalorder %v353, %v371
          %vm644 = vcmp.eq.s32.totalorder %v353, %v372
          %vm645 = vcmp.eq.s32.totalorder %v353, %v373
          %vm646 = vcmp.eq.s32.totalorder %v353, %v374
          %vm647 = vcmp.eq.s32.totalorder %v353, %v375
          %vm648 = vcmp.eq.s32.totalorder %v353, %v376
          %vm649 = vcmp.eq.s32.totalorder %v353, %v377
          %vm650 = vcmp.eq.s32.totalorder %v353, %v378
          %vm651 = vcmp.eq.s32.totalorder %v353, %v379
          %vm652 = vcmp.eq.s32.totalorder %v353, %v380
          %vm653 = vcmp.eq.s32.totalorder %v353, %v381
          %vm654 = vcmp.eq.s32.totalorder %v353, %v382
          %vm655 = vcmp.eq.s32.totalorder %v353, %v383
          %vm656 = vcmp.eq.s32.totalorder %v353, %v384
          %vm657 = vcmp.eq.s32.totalorder %v353, %v385
          %vm658 = vcmp.eq.s32.totalorder %v353, %v386
          %vm659 = vcmp.eq.s32.totalorder %v354, %v371
          %vm660 = vcmp.eq.s32.totalorder %v354, %v372
          %vm661 = vcmp.eq.s32.totalorder %v354, %v373
          %vm662 = vcmp.eq.s32.totalorder %v354, %v374
          %vm663 = vcmp.eq.s32.totalorder %v354, %v375
          %vm664 = vcmp.eq.s32.totalorder %v354, %v376
          %vm665 = vcmp.eq.s32.totalorder %v354, %v377
          %vm666 = vcmp.eq.s32.totalorder %v354, %v378
          %vm667 = vcmp.eq.s32.totalorder %v354, %v379
          %vm668 = vcmp.eq.s32.totalorder %v354, %v380
          %vm669 = vcmp.eq.s32.totalorder %v354, %v381
          %vm670 = vcmp.eq.s32.totalorder %v354, %v382
          %vm671 = vcmp.eq.s32.totalorder %v354, %v383
          %vm672 = vcmp.eq.s32.totalorder %v354, %v384
          %vm673 = vcmp.eq.s32.totalorder %v354, %v385
          %vm674 = vcmp.eq.s32.totalorder %v354, %v386
          %vm675 = vcmp.eq.s32.totalorder %v355, %v371
          %vm676 = vcmp.eq.s32.totalorder %v355, %v372
          %vm677 = vcmp.eq.s32.totalorder %v355, %v373
          %vm678 = vcmp.eq.s32.totalorder %v355, %v374
          %vm679 = vcmp.eq.s32.totalorder %v355, %v375
          %vm680 = vcmp.eq.s32.totalorder %v355, %v376
          %vm681 = vcmp.eq.s32.totalorder %v355, %v377
          %vm682 = vcmp.eq.s32.totalorder %v355, %v378
          %vm683 = vcmp.eq.s32.totalorder %v355, %v379
          %vm684 = vcmp.eq.s32.totalorder %v355, %v380
          %vm685 = vcmp.eq.s32.totalorder %v355, %v381
          %vm686 = vcmp.eq.s32.totalorder %v355, %v382
          %vm687 = vcmp.eq.s32.totalorder %v355, %v383
          %vm688 = vcmp.eq.s32.totalorder %v355, %v384
          %vm689 = vcmp.eq.s32.totalorder %v355, %v385
          %vm690 = vcmp.eq.s32.totalorder %v355, %v386
          %vm691 = vcmp.eq.s32.totalorder %v356, %v371
          %vm692 = vcmp.eq.s32.totalorder %v356, %v372
          %vm693 = vcmp.eq.s32.totalorder %v356, %v373
          %vm694 = vcmp.eq.s32.totalorder %v356, %v374
          %vm695 = vcmp.eq.s32.totalorder %v356, %v375
          %vm696 = vcmp.eq.s32.totalorder %v356, %v376
          %vm697 = vcmp.eq.s32.totalorder %v356, %v377
          %vm698 = vcmp.eq.s32.totalorder %v356, %v378
          %vm699 = vcmp.eq.s32.totalorder %v356, %v379
          %vm700 = vcmp.eq.s32.totalorder %v356, %v380
          %vm701 = vcmp.eq.s32.totalorder %v356, %v381
          %vm702 = vcmp.eq.s32.totalorder %v356, %v382
          %vm703 = vcmp.eq.s32.totalorder %v356, %v383
          %vm704 = vcmp.eq.s32.totalorder %v356, %v384
          %vm705 = vcmp.eq.s32.totalorder %v356, %v385
          %vm706 = vcmp.eq.s32.totalorder %v356, %v386
          %vm707 = vcmp.eq.s32.totalorder %v357, %v371
          %vm708 = vcmp.eq.s32.totalorder %v357, %v372
          %vm709 = vcmp.eq.s32.totalorder %v357, %v373
          %vm710 = vcmp.eq.s32.totalorder %v357, %v374
          %vm711 = vcmp.eq.s32.totalorder %v357, %v375
          %vm712 = vcmp.eq.s32.totalorder %v357, %v376
          %vm713 = vcmp.eq.s32.totalorder %v357, %v377
          %vm714 = vcmp.eq.s32.totalorder %v357, %v378
          %vm715 = vcmp.eq.s32.totalorder %v357, %v379
          %vm716 = vcmp.eq.s32.totalorder %v357, %v380
          %vm717 = vcmp.eq.s32.totalorder %v357, %v381
          %vm718 = vcmp.eq.s32.totalorder %v357, %v382
          %vm719 = vcmp.eq.s32.totalorder %v357, %v383
          %vm720 = vcmp.eq.s32.totalorder %v357, %v384
          %vm721 = vcmp.eq.s32.totalorder %v357, %v385
          %vm722 = vcmp.eq.s32.totalorder %v357, %v386
          %vm723 = vcmp.eq.s32.totalorder %v358, %v371
          %vm724 = vcmp.eq.s32.totalorder %v358, %v372
          %vm725 = vcmp.eq.s32.totalorder %v358, %v373
          %vm726 = vcmp.eq.s32.totalorder %v358, %v374
          %vm727 = vcmp.eq.s32.totalorder %v358, %v375
          %vm728 = vcmp.eq.s32.totalorder %v358, %v376
          %vm729 = vcmp.eq.s32.totalorder %v358, %v377
          %vm730 = vcmp.eq.s32.totalorder %v358, %v378
          %vm731 = vcmp.eq.s32.totalorder %v358, %v379
          %vm732 = vcmp.eq.s32.totalorder %v358, %v380
          %vm733 = vcmp.eq.s32.totalorder %v358, %v381
          %vm734 = vcmp.eq.s32.totalorder %v358, %v382
          %vm735 = vcmp.eq.s32.totalorder %v358, %v383
          %vm736 = vcmp.eq.s32.totalorder %v358, %v384
          %vm737 = vcmp.eq.s32.totalorder %v358, %v385
          %vm738 = vcmp.eq.s32.totalorder %v358, %v386
          %vm739 = vcmp.eq.s32.totalorder %v359, %v371
          %vm740 = vcmp.eq.s32.totalorder %v359, %v372
          %vm741 = vcmp.eq.s32.totalorder %v359, %v373
          %vm742 = vcmp.eq.s32.totalorder %v359, %v374
          %vm743 = vcmp.eq.s32.totalorder %v359, %v375
          %vm744 = vcmp.eq.s32.totalorder %v359, %v376
          %vm745 = vcmp.eq.s32.totalorder %v359, %v377
          %vm746 = vcmp.eq.s32.totalorder %v359, %v378
          %vm747 = vcmp.eq.s32.totalorder %v359, %v379
          %vm748 = vcmp.eq.s32.totalorder %v359, %v380
          %vm749 = vcmp.eq.s32.totalorder %v359, %v381
          %vm750 = vcmp.eq.s32.totalorder %v359, %v382
          %vm751 = vcmp.eq.s32.totalorder %v359, %v383
          %vm752 = vcmp.eq.s32.totalorder %v359, %v384
          %vm753 = vcmp.eq.s32.totalorder %v359, %v385
          %vm754 = vcmp.eq.s32.totalorder %v359, %v386
          %vm755 = vcmp.eq.s32.totalorder %v360, %v371
          %vm756 = vcmp.eq.s32.totalorder %v360, %v372
          %vm757 = vcmp.eq.s32.totalorder %v360, %v373
          %vm758 = vcmp.eq.s32.totalorder %v360, %v374
          %vm759 = vcmp.eq.s32.totalorder %v360, %v375
          %vm760 = vcmp.eq.s32.totalorder %v360, %v376
          %vm761 = vcmp.eq.s32.totalorder %v360, %v377
          %vm762 = vcmp.eq.s32.totalorder %v360, %v378
          %vm763 = vcmp.eq.s32.totalorder %v360, %v379
          %vm764 = vcmp.eq.s32.totalorder %v360, %v380
          %vm765 = vcmp.eq.s32.totalorder %v360, %v381
          %vm766 = vcmp.eq.s32.totalorder %v360, %v382
          %vm767 = vcmp.eq.s32.totalorder %v360, %v383
          %vm768 = vcmp.eq.s32.totalorder %v360, %v384
          %vm769 = vcmp.eq.s32.totalorder %v360, %v385
          %vm770 = vcmp.eq.s32.totalorder %v360, %v386
          %vm771 = vcmp.eq.s32.totalorder %v361, %v371
          %vm772 = vcmp.eq.s32.totalorder %v361, %v372
          %vm773 = vcmp.eq.s32.totalorder %v361, %v373
          %vm774 = vcmp.eq.s32.totalorder %v361, %v374
          %vm775 = vcmp.eq.s32.totalorder %v361, %v375
          %vm776 = vcmp.eq.s32.totalorder %v361, %v376
          %vm777 = vcmp.eq.s32.totalorder %v361, %v377
          %vm778 = vcmp.eq.s32.totalorder %v361, %v378
          %vm779 = vcmp.eq.s32.totalorder %v361, %v379
          %vm780 = vcmp.eq.s32.totalorder %v361, %v380
          %vm781 = vcmp.eq.s32.totalorder %v361, %v381
          %vm782 = vcmp.eq.s32.totalorder %v361, %v382
          %vm783 = vcmp.eq.s32.totalorder %v361, %v383
          %vm784 = vcmp.eq.s32.totalorder %v361, %v384
          %vm785 = vcmp.eq.s32.totalorder %v361, %v385
          %vm786 = vcmp.eq.s32.totalorder %v361, %v386
          %vm787 = vcmp.eq.s32.totalorder %v362, %v371
          %vm788 = vcmp.eq.s32.totalorder %v362, %v372
          %vm789 = vcmp.eq.s32.totalorder %v362, %v373
          %vm790 = vcmp.eq.s32.totalorder %v362, %v374
          %vm791 = vcmp.eq.s32.totalorder %v362, %v375
          %vm792 = vcmp.eq.s32.totalorder %v362, %v376
          %vm793 = vcmp.eq.s32.totalorder %v362, %v377
          %vm794 = vcmp.eq.s32.totalorder %v362, %v378
          %vm795 = vcmp.eq.s32.totalorder %v362, %v379
          %vm796 = vcmp.eq.s32.totalorder %v362, %v380
          %vm797 = vcmp.eq.s32.totalorder %v362, %v381
          %vm798 = vcmp.eq.s32.totalorder %v362, %v382
          %vm799 = vcmp.eq.s32.totalorder %v362, %v383
          %vm800 = vcmp.eq.s32.totalorder %v362, %v384
          %vm801 = vcmp.eq.s32.totalorder %v362, %v385
          %vm802 = vcmp.eq.s32.totalorder %v362, %v386
          %vm803 = vcmp.eq.s32.totalorder %v363, %v371
          %vm804 = vcmp.eq.s32.totalorder %v363, %v372
          %vm805 = vcmp.eq.s32.totalorder %v363, %v373
          %vm806 = vcmp.eq.s32.totalorder %v363, %v374
          %vm807 = vcmp.eq.s32.totalorder %v363, %v375
          %vm808 = vcmp.eq.s32.totalorder %v363, %v376
          %vm809 = vcmp.eq.s32.totalorder %v363, %v377
          %vm810 = vcmp.eq.s32.totalorder %v363, %v378
          %vm811 = vcmp.eq.s32.totalorder %v363, %v379
          %vm812 = vcmp.eq.s32.totalorder %v363, %v380
          %vm813 = vcmp.eq.s32.totalorder %v363, %v381
          %vm814 = vcmp.eq.s32.totalorder %v363, %v382
          %vm815 = vcmp.eq.s32.totalorder %v363, %v383
          %vm816 = vcmp.eq.s32.totalorder %v363, %v384
          %vm817 = vcmp.eq.s32.totalorder %v363, %v385
          %vm818 = vcmp.eq.s32.totalorder %v363, %v386
          %vm819 = vcmp.eq.s32.totalorder %v364, %v371
          %vm820 = vcmp.eq.s32.totalorder %v364, %v372
          %vm821 = vcmp.eq.s32.totalorder %v364, %v373
          %vm822 = vcmp.eq.s32.totalorder %v364, %v374
          %vm823 = vcmp.eq.s32.totalorder %v364, %v375
          %vm824 = vcmp.eq.s32.totalorder %v364, %v376
          %vm825 = vcmp.eq.s32.totalorder %v364, %v377
          %vm826 = vcmp.eq.s32.totalorder %v364, %v378
          %vm827 = vcmp.eq.s32.totalorder %v364, %v379
          %vm828 = vcmp.eq.s32.totalorder %v364, %v380
          %vm829 = vcmp.eq.s32.totalorder %v364, %v381
          %vm830 = vcmp.eq.s32.totalorder %v364, %v382
          %vm831 = vcmp.eq.s32.totalorder %v364, %v383
          %vm832 = vcmp.eq.s32.totalorder %v364, %v384
          %vm833 = vcmp.eq.s32.totalorder %v364, %v385
          %vm834 = vcmp.eq.s32.totalorder %v364, %v386
          %vm835 = vcmp.eq.s32.totalorder %v365, %v371
          %vm836 = vcmp.eq.s32.totalorder %v365, %v372
          %vm837 = vcmp.eq.s32.totalorder %v365, %v373
          %vm838 = vcmp.eq.s32.totalorder %v365, %v374
          %vm839 = vcmp.eq.s32.totalorder %v365, %v375
          %vm840 = vcmp.eq.s32.totalorder %v365, %v376
          %vm841 = vcmp.eq.s32.totalorder %v365, %v377
          %vm842 = vcmp.eq.s32.totalorder %v365, %v378
          %vm843 = vcmp.eq.s32.totalorder %v365, %v379
          %vm844 = vcmp.eq.s32.totalorder %v365, %v380
          %vm845 = vcmp.eq.s32.totalorder %v365, %v381
          %vm846 = vcmp.eq.s32.totalorder %v365, %v382
          %vm847 = vcmp.eq.s32.totalorder %v365, %v383
          %vm848 = vcmp.eq.s32.totalorder %v365, %v384
          %vm849 = vcmp.eq.s32.totalorder %v365, %v385
          %vm850 = vcmp.eq.s32.totalorder %v365, %v386
          %vm851 = vcmp.eq.s32.totalorder %v366, %v371
          %vm852 = vcmp.eq.s32.totalorder %v366, %v372
          %vm853 = vcmp.eq.s32.totalorder %v366, %v373
          %vm854 = vcmp.eq.s32.totalorder %v366, %v374
          %vm855 = vcmp.eq.s32.totalorder %v366, %v375
          %vm856 = vcmp.eq.s32.totalorder %v366, %v376
          %vm857 = vcmp.eq.s32.totalorder %v366, %v377
          %vm858 = vcmp.eq.s32.totalorder %v366, %v378
          %vm859 = vcmp.eq.s32.totalorder %v366, %v379
          %vm860 = vcmp.eq.s32.totalorder %v366, %v380
          %vm861 = vcmp.eq.s32.totalorder %v366, %v381
          %vm862 = vcmp.eq.s32.totalorder %v366, %v382
          %vm863 = vcmp.eq.s32.totalorder %v366, %v383
          %vm864 = vcmp.eq.s32.totalorder %v366, %v384
          %vm865 = vcmp.eq.s32.totalorder %v366, %v385
          %vm866 = vcmp.eq.s32.totalorder %v366, %v386
          %vm867 = vcmp.eq.s32.totalorder %v367, %v371
          %vm868 = vcmp.eq.s32.totalorder %v367, %v372
          %vm869 = vcmp.eq.s32.totalorder %v367, %v373
          %vm870 = vcmp.eq.s32.totalorder %v367, %v374
          %vm871 = vcmp.eq.s32.totalorder %v367, %v375
          %vm872 = vcmp.eq.s32.totalorder %v367, %v376
          %vm873 = vcmp.eq.s32.totalorder %v367, %v377
          %vm874 = vcmp.eq.s32.totalorder %v367, %v378
          %vm875 = vcmp.eq.s32.totalorder %v367, %v379
          %vm876 = vcmp.eq.s32.totalorder %v367, %v380
          %vm877 = vcmp.eq.s32.totalorder %v367, %v381
          %vm878 = vcmp.eq.s32.totalorder %v367, %v382
          %vm879 = vcmp.eq.s32.totalorder %v367, %v383
          %vm880 = vcmp.eq.s32.totalorder %v367, %v384
          %vm881 = vcmp.eq.s32.totalorder %v367, %v385
          %vm882 = vcmp.eq.s32.totalorder %v367, %v386
          %vm883 = vcmp.eq.s32.totalorder %v368, %v371
          %vm884 = vcmp.eq.s32.totalorder %v368, %v372
          %vm885 = vcmp.eq.s32.totalorder %v368, %v373
          %vm886 = vcmp.eq.s32.totalorder %v368, %v374
          %vm887 = vcmp.eq.s32.totalorder %v368, %v375
          %vm888 = vcmp.eq.s32.totalorder %v368, %v376
          %vm889 = vcmp.eq.s32.totalorder %v368, %v377
          %vm890 = vcmp.eq.s32.totalorder %v368, %v378
          %vm891 = vcmp.eq.s32.totalorder %v368, %v379
          %vm892 = vcmp.eq.s32.totalorder %v368, %v380
          %vm893 = vcmp.eq.s32.totalorder %v368, %v381
          %vm894 = vcmp.eq.s32.totalorder %v368, %v382
          %vm895 = vcmp.eq.s32.totalorder %v368, %v383
          %vm896 = vcmp.eq.s32.totalorder %v368, %v384
          %vm897 = vcmp.eq.s32.totalorder %v368, %v385
          %vm898 = vcmp.eq.s32.totalorder %v368, %v386
          %v899 = vsel %vm387, 1, 0
          %v900 = vsel %vm388, 1, 0
          %v901 = vsel %vm389, 1, 0
          %v902 = vsel %vm390, 1, 0
          %v903 = vsel %vm391, 1, 0
          %v904 = vsel %vm392, 1, 0
          %v905 = vsel %vm393, 1, 0
          %v906 = vsel %vm394, 1, 0
          %v907 = vsel %vm395, 1, 0
          %v908 = vsel %vm396, 1, 0
          %v909 = vsel %vm397, 1, 0
          %v910 = vsel %vm398, 1, 0
          %v911 = vsel %vm399, 1, 0
          %v912 = vsel %vm400, 1, 0
          %v913 = vsel %vm401, 1, 0
          %v914 = vsel %vm402, 1, 0
          %v915 = vsel %vm403, 1, 0
          %v916 = vsel %vm404, 1, 0
          %v917 = vsel %vm405, 1, 0
          %v918 = vsel %vm406, 1, 0
          %v919 = vsel %vm407, 1, 0
          %v920 = vsel %vm408, 1, 0
          %v921 = vsel %vm409, 1, 0
          %v922 = vsel %vm410, 1, 0
          %v923 = vsel %vm411, 1, 0
          %v924 = vsel %vm412, 1, 0
          %v925 = vsel %vm413, 1, 0
          %v926 = vsel %vm414, 1, 0
          %v927 = vsel %vm415, 1, 0
          %v928 = vsel %vm416, 1, 0
          %v929 = vsel %vm417, 1, 0
          %v930 = vsel %vm418, 1, 0
          %v931 = vsel %vm419, 1, 0
          %v932 = vsel %vm420, 1, 0
          %v933 = vsel %vm421, 1, 0
          %v934 = vsel %vm422, 1, 0
          %v935 = vsel %vm423, 1, 0
          %v936 = vsel %vm424, 1, 0
          %v937 = vsel %vm425, 1, 0
          %v938 = vsel %vm426, 1, 0
          %v939 = vsel %vm427, 1, 0
          %v940 = vsel %vm428, 1, 0
          %v941 = vsel %vm429, 1, 0
          %v942 = vsel %vm430, 1, 0
          %v943 = vsel %vm431, 1, 0
          %v944 = vsel %vm432, 1, 0
          %v945 = vsel %vm433, 1, 0
          %v946 = vsel %vm434, 1, 0
          %v947 = vsel %vm435, 1, 0
          %v948 = vsel %vm436, 1, 0
          %v949 = vsel %vm437, 1, 0
          %v950 = vsel %vm438, 1, 0
          %v951 = vsel %vm439, 1, 0
          %v952 = vsel %vm440, 1, 0
          %v953 = vsel %vm441, 1, 0
          %v954 = vsel %vm442, 1, 0
          %v955 = vsel %vm443, 1, 0
          %v956 = vsel %vm444, 1, 0
          %v957 = vsel %vm445, 1, 0
          %v958 = vsel %vm446, 1, 0
          %v959 = vsel %vm447, 1, 0
          %v960 = vsel %vm448, 1, 0
          %v961 = vsel %vm449, 1, 0
          %v962 = vsel %vm450, 1, 0
          %v963 = vsel %vm451, 1, 0
          %v964 = vsel %vm452, 1, 0
          %v965 = vsel %vm453, 1, 0
          %v966 = vsel %vm454, 1, 0
          %v967 = vsel %vm455, 1, 0
          %v968 = vsel %vm456, 1, 0
          %v969 = vsel %vm457, 1, 0
          %v970 = vsel %vm458, 1, 0
          %v971 = vsel %vm459, 1, 0
          %v972 = vsel %vm460, 1, 0
          %v973 = vsel %vm461, 1, 0
          %v974 = vsel %vm462, 1, 0
          %v975 = vsel %vm463, 1, 0
          %v976 = vsel %vm464, 1, 0
          %v977 = vsel %vm465, 1, 0
          %v978 = vsel %vm466, 1, 0
          %v979 = vsel %vm467, 1, 0
          %v980 = vsel %vm468, 1, 0
          %v981 = vsel %vm469, 1, 0
          %v982 = vsel %vm470, 1, 0
          %v983 = vsel %vm471, 1, 0
          %v984 = vsel %vm472, 1, 0
          %v985 = vsel %vm473, 1, 0
          %v986 = vsel %vm474, 1, 0
          %v987 = vsel %vm475, 1, 0
          %v988 = vsel %vm476, 1, 0
          %v989 = vsel %vm477, 1, 0
          %v990 = vsel %vm478, 1, 0
          %v991 = vsel %vm479, 1, 0
          %v992 = vsel %vm480, 1, 0
          %v993 = vsel %vm481, 1, 0
          %v994 = vsel %vm482, 1, 0
          %v995 = vsel %vm483, 1, 0
          %v996 = vsel %vm484, 1, 0
          %v997 = vsel %vm485, 1, 0
          %v998 = vsel %vm486, 1, 0
          %v999 = vsel %vm487, 1, 0
          %v1000 = vsel %vm488, 1, 0
          %v1001 = vsel %vm489, 1, 0
          %v1002 = vsel %vm490, 1, 0
          %v1003 = vsel %vm491, 1, 0
          %v1004 = vsel %vm492, 1, 0
          %v1005 = vsel %vm493, 1, 0
          %v1006 = vsel %vm494, 1, 0
          %v1007 = vsel %vm495, 1, 0
          %v1008 = vsel %vm496, 1, 0
          %v1009 = vsel %vm497, 1, 0
          %v1010 = vsel %vm498, 1, 0
          %v1011 = vsel %vm499, 1, 0
          %v1012 = vsel %vm500, 1, 0
          %v1013 = vsel %vm501, 1, 0
          %v1014 = vsel %vm502, 1, 0
          %v1015 = vsel %vm503, 1, 0
          %v1016 = vsel %vm504, 1, 0
          %v1017 = vsel %vm505, 1, 0
          %v1018 = vsel %vm506, 1, 0
          %v1019 = vsel %vm507, 1, 0
          %v1020 = vsel %vm508, 1, 0
          %v1021 = vsel %vm509, 1, 0
          %v1022 = vsel %vm510, 1, 0
          %v1023 = vsel %vm511, 1, 0
          %v1024 = vsel %vm512, 1, 0
          %v1025 = vsel %vm513, 1, 0
          %v1026 = vsel %vm514, 1, 0
          %v1027 = vsel %vm515, 1, 0
          %v1028 = vsel %vm516, 1, 0
          %v1029 = vsel %vm517, 1, 0
          %v1030 = vsel %vm518, 1, 0
          %v1031 = vsel %vm519, 1, 0
          %v1032 = vsel %vm520, 1, 0
          %v1033 = vsel %vm521, 1, 0
          %v1034 = vsel %vm522, 1, 0
          %v1035 = vsel %vm523, 1, 0
          %v1036 = vsel %vm524, 1, 0
          %v1037 = vsel %vm525, 1, 0
          %v1038 = vsel %vm526, 1, 0
          %v1039 = vsel %vm527, 1, 0
          %v1040 = vsel %vm528, 1, 0
          %v1041 = vsel %vm529, 1, 0
          %v1042 = vsel %vm530, 1, 0
          %v1043 = vsel %vm531, 1, 0
          %v1044 = vsel %vm532, 1, 0
          %v1045 = vsel %vm533, 1, 0
          %v1046 = vsel %vm534, 1, 0
          %v1047 = vsel %vm535, 1, 0
          %v1048 = vsel %vm536, 1, 0
          %v1049 = vsel %vm537, 1, 0
          %v1050 = vsel %vm538, 1, 0
          %v1051 = vsel %vm539, 1, 0
          %v1052 = vsel %vm540, 1, 0
          %v1053 = vsel %vm541, 1, 0
          %v1054 = vsel %vm542, 1, 0
          %v1055 = vsel %vm543, 1, 0
          %v1056 = vsel %vm544, 1, 0
          %v1057 = vsel %vm545, 1, 0
          %v1058 = vsel %vm546, 1, 0
          %v1059 = vsel %vm547, 1, 0
          %v1060 = vsel %vm548, 1, 0
          %v1061 = vsel %vm549, 1, 0
          %v1062 = vsel %vm550, 1, 0
          %v1063 = vsel %vm551, 1, 0
          %v1064 = vsel %vm552, 1, 0
          %v1065 = vsel %vm553, 1, 0
          %v1066 = vsel %vm554, 1, 0
          %v1067 = vsel %vm555, 1, 0
          %v1068 = vsel %vm556, 1, 0
          %v1069 = vsel %vm557, 1, 0
          %v1070 = vsel %vm558, 1, 0
          %v1071 = vsel %vm559, 1, 0
          %v1072 = vsel %vm560, 1, 0
          %v1073 = vsel %vm561, 1, 0
          %v1074 = vsel %vm562, 1, 0
          %v1075 = vsel %vm563, 1, 0
          %v1076 = vsel %vm564, 1, 0
          %v1077 = vsel %vm565, 1, 0
          %v1078 = vsel %vm566, 1, 0
          %v1079 = vsel %vm567, 1, 0
          %v1080 = vsel %vm568, 1, 0
          %v1081 = vsel %vm569, 1, 0
          %v1082 = vsel %vm570, 1, 0
          %v1083 = vsel %vm571, 1, 0
          %v1084 = vsel %vm572, 1, 0
          %v1085 = vsel %vm573, 1, 0
          %v1086 = vsel %vm574, 1, 0
          %v1087 = vsel %vm575, 1, 0
          %v1088 = vsel %vm576, 1, 0
          %v1089 = vsel %vm577, 1, 0
          %v1090 = vsel %vm578, 1, 0
          %v1091 = vsel %vm579, 1, 0
          %v1092 = vsel %vm580, 1, 0
          %v1093 = vsel %vm581, 1, 0
          %v1094 = vsel %vm582, 1, 0
          %v1095 = vsel %vm583, 1, 0
          %v1096 = vsel %vm584, 1, 0
          %v1097 = vsel %vm585, 1, 0
          %v1098 = vsel %vm586, 1, 0
          %v1099 = vsel %vm587, 1, 0
          %v1100 = vsel %vm588, 1, 0
          %v1101 = vsel %vm589, 1, 0
          %v1102 = vsel %vm590, 1, 0
          %v1103 = vsel %vm591, 1, 0
          %v1104 = vsel %vm592, 1, 0
          %v1105 = vsel %vm593, 1, 0
          %v1106 = vsel %vm594, 1, 0
          %v1107 = vsel %vm595, 1, 0
          %v1108 = vsel %vm596, 1, 0
          %v1109 = vsel %vm597, 1, 0
          %v1110 = vsel %vm598, 1, 0
          %v1111 = vsel %vm599, 1, 0
          %v1112 = vsel %vm600, 1, 0
          %v1113 = vsel %vm601, 1, 0
          %v1114 = vsel %vm602, 1, 0
          %v1115 = vsel %vm603, 1, 0
          %v1116 = vsel %vm604, 1, 0
          %v1117 = vsel %vm605, 1, 0
          %v1118 = vsel %vm606, 1, 0
          %v1119 = vsel %vm607, 1, 0
          %v1120 = vsel %vm608, 1, 0
          %v1121 = vsel %vm609, 1, 0
          %v1122 = vsel %vm610, 1, 0
          %v1123 = vsel %vm611, 1, 0
          %v1124 = vsel %vm612, 1, 0
          %v1125 = vsel %vm613, 1, 0
          %v1126 = vsel %vm614, 1, 0
          %v1127 = vsel %vm615, 1, 0
          %v1128 = vsel %vm616, 1, 0
          %v1129 = vsel %vm617, 1, 0
          %v1130 = vsel %vm618, 1, 0
          %v1131 = vsel %vm619, 1, 0
          %v1132 = vsel %vm620, 1, 0
          %v1133 = vsel %vm621, 1, 0
          %v1134 = vsel %vm622, 1, 0
          %v1135 = vsel %vm623, 1, 0
          %v1136 = vsel %vm624, 1, 0
          %v1137 = vsel %vm625, 1, 0
          %v1138 = vsel %vm626, 1, 0
          %v1139 = vsel %vm627, 1, 0
          %v1140 = vsel %vm628, 1, 0
          %v1141 = vsel %vm629, 1, 0
          %v1142 = vsel %vm630, 1, 0
          %v1143 = vsel %vm631, 1, 0
          %v1144 = vsel %vm632, 1, 0
          %v1145 = vsel %vm633, 1, 0
          %v1146 = vsel %vm634, 1, 0
          %v1147 = vsel %vm635, 1, 0
          %v1148 = vsel %vm636, 1, 0
          %v1149 = vsel %vm637, 1, 0
          %v1150 = vsel %vm638, 1, 0
          %v1151 = vsel %vm639, 1, 0
          %v1152 = vsel %vm640, 1, 0
          %v1153 = vsel %vm641, 1, 0
          %v1154 = vsel %vm642, 1, 0
          %v1155 = vsel %vm643, 1, 0
          %v1156 = vsel %vm644, 1, 0
          %v1157 = vsel %vm645, 1, 0
          %v1158 = vsel %vm646, 1, 0
          %v1159 = vsel %vm647, 1, 0
          %v1160 = vsel %vm648, 1, 0
          %v1161 = vsel %vm649, 1, 0
          %v1162 = vsel %vm650, 1, 0
          %v1163 = vsel %vm651, 1, 0
          %v1164 = vsel %vm652, 1, 0
          %v1165 = vsel %vm653, 1, 0
          %v1166 = vsel %vm654, 1, 0
          %v1167 = vsel %vm655, 1, 0
          %v1168 = vsel %vm656, 1, 0
          %v1169 = vsel %vm657, 1, 0
          %v1170 = vsel %vm658, 1, 0
          %v1171 = vsel %vm659, 1, 0
          %v1172 = vsel %vm660, 1, 0
          %v1173 = vsel %vm661, 1, 0
          %v1174 = vsel %vm662, 1, 0
          %v1175 = vsel %vm663, 1, 0
          %v1176 = vsel %vm664, 1, 0
          %v1177 = vsel %vm665, 1, 0
          %v1178 = vsel %vm666, 1, 0
          %v1179 = vsel %vm667, 1, 0
          %v1180 = vsel %vm668, 1, 0
          %v1181 = vsel %vm669, 1, 0
          %v1182 = vsel %vm670, 1, 0
          %v1183 = vsel %vm671, 1, 0
          %v1184 = vsel %vm672, 1, 0
          %v1185 = vsel %vm673, 1, 0
          %v1186 = vsel %vm674, 1, 0
          %v1187 = vsel %vm675, 1, 0
          %v1188 = vsel %vm676, 1, 0
          %v1189 = vsel %vm677, 1, 0
          %v1190 = vsel %vm678, 1, 0
          %v1191 = vsel %vm679, 1, 0
          %v1192 = vsel %vm680, 1, 0
          %v1193 = vsel %vm681, 1, 0
          %v1194 = vsel %vm682, 1, 0
          %v1195 = vsel %vm683, 1, 0
          %v1196 = vsel %vm684, 1, 0
          %v1197 = vsel %vm685, 1, 0
          %v1198 = vsel %vm686, 1, 0
          %v1199 = vsel %vm687, 1, 0
          %v1200 = vsel %vm688, 1, 0
          %v1201 = vsel %vm689, 1, 0
          %v1202 = vsel %vm690, 1, 0
          %v1203 = vsel %vm691, 1, 0
          %v1204 = vsel %vm692, 1, 0
          %v1205 = vsel %vm693, 1, 0
          %v1206 = vsel %vm694, 1, 0
          %v1207 = vsel %vm695, 1, 0
          %v1208 = vsel %vm696, 1, 0
          %v1209 = vsel %vm697, 1, 0
          %v1210 = vsel %vm698, 1, 0
          %v1211 = vsel %vm699, 1, 0
          %v1212 = vsel %vm700, 1, 0
          %v1213 = vsel %vm701, 1, 0
          %v1214 = vsel %vm702, 1, 0
          %v1215 = vsel %vm703, 1, 0
          %v1216 = vsel %vm704, 1, 0
          %v1217 = vsel %vm705, 1, 0
          %v1218 = vsel %vm706, 1, 0
          %v1219 = vsel %vm707, 1, 0
          %v1220 = vsel %vm708, 1, 0
          %v1221 = vsel %vm709, 1, 0
          %v1222 = vsel %vm710, 1, 0
          %v1223 = vsel %vm711, 1, 0
          %v1224 = vsel %vm712, 1, 0
          %v1225 = vsel %vm713, 1, 0
          %v1226 = vsel %vm714, 1, 0
          %v1227 = vsel %vm715, 1, 0
          %v1228 = vsel %vm716, 1, 0
          %v1229 = vsel %vm717, 1, 0
          %v1230 = vsel %vm718, 1, 0
          %v1231 = vsel %vm719, 1, 0
          %v1232 = vsel %vm720, 1, 0
          %v1233 = vsel %vm721, 1, 0
          %v1234 = vsel %vm722, 1, 0
          %v1235 = vsel %vm723, 1, 0
          %v1236 = vsel %vm724, 1, 0
          %v1237 = vsel %vm725, 1, 0
          %v1238 = vsel %vm726, 1, 0
          %v1239 = vsel %vm727, 1, 0
          %v1240 = vsel %vm728, 1, 0
          %v1241 = vsel %vm729, 1, 0
          %v1242 = vsel %vm730, 1, 0
          %v1243 = vsel %vm731, 1, 0
          %v1244 = vsel %vm732, 1, 0
          %v1245 = vsel %vm733, 1, 0
          %v1246 = vsel %vm734, 1, 0
          %v1247 = vsel %vm735, 1, 0
          %v1248 = vsel %vm736, 1, 0
          %v1249 = vsel %vm737, 1, 0
          %v1250 = vsel %vm738, 1, 0
          %v1251 = vsel %vm739, 1, 0
          %v1252 = vsel %vm740, 1, 0
          %v1253 = vsel %vm741, 1, 0
          %v1254 = vsel %vm742, 1, 0
          %v1255 = vsel %vm743, 1, 0
          %v1256 = vsel %vm744, 1, 0
          %v1257 = vsel %vm745, 1, 0
          %v1258 = vsel %vm746, 1, 0
          %v1259 = vsel %vm747, 1, 0
          %v1260 = vsel %vm748, 1, 0
          %v1261 = vsel %vm749, 1, 0
          %v1262 = vsel %vm750, 1, 0
          %v1263 = vsel %vm751, 1, 0
          %v1264 = vsel %vm752, 1, 0
          %v1265 = vsel %vm753, 1, 0
          %v1266 = vsel %vm754, 1, 0
          %v1267 = vsel %vm755, 1, 0
          %v1268 = vsel %vm756, 1, 0
          %v1269 = vsel %vm757, 1, 0
          %v1270 = vsel %vm758, 1, 0
          %v1271 = vsel %vm759, 1, 0
          %v1272 = vsel %vm760, 1, 0
          %v1273 = vsel %vm761, 1, 0
          %v1274 = vsel %vm762, 1, 0
          %v1275 = vsel %vm763, 1, 0
          %v1276 = vsel %vm764, 1, 0
          %v1277 = vsel %vm765, 1, 0
          %v1278 = vsel %vm766, 1, 0
          %v1279 = vsel %vm767, 1, 0
          %v1280 = vsel %vm768, 1, 0
          %v1281 = vsel %vm769, 1, 0
          %v1282 = vsel %vm770, 1, 0
          %v1283 = vsel %vm771, 1, 0
          %v1284 = vsel %vm772, 1, 0
          %v1285 = vsel %vm773, 1, 0
          %v1286 = vsel %vm774, 1, 0
          %v1287 = vsel %vm775, 1, 0
          %v1288 = vsel %vm776, 1, 0
          %v1289 = vsel %vm777, 1, 0
          %v1290 = vsel %vm778, 1, 0
          %v1291 = vsel %vm779, 1, 0
          %v1292 = vsel %vm780, 1, 0
          %v1293 = vsel %vm781, 1, 0
          %v1294 = vsel %vm782, 1, 0
          %v1295 = vsel %vm783, 1, 0
          %v1296 = vsel %vm784, 1, 0
          %v1297 = vsel %vm785, 1, 0
          %v1298 = vsel %vm786, 1, 0
          %v1299 = vsel %vm787, 1, 0
          %v1300 = vsel %vm788, 1, 0
          %v1301 = vsel %vm789, 1, 0
          %v1302 = vsel %vm790, 1, 0
          %v1303 = vsel %vm791, 1, 0
          %v1304 = vsel %vm792, 1, 0
          %v1305 = vsel %vm793, 1, 0
          %v1306 = vsel %vm794, 1, 0
          %v1307 = vsel %vm795, 1, 0
          %v1308 = vsel %vm796, 1, 0
          %v1309 = vsel %vm797, 1, 0
          %v1310 = vsel %vm798, 1, 0
          %v1311 = vsel %vm799, 1, 0
          %v1312 = vsel %vm800, 1, 0
          %v1313 = vsel %vm801, 1, 0
          %v1314 = vsel %vm802, 1, 0
          %v1315 = vsel %vm803, 1, 0
          %v1316 = vsel %vm804, 1, 0
          %v1317 = vsel %vm805, 1, 0
          %v1318 = vsel %vm806, 1, 0
          %v1319 = vsel %vm807, 1, 0
          %v1320 = vsel %vm808, 1, 0
          %v1321 = vsel %vm809, 1, 0
          %v1322 = vsel %vm810, 1, 0
          %v1323 = vsel %vm811, 1, 0
          %v1324 = vsel %vm812, 1, 0
          %v1325 = vsel %vm813, 1, 0
          %v1326 = vsel %vm814, 1, 0
          %v1327 = vsel %vm815, 1, 0
          %v1328 = vsel %vm816, 1, 0
          %v1329 = vsel %vm817, 1, 0
          %v1330 = vsel %vm818, 1, 0
          %v1331 = vsel %vm819, 1, 0
          %v1332 = vsel %vm820, 1, 0
          %v1333 = vsel %vm821, 1, 0
          %v1334 = vsel %vm822, 1, 0
          %v1335 = vsel %vm823, 1, 0
          %v1336 = vsel %vm824, 1, 0
          %v1337 = vsel %vm825, 1, 0
          %v1338 = vsel %vm826, 1, 0
          %v1339 = vsel %vm827, 1, 0
          %v1340 = vsel %vm828, 1, 0
          %v1341 = vsel %vm829, 1, 0
          %v1342 = vsel %vm830, 1, 0
          %v1343 = vsel %vm831, 1, 0
          %v1344 = vsel %vm832, 1, 0
          %v1345 = vsel %vm833, 1, 0
          %v1346 = vsel %vm834, 1, 0
          %v1347 = vsel %vm835, 1, 0
          %v1348 = vsel %vm836, 1, 0
          %v1349 = vsel %vm837, 1, 0
          %v1350 = vsel %vm838, 1, 0
          %v1351 = vsel %vm839, 1, 0
          %v1352 = vsel %vm840, 1, 0
          %v1353 = vsel %vm841, 1, 0
          %v1354 = vsel %vm842, 1, 0
          %v1355 = vsel %vm843, 1, 0
          %v1356 = vsel %vm844, 1, 0
          %v1357 = vsel %vm845, 1, 0
          %v1358 = vsel %vm846, 1, 0
          %v1359 = vsel %vm847, 1, 0
          %v1360 = vsel %vm848, 1, 0
          %v1361 = vsel %vm849, 1, 0
          %v1362 = vsel %vm850, 1, 0
          %v1363 = vsel %vm851, 1, 0
          %v1364 = vsel %vm852, 1, 0
          %v1365 = vsel %vm853, 1, 0
          %v1366 = vsel %vm854, 1, 0
          %v1367 = vsel %vm855, 1, 0
          %v1368 = vsel %vm856, 1, 0
          %v1369 = vsel %vm857, 1, 0
          %v1370 = vsel %vm858, 1, 0
          %v1371 = vsel %vm859, 1, 0
          %v1372 = vsel %vm860, 1, 0
          %v1373 = vsel %vm861, 1, 0
          %v1374 = vsel %vm862, 1, 0
          %v1375 = vsel %vm863, 1, 0
          %v1376 = vsel %vm864, 1, 0
          %v1377 = vsel %vm865, 1, 0
          %v1378 = vsel %vm866, 1, 0
          %v1379 = vsel %vm867, 1, 0
          %v1380 = vsel %vm868, 1, 0
          %v1381 = vsel %vm869, 1, 0
          %v1382 = vsel %vm870, 1, 0
          %v1383 = vsel %vm871, 1, 0
          %v1384 = vsel %vm872, 1, 0
          %v1385 = vsel %vm873, 1, 0
          %v1386 = vsel %vm874, 1, 0
          %v1387 = vsel %vm875, 1, 0
          %v1388 = vsel %vm876, 1, 0
          %v1389 = vsel %vm877, 1, 0
          %v1390 = vsel %vm878, 1, 0
          %v1391 = vsel %vm879, 1, 0
          %v1392 = vsel %vm880, 1, 0
          %v1393 = vsel %vm881, 1, 0
          %v1394 = vsel %vm882, 1, 0
          %v1395 = vsel %vm883, 1, 0
          %v1396 = vsel %vm884, 1, 0
          %v1397 = vsel %vm885, 1, 0
          %v1398 = vsel %vm886, 1, 0
          %v1399 = vsel %vm887, 1, 0
          %v1400 = vsel %vm888, 1, 0
          %v1401 = vsel %vm889, 1, 0
          %v1402 = vsel %vm890, 1, 0
          %v1403 = vsel %vm891, 1, 0
          %v1404 = vsel %vm892, 1, 0
          %v1405 = vsel %vm893, 1, 0
          %v1406 = vsel %vm894, 1, 0
          %v1407 = vsel %vm895, 1, 0
          %v1408 = vsel %vm896, 1, 0
          %v1409 = vsel %vm897, 1, 0
          %v1410 = vsel %vm898, 1, 0
          %v1411 = vcvt.s32.f32 %v899
          %v1412 = vcvt.s32.f32 %v900
          %v1413 = vcvt.s32.f32 %v901
          %v1414 = vcvt.s32.f32 %v902
          %v1415 = vcvt.s32.f32 %v903
          %v1416 = vcvt.s32.f32 %v904
          %v1417 = vcvt.s32.f32 %v905
          %v1418 = vcvt.s32.f32 %v906
          %v1419 = vcvt.s32.f32 %v907
          %v1420 = vcvt.s32.f32 %v908
          %v1421 = vcvt.s32.f32 %v909
          %v1422 = vcvt.s32.f32 %v910
          %v1423 = vcvt.s32.f32 %v911
          %v1424 = vcvt.s32.f32 %v912
          %v1425 = vcvt.s32.f32 %v913
          %v1426 = vcvt.s32.f32 %v914
          %v1427 = vcvt.s32.f32 %v915
          %v1428 = vcvt.s32.f32 %v916
          %v1429 = vcvt.s32.f32 %v917
          %v1430 = vcvt.s32.f32 %v918
          %v1431 = vcvt.s32.f32 %v919
          %v1432 = vcvt.s32.f32 %v920
          %v1433 = vcvt.s32.f32 %v921
          %v1434 = vcvt.s32.f32 %v922
          %v1435 = vcvt.s32.f32 %v923
          %v1436 = vcvt.s32.f32 %v924
          %v1437 = vcvt.s32.f32 %v925
          %v1438 = vcvt.s32.f32 %v926
          %v1439 = vcvt.s32.f32 %v927
          %v1440 = vcvt.s32.f32 %v928
          %v1441 = vcvt.s32.f32 %v929
          %v1442 = vcvt.s32.f32 %v930
          %v1443 = vcvt.s32.f32 %v931
          %v1444 = vcvt.s32.f32 %v932
          %v1445 = vcvt.s32.f32 %v933
          %v1446 = vcvt.s32.f32 %v934
          %v1447 = vcvt.s32.f32 %v935
          %v1448 = vcvt.s32.f32 %v936
          %v1449 = vcvt.s32.f32 %v937
          %v1450 = vcvt.s32.f32 %v938
          %v1451 = vcvt.s32.f32 %v939
          %v1452 = vcvt.s32.f32 %v940
          %v1453 = vcvt.s32.f32 %v941
          %v1454 = vcvt.s32.f32 %v942
          %v1455 = vcvt.s32.f32 %v943
          %v1456 = vcvt.s32.f32 %v944
          %v1457 = vcvt.s32.f32 %v945
          %v1458 = vcvt.s32.f32 %v946
          %v1459 = vcvt.s32.f32 %v947
          %v1460 = vcvt.s32.f32 %v948
          %v1461 = vcvt.s32.f32 %v949
          %v1462 = vcvt.s32.f32 %v950
          %v1463 = vcvt.s32.f32 %v951
          %v1464 = vcvt.s32.f32 %v952
          %v1465 = vcvt.s32.f32 %v953
          %v1466 = vcvt.s32.f32 %v954
          %v1467 = vcvt.s32.f32 %v955
          %v1468 = vcvt.s32.f32 %v956
          %v1469 = vcvt.s32.f32 %v957
          %v1470 = vcvt.s32.f32 %v958
          %v1471 = vcvt.s32.f32 %v959
          %v1472 = vcvt.s32.f32 %v960
          %v1473 = vcvt.s32.f32 %v961
          %v1474 = vcvt.s32.f32 %v962
          %v1475 = vcvt.s32.f32 %v963
          %v1476 = vcvt.s32.f32 %v964
          %v1477 = vcvt.s32.f32 %v965
          %v1478 = vcvt.s32.f32 %v966
          %v1479 = vcvt.s32.f32 %v967
          %v1480 = vcvt.s32.f32 %v968
          %v1481 = vcvt.s32.f32 %v969
          %v1482 = vcvt.s32.f32 %v970
          %v1483 = vcvt.s32.f32 %v971
          %v1484 = vcvt.s32.f32 %v972
          %v1485 = vcvt.s32.f32 %v973
          %v1486 = vcvt.s32.f32 %v974
          %v1487 = vcvt.s32.f32 %v975
          %v1488 = vcvt.s32.f32 %v976
          %v1489 = vcvt.s32.f32 %v977
          %v1490 = vcvt.s32.f32 %v978
          %v1491 = vcvt.s32.f32 %v979
          %v1492 = vcvt.s32.f32 %v980
          %v1493 = vcvt.s32.f32 %v981
          %v1494 = vcvt.s32.f32 %v982
          %v1495 = vcvt.s32.f32 %v983
          %v1496 = vcvt.s32.f32 %v984
          %v1497 = vcvt.s32.f32 %v985
          %v1498 = vcvt.s32.f32 %v986
          %v1499 = vcvt.s32.f32 %v987
          %v1500 = vcvt.s32.f32 %v988
          %v1501 = vcvt.s32.f32 %v989
          %v1502 = vcvt.s32.f32 %v990
          %v1503 = vcvt.s32.f32 %v991
          %v1504 = vcvt.s32.f32 %v992
          %v1505 = vcvt.s32.f32 %v993
          %v1506 = vcvt.s32.f32 %v994
          %v1507 = vcvt.s32.f32 %v995
          %v1508 = vcvt.s32.f32 %v996
          %v1509 = vcvt.s32.f32 %v997
          %v1510 = vcvt.s32.f32 %v998
          %v1511 = vcvt.s32.f32 %v999
          %v1512 = vcvt.s32.f32 %v1000
          %v1513 = vcvt.s32.f32 %v1001
          %v1514 = vcvt.s32.f32 %v1002
          %v1515 = vcvt.s32.f32 %v1003
          %v1516 = vcvt.s32.f32 %v1004
          %v1517 = vcvt.s32.f32 %v1005
          %v1518 = vcvt.s32.f32 %v1006
          %v1519 = vcvt.s32.f32 %v1007
          %v1520 = vcvt.s32.f32 %v1008
          %v1521 = vcvt.s32.f32 %v1009
          %v1522 = vcvt.s32.f32 %v1010
          %v1523 = vcvt.s32.f32 %v1011
          %v1524 = vcvt.s32.f32 %v1012
          %v1525 = vcvt.s32.f32 %v1013
          %v1526 = vcvt.s32.f32 %v1014
          %v1527 = vcvt.s32.f32 %v1015
          %v1528 = vcvt.s32.f32 %v1016
          %v1529 = vcvt.s32.f32 %v1017
          %v1530 = vcvt.s32.f32 %v1018
          %v1531 = vcvt.s32.f32 %v1019
          %v1532 = vcvt.s32.f32 %v1020
          %v1533 = vcvt.s32.f32 %v1021
          %v1534 = vcvt.s32.f32 %v1022
          %v1535 = vcvt.s32.f32 %v1023
          %v1536 = vcvt.s32.f32 %v1024
          %v1537 = vcvt.s32.f32 %v1025
          %v1538 = vcvt.s32.f32 %v1026
          %v1539 = vcvt.s32.f32 %v1027
          %v1540 = vcvt.s32.f32 %v1028
          %v1541 = vcvt.s32.f32 %v1029
          %v1542 = vcvt.s32.f32 %v1030
          %v1543 = vcvt.s32.f32 %v1031
          %v1544 = vcvt.s32.f32 %v1032
          %v1545 = vcvt.s32.f32 %v1033
          %v1546 = vcvt.s32.f32 %v1034
          %v1547 = vcvt.s32.f32 %v1035
          %v1548 = vcvt.s32.f32 %v1036
          %v1549 = vcvt.s32.f32 %v1037
          %v1550 = vcvt.s32.f32 %v1038
          %v1551 = vcvt.s32.f32 %v1039
          %v1552 = vcvt.s32.f32 %v1040
          %v1553 = vcvt.s32.f32 %v1041
          %v1554 = vcvt.s32.f32 %v1042
          %v1555 = vcvt.s32.f32 %v1043
          %v1556 = vcvt.s32.f32 %v1044
          %v1557 = vcvt.s32.f32 %v1045
          %v1558 = vcvt.s32.f32 %v1046
          %v1559 = vcvt.s32.f32 %v1047
          %v1560 = vcvt.s32.f32 %v1048
          %v1561 = vcvt.s32.f32 %v1049
          %v1562 = vcvt.s32.f32 %v1050
          %v1563 = vcvt.s32.f32 %v1051
          %v1564 = vcvt.s32.f32 %v1052
          %v1565 = vcvt.s32.f32 %v1053
          %v1566 = vcvt.s32.f32 %v1054
          %v1567 = vcvt.s32.f32 %v1055
          %v1568 = vcvt.s32.f32 %v1056
          %v1569 = vcvt.s32.f32 %v1057
          %v1570 = vcvt.s32.f32 %v1058
          %v1571 = vcvt.s32.f32 %v1059
          %v1572 = vcvt.s32.f32 %v1060
          %v1573 = vcvt.s32.f32 %v1061
          %v1574 = vcvt.s32.f32 %v1062
          %v1575 = vcvt.s32.f32 %v1063
          %v1576 = vcvt.s32.f32 %v1064
          %v1577 = vcvt.s32.f32 %v1065
          %v1578 = vcvt.s32.f32 %v1066
          %v1579 = vcvt.s32.f32 %v1067
          %v1580 = vcvt.s32.f32 %v1068
          %v1581 = vcvt.s32.f32 %v1069
          %v1582 = vcvt.s32.f32 %v1070
          %v1583 = vcvt.s32.f32 %v1071
          %v1584 = vcvt.s32.f32 %v1072
          %v1585 = vcvt.s32.f32 %v1073
          %v1586 = vcvt.s32.f32 %v1074
          %v1587 = vcvt.s32.f32 %v1075
          %v1588 = vcvt.s32.f32 %v1076
          %v1589 = vcvt.s32.f32 %v1077
          %v1590 = vcvt.s32.f32 %v1078
          %v1591 = vcvt.s32.f32 %v1079
          %v1592 = vcvt.s32.f32 %v1080
          %v1593 = vcvt.s32.f32 %v1081
          %v1594 = vcvt.s32.f32 %v1082
          %v1595 = vcvt.s32.f32 %v1083
          %v1596 = vcvt.s32.f32 %v1084
          %v1597 = vcvt.s32.f32 %v1085
          %v1598 = vcvt.s32.f32 %v1086
          %v1599 = vcvt.s32.f32 %v1087
          %v1600 = vcvt.s32.f32 %v1088
          %v1601 = vcvt.s32.f32 %v1089
          %v1602 = vcvt.s32.f32 %v1090
          %v1603 = vcvt.s32.f32 %v1091
          %v1604 = vcvt.s32.f32 %v1092
          %v1605 = vcvt.s32.f32 %v1093
          %v1606 = vcvt.s32.f32 %v1094
          %v1607 = vcvt.s32.f32 %v1095
          %v1608 = vcvt.s32.f32 %v1096
          %v1609 = vcvt.s32.f32 %v1097
          %v1610 = vcvt.s32.f32 %v1098
          %v1611 = vcvt.s32.f32 %v1099
          %v1612 = vcvt.s32.f32 %v1100
          %v1613 = vcvt.s32.f32 %v1101
          %v1614 = vcvt.s32.f32 %v1102
          %v1615 = vcvt.s32.f32 %v1103
          %v1616 = vcvt.s32.f32 %v1104
          %v1617 = vcvt.s32.f32 %v1105
          %v1618 = vcvt.s32.f32 %v1106
          %v1619 = vcvt.s32.f32 %v1107
          %v1620 = vcvt.s32.f32 %v1108
          %v1621 = vcvt.s32.f32 %v1109
          %v1622 = vcvt.s32.f32 %v1110
          %v1623 = vcvt.s32.f32 %v1111
          %v1624 = vcvt.s32.f32 %v1112
          %v1625 = vcvt.s32.f32 %v1113
          %v1626 = vcvt.s32.f32 %v1114
          %v1627 = vcvt.s32.f32 %v1115
          %v1628 = vcvt.s32.f32 %v1116
          %v1629 = vcvt.s32.f32 %v1117
          %v1630 = vcvt.s32.f32 %v1118
          %v1631 = vcvt.s32.f32 %v1119
          %v1632 = vcvt.s32.f32 %v1120
          %v1633 = vcvt.s32.f32 %v1121
          %v1634 = vcvt.s32.f32 %v1122
          %v1635 = vcvt.s32.f32 %v1123
          %v1636 = vcvt.s32.f32 %v1124
          %v1637 = vcvt.s32.f32 %v1125
          %v1638 = vcvt.s32.f32 %v1126
          %v1639 = vcvt.s32.f32 %v1127
          %v1640 = vcvt.s32.f32 %v1128
          %v1641 = vcvt.s32.f32 %v1129
          %v1642 = vcvt.s32.f32 %v1130
          %v1643 = vcvt.s32.f32 %v1131
          %v1644 = vcvt.s32.f32 %v1132
          %v1645 = vcvt.s32.f32 %v1133
          %v1646 = vcvt.s32.f32 %v1134
          %v1647 = vcvt.s32.f32 %v1135
          %v1648 = vcvt.s32.f32 %v1136
          %v1649 = vcvt.s32.f32 %v1137
          %v1650 = vcvt.s32.f32 %v1138
          %v1651 = vcvt.s32.f32 %v1139
          %v1652 = vcvt.s32.f32 %v1140
          %v1653 = vcvt.s32.f32 %v1141
          %v1654 = vcvt.s32.f32 %v1142
          %v1655 = vcvt.s32.f32 %v1143
          %v1656 = vcvt.s32.f32 %v1144
          %v1657 = vcvt.s32.f32 %v1145
          %v1658 = vcvt.s32.f32 %v1146
          %v1659 = vcvt.s32.f32 %v1147
          %v1660 = vcvt.s32.f32 %v1148
          %v1661 = vcvt.s32.f32 %v1149
          %v1662 = vcvt.s32.f32 %v1150
          %v1663 = vcvt.s32.f32 %v1151
          %v1664 = vcvt.s32.f32 %v1152
          %v1665 = vcvt.s32.f32 %v1153
          %v1666 = vcvt.s32.f32 %v1154
          %v1667 = vcvt.s32.f32 %v1155
          %v1668 = vcvt.s32.f32 %v1156
          %v1669 = vcvt.s32.f32 %v1157
          %v1670 = vcvt.s32.f32 %v1158
          %v1671 = vcvt.s32.f32 %v1159
          %v1672 = vcvt.s32.f32 %v1160
          %v1673 = vcvt.s32.f32 %v1161
          %v1674 = vcvt.s32.f32 %v1162
          %v1675 = vcvt.s32.f32 %v1163
          %v1676 = vcvt.s32.f32 %v1164
          %v1677 = vcvt.s32.f32 %v1165
          %v1678 = vcvt.s32.f32 %v1166
          %v1679 = vcvt.s32.f32 %v1167
          %v1680 = vcvt.s32.f32 %v1168
          %v1681 = vcvt.s32.f32 %v1169
          %v1682 = vcvt.s32.f32 %v1170
          %v1683 = vcvt.s32.f32 %v1171
          %v1684 = vcvt.s32.f32 %v1172
          %v1685 = vcvt.s32.f32 %v1173
          %v1686 = vcvt.s32.f32 %v1174
          %v1687 = vcvt.s32.f32 %v1175
          %v1688 = vcvt.s32.f32 %v1176
          %v1689 = vcvt.s32.f32 %v1177
          %v1690 = vcvt.s32.f32 %v1178
          %v1691 = vcvt.s32.f32 %v1179
          %v1692 = vcvt.s32.f32 %v1180
          %v1693 = vcvt.s32.f32 %v1181
          %v1694 = vcvt.s32.f32 %v1182
          %v1695 = vcvt.s32.f32 %v1183
          %v1696 = vcvt.s32.f32 %v1184
          %v1697 = vcvt.s32.f32 %v1185
          %v1698 = vcvt.s32.f32 %v1186
          %v1699 = vcvt.s32.f32 %v1187
          %v1700 = vcvt.s32.f32 %v1188
          %v1701 = vcvt.s32.f32 %v1189
          %v1702 = vcvt.s32.f32 %v1190
          %v1703 = vcvt.s32.f32 %v1191
          %v1704 = vcvt.s32.f32 %v1192
          %v1705 = vcvt.s32.f32 %v1193
          %v1706 = vcvt.s32.f32 %v1194
          %v1707 = vcvt.s32.f32 %v1195
          %v1708 = vcvt.s32.f32 %v1196
          %v1709 = vcvt.s32.f32 %v1197
          %v1710 = vcvt.s32.f32 %v1198
          %v1711 = vcvt.s32.f32 %v1199
          %v1712 = vcvt.s32.f32 %v1200
          %v1713 = vcvt.s32.f32 %v1201
          %v1714 = vcvt.s32.f32 %v1202
          %v1715 = vcvt.s32.f32 %v1203
          %v1716 = vcvt.s32.f32 %v1204
          %v1717 = vcvt.s32.f32 %v1205
          %v1718 = vcvt.s32.f32 %v1206
          %v1719 = vcvt.s32.f32 %v1207
          %v1720 = vcvt.s32.f32 %v1208
          %v1721 = vcvt.s32.f32 %v1209
          %v1722 = vcvt.s32.f32 %v1210
          %v1723 = vcvt.s32.f32 %v1211
          %v1724 = vcvt.s32.f32 %v1212
          %v1725 = vcvt.s32.f32 %v1213
          %v1726 = vcvt.s32.f32 %v1214
          %v1727 = vcvt.s32.f32 %v1215
          %v1728 = vcvt.s32.f32 %v1216
          %v1729 = vcvt.s32.f32 %v1217
          %v1730 = vcvt.s32.f32 %v1218
          %v1731 = vcvt.s32.f32 %v1219
          %v1732 = vcvt.s32.f32 %v1220
          %v1733 = vcvt.s32.f32 %v1221
          %v1734 = vcvt.s32.f32 %v1222
          %v1735 = vcvt.s32.f32 %v1223
          %v1736 = vcvt.s32.f32 %v1224
          %v1737 = vcvt.s32.f32 %v1225
          %v1738 = vcvt.s32.f32 %v1226
          %v1739 = vcvt.s32.f32 %v1227
          %v1740 = vcvt.s32.f32 %v1228
          %v1741 = vcvt.s32.f32 %v1229
          %v1742 = vcvt.s32.f32 %v1230
          %v1743 = vcvt.s32.f32 %v1231
          %v1744 = vcvt.s32.f32 %v1232
          %v1745 = vcvt.s32.f32 %v1233
          %v1746 = vcvt.s32.f32 %v1234
          %v1747 = vcvt.s32.f32 %v1235
          %v1748 = vcvt.s32.f32 %v1236
          %v1749 = vcvt.s32.f32 %v1237
          %v1750 = vcvt.s32.f32 %v1238
          %v1751 = vcvt.s32.f32 %v1239
          %v1752 = vcvt.s32.f32 %v1240
          %v1753 = vcvt.s32.f32 %v1241
          %v1754 = vcvt.s32.f32 %v1242
          %v1755 = vcvt.s32.f32 %v1243
          %v1756 = vcvt.s32.f32 %v1244
          %v1757 = vcvt.s32.f32 %v1245
          %v1758 = vcvt.s32.f32 %v1246
          %v1759 = vcvt.s32.f32 %v1247
          %v1760 = vcvt.s32.f32 %v1248
          %v1761 = vcvt.s32.f32 %v1249
          %v1762 = vcvt.s32.f32 %v1250
          %v1763 = vcvt.s32.f32 %v1251
          %v1764 = vcvt.s32.f32 %v1252
          %v1765 = vcvt.s32.f32 %v1253
          %v1766 = vcvt.s32.f32 %v1254
          %v1767 = vcvt.s32.f32 %v1255
          %v1768 = vcvt.s32.f32 %v1256
          %v1769 = vcvt.s32.f32 %v1257
          %v1770 = vcvt.s32.f32 %v1258
          %v1771 = vcvt.s32.f32 %v1259
          %v1772 = vcvt.s32.f32 %v1260
          %v1773 = vcvt.s32.f32 %v1261
          %v1774 = vcvt.s32.f32 %v1262
          %v1775 = vcvt.s32.f32 %v1263
          %v1776 = vcvt.s32.f32 %v1264
          %v1777 = vcvt.s32.f32 %v1265
          %v1778 = vcvt.s32.f32 %v1266
          %v1779 = vcvt.s32.f32 %v1267
          %v1780 = vcvt.s32.f32 %v1268
          %v1781 = vcvt.s32.f32 %v1269
          %v1782 = vcvt.s32.f32 %v1270
          %v1783 = vcvt.s32.f32 %v1271
          %v1784 = vcvt.s32.f32 %v1272
          %v1785 = vcvt.s32.f32 %v1273
          %v1786 = vcvt.s32.f32 %v1274
          %v1787 = vcvt.s32.f32 %v1275
          %v1788 = vcvt.s32.f32 %v1276
          %v1789 = vcvt.s32.f32 %v1277
          %v1790 = vcvt.s32.f32 %v1278
          %v1791 = vcvt.s32.f32 %v1279
          %v1792 = vcvt.s32.f32 %v1280
          %v1793 = vcvt.s32.f32 %v1281
          %v1794 = vcvt.s32.f32 %v1282
          %v1795 = vcvt.s32.f32 %v1283
          %v1796 = vcvt.s32.f32 %v1284
          %v1797 = vcvt.s32.f32 %v1285
          %v1798 = vcvt.s32.f32 %v1286
          %v1799 = vcvt.s32.f32 %v1287
          %v1800 = vcvt.s32.f32 %v1288
          %v1801 = vcvt.s32.f32 %v1289
          %v1802 = vcvt.s32.f32 %v1290
          %v1803 = vcvt.s32.f32 %v1291
          %v1804 = vcvt.s32.f32 %v1292
          %v1805 = vcvt.s32.f32 %v1293
          %v1806 = vcvt.s32.f32 %v1294
          %v1807 = vcvt.s32.f32 %v1295
          %v1808 = vcvt.s32.f32 %v1296
          %v1809 = vcvt.s32.f32 %v1297
          %v1810 = vcvt.s32.f32 %v1298
          %v1811 = vcvt.s32.f32 %v1299
          %v1812 = vcvt.s32.f32 %v1300
          %v1813 = vcvt.s32.f32 %v1301
          %v1814 = vcvt.s32.f32 %v1302
          %v1815 = vcvt.s32.f32 %v1303
          %v1816 = vcvt.s32.f32 %v1304
          %v1817 = vcvt.s32.f32 %v1305
          %v1818 = vcvt.s32.f32 %v1306
          %v1819 = vcvt.s32.f32 %v1307
          %v1820 = vcvt.s32.f32 %v1308
          %v1821 = vcvt.s32.f32 %v1309
          %v1822 = vcvt.s32.f32 %v1310
          %v1823 = vcvt.s32.f32 %v1311
          %v1824 = vcvt.s32.f32 %v1312
          %v1825 = vcvt.s32.f32 %v1313
          %v1826 = vcvt.s32.f32 %v1314
          %v1827 = vcvt.s32.f32 %v1315
          %v1828 = vcvt.s32.f32 %v1316
          %v1829 = vcvt.s32.f32 %v1317
          %v1830 = vcvt.s32.f32 %v1318
          %v1831 = vcvt.s32.f32 %v1319
          %v1832 = vcvt.s32.f32 %v1320
          %v1833 = vcvt.s32.f32 %v1321
          %v1834 = vcvt.s32.f32 %v1322
          %v1835 = vcvt.s32.f32 %v1323
          %v1836 = vcvt.s32.f32 %v1324
          %v1837 = vcvt.s32.f32 %v1325
          %v1838 = vcvt.s32.f32 %v1326
          %v1839 = vcvt.s32.f32 %v1327
          %v1840 = vcvt.s32.f32 %v1328
          %v1841 = vcvt.s32.f32 %v1329
          %v1842 = vcvt.s32.f32 %v1330
          %v1843 = vcvt.s32.f32 %v1331
          %v1844 = vcvt.s32.f32 %v1332
          %v1845 = vcvt.s32.f32 %v1333
          %v1846 = vcvt.s32.f32 %v1334
          %v1847 = vcvt.s32.f32 %v1335
          %v1848 = vcvt.s32.f32 %v1336
          %v1849 = vcvt.s32.f32 %v1337
          %v1850 = vcvt.s32.f32 %v1338
          %v1851 = vcvt.s32.f32 %v1339
          %v1852 = vcvt.s32.f32 %v1340
          %v1853 = vcvt.s32.f32 %v1341
          %v1854 = vcvt.s32.f32 %v1342
          %v1855 = vcvt.s32.f32 %v1343
          %v1856 = vcvt.s32.f32 %v1344
          %v1857 = vcvt.s32.f32 %v1345
          %v1858 = vcvt.s32.f32 %v1346
          %v1859 = vcvt.s32.f32 %v1347
          %v1860 = vcvt.s32.f32 %v1348
          %v1861 = vcvt.s32.f32 %v1349
          %v1862 = vcvt.s32.f32 %v1350
          %v1863 = vcvt.s32.f32 %v1351
          %v1864 = vcvt.s32.f32 %v1352
          %v1865 = vcvt.s32.f32 %v1353
          %v1866 = vcvt.s32.f32 %v1354
          %v1867 = vcvt.s32.f32 %v1355
          %v1868 = vcvt.s32.f32 %v1356
          %v1869 = vcvt.s32.f32 %v1357
          %v1870 = vcvt.s32.f32 %v1358
          %v1871 = vcvt.s32.f32 %v1359
          %v1872 = vcvt.s32.f32 %v1360
          %v1873 = vcvt.s32.f32 %v1361
          %v1874 = vcvt.s32.f32 %v1362
          %v1875 = vcvt.s32.f32 %v1363
          %v1876 = vcvt.s32.f32 %v1364
          %v1877 = vcvt.s32.f32 %v1365
          %v1878 = vcvt.s32.f32 %v1366
          %v1879 = vcvt.s32.f32 %v1367
          %v1880 = vcvt.s32.f32 %v1368
          %v1881 = vcvt.s32.f32 %v1369
          %v1882 = vcvt.s32.f32 %v1370
          %v1883 = vcvt.s32.f32 %v1371
          %v1884 = vcvt.s32.f32 %v1372
          %v1885 = vcvt.s32.f32 %v1373
          %v1886 = vcvt.s32.f32 %v1374
          %v1887 = vcvt.s32.f32 %v1375
          %v1888 = vcvt.s32.f32 %v1376
          %v1889 = vcvt.s32.f32 %v1377
          %v1890 = vcvt.s32.f32 %v1378
          %v1891 = vcvt.s32.f32 %v1379
          %v1892 = vcvt.s32.f32 %v1380
          %v1893 = vcvt.s32.f32 %v1381
          %v1894 = vcvt.s32.f32 %v1382
          %v1895 = vcvt.s32.f32 %v1383
          %v1896 = vcvt.s32.f32 %v1384
          %v1897 = vcvt.s32.f32 %v1385
          %v1898 = vcvt.s32.f32 %v1386
          %v1899 = vcvt.s32.f32 %v1387
          %v1900 = vcvt.s32.f32 %v1388
          %v1901 = vcvt.s32.f32 %v1389
          %v1902 = vcvt.s32.f32 %v1390
          %v1903 = vcvt.s32.f32 %v1391
          %v1904 = vcvt.s32.f32 %v1392
          %v1905 = vcvt.s32.f32 %v1393
          %v1906 = vcvt.s32.f32 %v1394
          %v1907 = vcvt.s32.f32 %v1395
          %v1908 = vcvt.s32.f32 %v1396
          %v1909 = vcvt.s32.f32 %v1397
          %v1910 = vcvt.s32.f32 %v1398
          %v1911 = vcvt.s32.f32 %v1399
          %v1912 = vcvt.s32.f32 %v1400
          %v1913 = vcvt.s32.f32 %v1401
          %v1914 = vcvt.s32.f32 %v1402
          %v1915 = vcvt.s32.f32 %v1403
          %v1916 = vcvt.s32.f32 %v1404
          %v1917 = vcvt.s32.f32 %v1405
          %v1918 = vcvt.s32.f32 %v1406
          %v1919 = vcvt.s32.f32 %v1407
          %v1920 = vcvt.s32.f32 %v1408
          %v1921 = vcvt.s32.f32 %v1409
          %v1922 = vcvt.s32.f32 %v1410
          %v1923 = vpack.c.bf16 %v1427, %v1411
          %v1924 = vpack.c.bf16 %v1428, %v1412
          %v1925 = vpack.c.bf16 %v1429, %v1413
          %v1926 = vpack.c.bf16 %v1430, %v1414
          %v1927 = vpack.c.bf16 %v1431, %v1415
          %v1928 = vpack.c.bf16 %v1432, %v1416
          %v1929 = vpack.c.bf16 %v1433, %v1417
          %v1930 = vpack.c.bf16 %v1434, %v1418
          %v1931 = vpack.c.bf16 %v1435, %v1419
          %v1932 = vpack.c.bf16 %v1436, %v1420
          %v1933 = vpack.c.bf16 %v1437, %v1421
          %v1934 = vpack.c.bf16 %v1438, %v1422
          %v1935 = vpack.c.bf16 %v1439, %v1423
          %v1936 = vpack.c.bf16 %v1440, %v1424
          %v1937 = vpack.c.bf16 %v1441, %v1425
          %v1938 = vpack.c.bf16 %v1442, %v1426
          %v1939 = vpack.c.bf16 %v1459, %v1443
          %v1940 = vpack.c.bf16 %v1460, %v1444
          %v1941 = vpack.c.bf16 %v1461, %v1445
          %v1942 = vpack.c.bf16 %v1462, %v1446
          %v1943 = vpack.c.bf16 %v1463, %v1447
          %v1944 = vpack.c.bf16 %v1464, %v1448
          %v1945 = vpack.c.bf16 %v1465, %v1449
          %v1946 = vpack.c.bf16 %v1466, %v1450
          %v1947 = vpack.c.bf16 %v1467, %v1451
          %v1948 = vpack.c.bf16 %v1468, %v1452
          %v1949 = vpack.c.bf16 %v1469, %v1453
          %v1950 = vpack.c.bf16 %v1470, %v1454
          %v1951 = vpack.c.bf16 %v1471, %v1455
          %v1952 = vpack.c.bf16 %v1472, %v1456
          %v1953 = vpack.c.bf16 %v1473, %v1457
          %v1954 = vpack.c.bf16 %v1474, %v1458
          %v1955 = vpack.c.bf16 %v1491, %v1475
          %v1956 = vpack.c.bf16 %v1492, %v1476
          %v1957 = vpack.c.bf16 %v1493, %v1477
          %v1958 = vpack.c.bf16 %v1494, %v1478
          %v1959 = vpack.c.bf16 %v1495, %v1479
          %v1960 = vpack.c.bf16 %v1496, %v1480
          %v1961 = vpack.c.bf16 %v1497, %v1481
          %v1962 = vpack.c.bf16 %v1498, %v1482
          %v1963 = vpack.c.bf16 %v1499, %v1483
          %v1964 = vpack.c.bf16 %v1500, %v1484
          %v1965 = vpack.c.bf16 %v1501, %v1485
          %v1966 = vpack.c.bf16 %v1502, %v1486
          %v1967 = vpack.c.bf16 %v1503, %v1487
          %v1968 = vpack.c.bf16 %v1504, %v1488
          %v1969 = vpack.c.bf16 %v1505, %v1489
          %v1970 = vpack.c.bf16 %v1506, %v1490
          %v1971 = vpack.c.bf16 %v1523, %v1507
          %v1972 = vpack.c.bf16 %v1524, %v1508
          %v1973 = vpack.c.bf16 %v1525, %v1509
          %v1974 = vpack.c.bf16 %v1526, %v1510
          %v1975 = vpack.c.bf16 %v1527, %v1511
          %v1976 = vpack.c.bf16 %v1528, %v1512
          %v1977 = vpack.c.bf16 %v1529, %v1513
          %v1978 = vpack.c.bf16 %v1530, %v1514
          %v1979 = vpack.c.bf16 %v1531, %v1515
          %v1980 = vpack.c.bf16 %v1532, %v1516
          %v1981 = vpack.c.bf16 %v1533, %v1517
          %v1982 = vpack.c.bf16 %v1534, %v1518
          %v1983 = vpack.c.bf16 %v1535, %v1519
          %v1984 = vpack.c.bf16 %v1536, %v1520
          %v1985 = vpack.c.bf16 %v1537, %v1521
          %v1986 = vpack.c.bf16 %v1538, %v1522
          %v1987 = vpack.c.bf16 %v1555, %v1539
          %v1988 = vpack.c.bf16 %v1556, %v1540
          %v1989 = vpack.c.bf16 %v1557, %v1541
          %v1990 = vpack.c.bf16 %v1558, %v1542
          %v1991 = vpack.c.bf16 %v1559, %v1543
          %v1992 = vpack.c.bf16 %v1560, %v1544
          %v1993 = vpack.c.bf16 %v1561, %v1545
          %v1994 = vpack.c.bf16 %v1562, %v1546
          %v1995 = vpack.c.bf16 %v1563, %v1547
          %v1996 = vpack.c.bf16 %v1564, %v1548
          %v1997 = vpack.c.bf16 %v1565, %v1549
          %v1998 = vpack.c.bf16 %v1566, %v1550
          %v1999 = vpack.c.bf16 %v1567, %v1551
          %v2000 = vpack.c.bf16 %v1568, %v1552
          %v2001 = vpack.c.bf16 %v1569, %v1553
          %v2002 = vpack.c.bf16 %v1570, %v1554
          %v2003 = vpack.c.bf16 %v1587, %v1571
          %v2004 = vpack.c.bf16 %v1588, %v1572
          %v2005 = vpack.c.bf16 %v1589, %v1573
          %v2006 = vpack.c.bf16 %v1590, %v1574
          %v2007 = vpack.c.bf16 %v1591, %v1575
          %v2008 = vpack.c.bf16 %v1592, %v1576
          %v2009 = vpack.c.bf16 %v1593, %v1577
          %v2010 = vpack.c.bf16 %v1594, %v1578
          %v2011 = vpack.c.bf16 %v1595, %v1579
          %v2012 = vpack.c.bf16 %v1596, %v1580
          %v2013 = vpack.c.bf16 %v1597, %v1581
          %v2014 = vpack.c.bf16 %v1598, %v1582
          %v2015 = vpack.c.bf16 %v1599, %v1583
          %v2016 = vpack.c.bf16 %v1600, %v1584
          %v2017 = vpack.c.bf16 %v1601, %v1585
          %v2018 = vpack.c.bf16 %v1602, %v1586
          %v2019 = vpack.c.bf16 %v1619, %v1603
          %v2020 = vpack.c.bf16 %v1620, %v1604
          %v2021 = vpack.c.bf16 %v1621, %v1605
          %v2022 = vpack.c.bf16 %v1622, %v1606
          %v2023 = vpack.c.bf16 %v1623, %v1607
          %v2024 = vpack.c.bf16 %v1624, %v1608
          %v2025 = vpack.c.bf16 %v1625, %v1609
          %v2026 = vpack.c.bf16 %v1626, %v1610
          %v2027 = vpack.c.bf16 %v1627, %v1611
          %v2028 = vpack.c.bf16 %v1628, %v1612
          %v2029 = vpack.c.bf16 %v1629, %v1613
          %v2030 = vpack.c.bf16 %v1630, %v1614
          %v2031 = vpack.c.bf16 %v1631, %v1615
          %v2032 = vpack.c.bf16 %v1632, %v1616
          %v2033 = vpack.c.bf16 %v1633, %v1617
          %v2034 = vpack.c.bf16 %v1634, %v1618
          %v2035 = vpack.c.bf16 %v1651, %v1635
          %v2036 = vpack.c.bf16 %v1652, %v1636
          %v2037 = vpack.c.bf16 %v1653, %v1637
          %v2038 = vpack.c.bf16 %v1654, %v1638
          %v2039 = vpack.c.bf16 %v1655, %v1639
          %v2040 = vpack.c.bf16 %v1656, %v1640
          %v2041 = vpack.c.bf16 %v1657, %v1641
          %v2042 = vpack.c.bf16 %v1658, %v1642
          %v2043 = vpack.c.bf16 %v1659, %v1643
          %v2044 = vpack.c.bf16 %v1660, %v1644
          %v2045 = vpack.c.bf16 %v1661, %v1645
          %v2046 = vpack.c.bf16 %v1662, %v1646
          %v2047 = vpack.c.bf16 %v1663, %v1647
          %v2048 = vpack.c.bf16 %v1664, %v1648
          %v2049 = vpack.c.bf16 %v1665, %v1649
          %v2050 = vpack.c.bf16 %v1666, %v1650
          %v2051 = vpack.c.bf16 %v1683, %v1667
          %v2052 = vpack.c.bf16 %v1684, %v1668
          %v2053 = vpack.c.bf16 %v1685, %v1669
          %v2054 = vpack.c.bf16 %v1686, %v1670
          %v2055 = vpack.c.bf16 %v1687, %v1671
          %v2056 = vpack.c.bf16 %v1688, %v1672
          %v2057 = vpack.c.bf16 %v1689, %v1673
          %v2058 = vpack.c.bf16 %v1690, %v1674
          %v2059 = vpack.c.bf16 %v1691, %v1675
          %v2060 = vpack.c.bf16 %v1692, %v1676
          %v2061 = vpack.c.bf16 %v1693, %v1677
          %v2062 = vpack.c.bf16 %v1694, %v1678
          %v2063 = vpack.c.bf16 %v1695, %v1679
          %v2064 = vpack.c.bf16 %v1696, %v1680
          %v2065 = vpack.c.bf16 %v1697, %v1681
          %v2066 = vpack.c.bf16 %v1698, %v1682
          %v2067 = vpack.c.bf16 %v1715, %v1699
          %v2068 = vpack.c.bf16 %v1716, %v1700
          %v2069 = vpack.c.bf16 %v1717, %v1701
          %v2070 = vpack.c.bf16 %v1718, %v1702
          %v2071 = vpack.c.bf16 %v1719, %v1703
          %v2072 = vpack.c.bf16 %v1720, %v1704
          %v2073 = vpack.c.bf16 %v1721, %v1705
          %v2074 = vpack.c.bf16 %v1722, %v1706
          %v2075 = vpack.c.bf16 %v1723, %v1707
          %v2076 = vpack.c.bf16 %v1724, %v1708
          %v2077 = vpack.c.bf16 %v1725, %v1709
          %v2078 = vpack.c.bf16 %v1726, %v1710
          %v2079 = vpack.c.bf16 %v1727, %v1711
          %v2080 = vpack.c.bf16 %v1728, %v1712
          %v2081 = vpack.c.bf16 %v1729, %v1713
          %v2082 = vpack.c.bf16 %v1730, %v1714
          %v2083 = vpack.c.bf16 %v1747, %v1731
          %v2084 = vpack.c.bf16 %v1748, %v1732
          %v2085 = vpack.c.bf16 %v1749, %v1733
          %v2086 = vpack.c.bf16 %v1750, %v1734
          %v2087 = vpack.c.bf16 %v1751, %v1735
          %v2088 = vpack.c.bf16 %v1752, %v1736
          %v2089 = vpack.c.bf16 %v1753, %v1737
          %v2090 = vpack.c.bf16 %v1754, %v1738
          %v2091 = vpack.c.bf16 %v1755, %v1739
          %v2092 = vpack.c.bf16 %v1756, %v1740
          %v2093 = vpack.c.bf16 %v1757, %v1741
          %v2094 = vpack.c.bf16 %v1758, %v1742
          %v2095 = vpack.c.bf16 %v1759, %v1743
          %v2096 = vpack.c.bf16 %v1760, %v1744
          %v2097 = vpack.c.bf16 %v1761, %v1745
          %v2098 = vpack.c.bf16 %v1762, %v1746
          %v2099 = vpack.c.bf16 %v1779, %v1763
          %v2100 = vpack.c.bf16 %v1780, %v1764
          %v2101 = vpack.c.bf16 %v1781, %v1765
          %v2102 = vpack.c.bf16 %v1782, %v1766
          %v2103 = vpack.c.bf16 %v1783, %v1767
          %v2104 = vpack.c.bf16 %v1784, %v1768
          %v2105 = vpack.c.bf16 %v1785, %v1769
          %v2106 = vpack.c.bf16 %v1786, %v1770
          %v2107 = vpack.c.bf16 %v1787, %v1771
          %v2108 = vpack.c.bf16 %v1788, %v1772
          %v2109 = vpack.c.bf16 %v1789, %v1773
          %v2110 = vpack.c.bf16 %v1790, %v1774
          %v2111 = vpack.c.bf16 %v1791, %v1775
          %v2112 = vpack.c.bf16 %v1792, %v1776
          %v2113 = vpack.c.bf16 %v1793, %v1777
          %v2114 = vpack.c.bf16 %v1794, %v1778
          %v2115 = vpack.c.bf16 %v1811, %v1795
          %v2116 = vpack.c.bf16 %v1812, %v1796
          %v2117 = vpack.c.bf16 %v1813, %v1797
          %v2118 = vpack.c.bf16 %v1814, %v1798
          %v2119 = vpack.c.bf16 %v1815, %v1799
          %v2120 = vpack.c.bf16 %v1816, %v1800
          %v2121 = vpack.c.bf16 %v1817, %v1801
          %v2122 = vpack.c.bf16 %v1818, %v1802
          %v2123 = vpack.c.bf16 %v1819, %v1803
          %v2124 = vpack.c.bf16 %v1820, %v1804
          %v2125 = vpack.c.bf16 %v1821, %v1805
          %v2126 = vpack.c.bf16 %v1822, %v1806
          %v2127 = vpack.c.bf16 %v1823, %v1807
          %v2128 = vpack.c.bf16 %v1824, %v1808
          %v2129 = vpack.c.bf16 %v1825, %v1809
          %v2130 = vpack.c.bf16 %v1826, %v1810
          %v2131 = vpack.c.bf16 %v1843, %v1827
          %v2132 = vpack.c.bf16 %v1844, %v1828
          %v2133 = vpack.c.bf16 %v1845, %v1829
          %v2134 = vpack.c.bf16 %v1846, %v1830
          %v2135 = vpack.c.bf16 %v1847, %v1831
          %v2136 = vpack.c.bf16 %v1848, %v1832
          %v2137 = vpack.c.bf16 %v1849, %v1833
          %v2138 = vpack.c.bf16 %v1850, %v1834
          %v2139 = vpack.c.bf16 %v1851, %v1835
          %v2140 = vpack.c.bf16 %v1852, %v1836
          %v2141 = vpack.c.bf16 %v1853, %v1837
          %v2142 = vpack.c.bf16 %v1854, %v1838
          %v2143 = vpack.c.bf16 %v1855, %v1839
          %v2144 = vpack.c.bf16 %v1856, %v1840
          %v2145 = vpack.c.bf16 %v1857, %v1841
          %v2146 = vpack.c.bf16 %v1858, %v1842
          %v2147 = vpack.c.bf16 %v1875, %v1859
          %v2148 = vpack.c.bf16 %v1876, %v1860
          %v2149 = vpack.c.bf16 %v1877, %v1861
          %v2150 = vpack.c.bf16 %v1878, %v1862
          %v2151 = vpack.c.bf16 %v1879, %v1863
          %v2152 = vpack.c.bf16 %v1880, %v1864
          %v2153 = vpack.c.bf16 %v1881, %v1865
          %v2154 = vpack.c.bf16 %v1882, %v1866
          %v2155 = vpack.c.bf16 %v1883, %v1867
          %v2156 = vpack.c.bf16 %v1884, %v1868
          %v2157 = vpack.c.bf16 %v1885, %v1869
          %v2158 = vpack.c.bf16 %v1886, %v1870
          %v2159 = vpack.c.bf16 %v1887, %v1871
          %v2160 = vpack.c.bf16 %v1888, %v1872
          %v2161 = vpack.c.bf16 %v1889, %v1873
          %v2162 = vpack.c.bf16 %v1890, %v1874
          %v2163 = vpack.c.bf16 %v1907, %v1891
          %v2164 = vpack.c.bf16 %v1908, %v1892
          %v2165 = vpack.c.bf16 %v1909, %v1893
          %v2166 = vpack.c.bf16 %v1910, %v1894
          %v2167 = vpack.c.bf16 %v1911, %v1895
          %v2168 = vpack.c.bf16 %v1912, %v1896
          %v2169 = vpack.c.bf16 %v1913, %v1897
          %v2170 = vpack.c.bf16 %v1914, %v1898
          %v2171 = vpack.c.bf16 %v1915, %v1899
          %v2172 = vpack.c.bf16 %v1916, %v1900
          %v2173 = vpack.c.bf16 %v1917, %v1901
          %v2174 = vpack.c.bf16 %v1918, %v1902
          %v2175 = vpack.c.bf16 %v1919, %v1903
          %v2176 = vpack.c.bf16 %v1920, %v1904
          %v2177 = vpack.c.bf16 %v1921, %v1905
          %v2178 = vpack.c.bf16 %v1922, %v1906
          %v2179 = vld [vmem:[%s247] sm:$0xff]
          %v2180 = vld [vmem:[%s247 + $0x8] sm:$0xff]
          %v2181 = vld [vmem:[%s247 + $0x10] sm:$0xff]
          %v2182 = vld [vmem:[%s247 + $0x18] sm:$0xff]
          %v2183 = vld [vmem:[%s247 + $0x20] sm:$0xff]
          %v2184 = vld [vmem:[%s247 + $0x28] sm:$0xff]
          %v2185 = vld [vmem:[%s247 + $0x30] sm:$0xff]
          %v2186 = vld [vmem:[%s247 + $0x38] sm:$0xff]
          %v2187 = vld [vmem:[%s247 + $0x40] sm:$0xff]
          %v2188 = vld [vmem:[%s247 + $0x48] sm:$0xff]
          %v2189 = vld [vmem:[%s247 + $0x50] sm:$0xff]
          %v2190 = vld [vmem:[%s247 + $0x58] sm:$0xff]
          %v2191 = vld [vmem:[%s247 + $0x60] sm:$0xff]
          %v2192 = vld [vmem:[%s247 + $0x68] sm:$0xff]
          %v2193 = vld [vmem:[%s247 + $0x70] sm:$0xff]
          %v2194 = vld [vmem:[%s247 + $0x78] sm:$0xff]
          %v2195 = vld [vmem:[%s247 + $0x80] sm:$0xff]
          %v2196 = vld [vmem:[%s247 + $0x88] sm:$0xff]
          %v2197 = vld [vmem:[%s247 + $0x90] sm:$0xff]
          %v2198 = vld [vmem:[%s247 + $0x98] sm:$0xff]
          %v2199 = vld [vmem:[%s247 + $0xa0] sm:$0xff]
          %v2200 = vld [vmem:[%s247 + $0xa8] sm:$0xff]
          %v2201 = vld [vmem:[%s247 + $0xb0] sm:$0xff]
          %v2202 = vld [vmem:[%s247 + $0xb8] sm:$0xff]
          %v2203 = vld [vmem:[%s247 + $0xc0] sm:$0xff]
          %v2204 = vld [vmem:[%s247 + $0xc8] sm:$0xff]
          %v2205 = vld [vmem:[%s247 + $0xd0] sm:$0xff]
          %v2206 = vld [vmem:[%s247 + $0xd8] sm:$0xff]
          %v2207 = vld [vmem:[%s247 + $0xe0] sm:$0xff]
          %v2208 = vld [vmem:[%s247 + $0xe8] sm:$0xff]
          %v2209 = vld [vmem:[%s247 + $0xf0] sm:$0xff]
          %v2210 = vld [vmem:[%s247 + $0xf8] sm:$0xff]
          %v2211 = vld [vmem:[%s221] sm:$0xf]
          %v2212 = vld [vmem:[%s221 + $0x4] sm:$0xf]
          %v2213 = vld [vmem:[%s221 + $0x8] sm:$0xf]
          %v2214 = vld [vmem:[%s221 + $0xc] sm:$0xf]
          %v2215 = vld [vmem:[%s221 + $0x10] sm:$0xf]
          %v2216 = vld [vmem:[%s221 + $0x14] sm:$0xf]
          %v2217 = vld [vmem:[%s221 + $0x18] sm:$0xf]
          %v2218 = vld [vmem:[%s221 + $0x1c] sm:$0xf]
          %v2219 = vld [vmem:[%s221 + $0x20] sm:$0xf]
          %v2220 = vld [vmem:[%s221 + $0x24] sm:$0xf]
          %v2221 = vld [vmem:[%s221 + $0x28] sm:$0xf]
          %v2222 = vld [vmem:[%s221 + $0x2c] sm:$0xf]
          %v2223 = vld [vmem:[%s221 + $0x30] sm:$0xf]
          %v2224 = vld [vmem:[%s221 + $0x34] sm:$0xf]
          %v2225 = vld [vmem:[%s221 + $0x38] sm:$0xf]
          %v2226 = vld [vmem:[%s221 + $0x3c] sm:$0xf]
          %v2227 = vld [vmem:[%s221 + $0x40] sm:$0xf]
          %v2228 = vld [vmem:[%s221 + $0x44] sm:$0xf]
          %v2229 = vld [vmem:[%s221 + $0x48] sm:$0xf]
          %v2230 = vld [vmem:[%s221 + $0x4c] sm:$0xf]
          %v2231 = vld [vmem:[%s221 + $0x50] sm:$0xf]
          %v2232 = vld [vmem:[%s221 + $0x54] sm:$0xf]
          %v2233 = vld [vmem:[%s221 + $0x58] sm:$0xf]
          %v2234 = vld [vmem:[%s221 + $0x5c] sm:$0xf]
          %v2235 = vld [vmem:[%s221 + $0x60] sm:$0xf]
          %v2236 = vld [vmem:[%s221 + $0x64] sm:$0xf]
          %v2237 = vld [vmem:[%s221 + $0x68] sm:$0xf]
          %v2238 = vld [vmem:[%s221 + $0x6c] sm:$0xf]
          %v2239 = vld [vmem:[%s221 + $0x70] sm:$0xf]
          %v2240 = vld [vmem:[%s221 + $0x74] sm:$0xf]
          %v2241 = vld [vmem:[%s221 + $0x78] sm:$0xf]
          %v2242 = vld [vmem:[%s221 + $0x7c] sm:$0xf]
          %v2243 = vld [vmem:[%s221 + $0x80] sm:$0xf]
          %v2244 = vld [vmem:[%s221 + $0x84] sm:$0xf]
          %v2245 = vld [vmem:[%s221 + $0x88] sm:$0xf]
          %v2246 = vld [vmem:[%s221 + $0x8c] sm:$0xf]
          %v2247 = vld [vmem:[%s221 + $0x90] sm:$0xf]
          %v2248 = vld [vmem:[%s221 + $0x94] sm:$0xf]
          %v2249 = vld [vmem:[%s221 + $0x98] sm:$0xf]
          %v2250 = vld [vmem:[%s221 + $0x9c] sm:$0xf]
          %v2251 = vld [vmem:[%s221 + $0xa0] sm:$0xf]
          %v2252 = vld [vmem:[%s221 + $0xa4] sm:$0xf]
          %v2253 = vld [vmem:[%s221 + $0xa8] sm:$0xf]
          %v2254 = vld [vmem:[%s221 + $0xac] sm:$0xf]
          %v2255 = vld [vmem:[%s221 + $0xb0] sm:$0xf]
          %v2256 = vld [vmem:[%s221 + $0xb4] sm:$0xf]
          %v2257 = vld [vmem:[%s221 + $0xb8] sm:$0xf]
          %v2258 = vld [vmem:[%s221 + $0xbc] sm:$0xf]
          %v2259 = vld [vmem:[%s221 + $0xc0] sm:$0xf]
          %v2260 = vld [vmem:[%s221 + $0xc4] sm:$0xf]
          %v2261 = vld [vmem:[%s221 + $0xc8] sm:$0xf]
          %v2262 = vld [vmem:[%s221 + $0xcc] sm:$0xf]
          %v2263 = vld [vmem:[%s221 + $0xd0] sm:$0xf]
          %v2264 = vld [vmem:[%s221 + $0xd4] sm:$0xf]
          %v2265 = vld [vmem:[%s221 + $0xd8] sm:$0xf]
          %v2266 = vld [vmem:[%s221 + $0xdc] sm:$0xf]
          %v2267 = vld [vmem:[%s221 + $0xe0] sm:$0xf]
          %v2268 = vld [vmem:[%s221 + $0xe4] sm:$0xf]
          %v2269 = vld [vmem:[%s221 + $0xe8] sm:$0xf]
          %v2270 = vld [vmem:[%s221 + $0xec] sm:$0xf]
          %v2271 = vld [vmem:[%s221 + $0xf0] sm:$0xf]
          %v2272 = vld [vmem:[%s221 + $0xf4] sm:$0xf]
          %v2273 = vld [vmem:[%s221 + $0xf8] sm:$0xf]
          %v2274 = vld [vmem:[%s221 + $0xfc] sm:$0xf]
          %v2275 = vld [vmem:[%s221 + $0x100] sm:$0xf]
          %v2276 = vld [vmem:[%s221 + $0x104] sm:$0xf]
          %v2277 = vld [vmem:[%s221 + $0x108] sm:$0xf]
          %v2278 = vld [vmem:[%s221 + $0x10c] sm:$0xf]
          %v2279 = vld [vmem:[%s221 + $0x110] sm:$0xf]
          %v2280 = vld [vmem:[%s221 + $0x114] sm:$0xf]
          %v2281 = vld [vmem:[%s221 + $0x118] sm:$0xf]
          %v2282 = vld [vmem:[%s221 + $0x11c] sm:$0xf]
          %v2283 = vld [vmem:[%s221 + $0x120] sm:$0xf]
          %v2284 = vld [vmem:[%s221 + $0x124] sm:$0xf]
          %v2285 = vld [vmem:[%s221 + $0x128] sm:$0xf]
          %v2286 = vld [vmem:[%s221 + $0x12c] sm:$0xf]
          %v2287 = vld [vmem:[%s221 + $0x130] sm:$0xf]
          %v2288 = vld [vmem:[%s221 + $0x134] sm:$0xf]
          %v2289 = vld [vmem:[%s221 + $0x138] sm:$0xf]
          %v2290 = vld [vmem:[%s221 + $0x13c] sm:$0xf]
          %v2291 = vld [vmem:[%s221 + $0x140] sm:$0xf]
          %v2292 = vld [vmem:[%s221 + $0x144] sm:$0xf]
          %v2293 = vld [vmem:[%s221 + $0x148] sm:$0xf]
          %v2294 = vld [vmem:[%s221 + $0x14c] sm:$0xf]
          %v2295 = vld [vmem:[%s221 + $0x150] sm:$0xf]
          %v2296 = vld [vmem:[%s221 + $0x154] sm:$0xf]
          %v2297 = vld [vmem:[%s221 + $0x158] sm:$0xf]
          %v2298 = vld [vmem:[%s221 + $0x15c] sm:$0xf]
          %v2299 = vld [vmem:[%s221 + $0x160] sm:$0xf]
          %v2300 = vld [vmem:[%s221 + $0x164] sm:$0xf]
          %v2301 = vld [vmem:[%s221 + $0x168] sm:$0xf]
          %v2302 = vld [vmem:[%s221 + $0x16c] sm:$0xf]
          %v2303 = vld [vmem:[%s221 + $0x170] sm:$0xf]
          %v2304 = vld [vmem:[%s221 + $0x174] sm:$0xf]
          %v2305 = vld [vmem:[%s221 + $0x178] sm:$0xf]
          %v2306 = vld [vmem:[%s221 + $0x17c] sm:$0xf]
          %v2307 = vld [vmem:[%s221 + $0x180] sm:$0xf]
          %v2308 = vld [vmem:[%s221 + $0x184] sm:$0xf]
          %v2309 = vld [vmem:[%s221 + $0x188] sm:$0xf]
          %v2310 = vld [vmem:[%s221 + $0x18c] sm:$0xf]
          %v2311 = vld [vmem:[%s221 + $0x190] sm:$0xf]
          %v2312 = vld [vmem:[%s221 + $0x194] sm:$0xf]
          %v2313 = vld [vmem:[%s221 + $0x198] sm:$0xf]
          %v2314 = vld [vmem:[%s221 + $0x19c] sm:$0xf]
          %v2315 = vld [vmem:[%s221 + $0x1a0] sm:$0xf]
          %v2316 = vld [vmem:[%s221 + $0x1a4] sm:$0xf]
          %v2317 = vld [vmem:[%s221 + $0x1a8] sm:$0xf]
          %v2318 = vld [vmem:[%s221 + $0x1ac] sm:$0xf]
          %v2319 = vld [vmem:[%s221 + $0x1b0] sm:$0xf]
          %v2320 = vld [vmem:[%s221 + $0x1b4] sm:$0xf]
          %v2321 = vld [vmem:[%s221 + $0x1b8] sm:$0xf]
          %v2322 = vld [vmem:[%s221 + $0x1bc] sm:$0xf]
          %v2323 = vld [vmem:[%s221 + $0x1c0] sm:$0xf]
          %v2324 = vld [vmem:[%s221 + $0x1c4] sm:$0xf]
          %v2325 = vld [vmem:[%s221 + $0x1c8] sm:$0xf]
          %v2326 = vld [vmem:[%s221 + $0x1cc] sm:$0xf]
          %v2327 = vld [vmem:[%s221 + $0x1d0] sm:$0xf]
          %v2328 = vld [vmem:[%s221 + $0x1d4] sm:$0xf]
          %v2329 = vld [vmem:[%s221 + $0x1d8] sm:$0xf]
          %v2330 = vld [vmem:[%s221 + $0x1dc] sm:$0xf]
          %v2331 = vld [vmem:[%s221 + $0x1e0] sm:$0xf]
          %v2332 = vld [vmem:[%s221 + $0x1e4] sm:$0xf]
          %v2333 = vld [vmem:[%s221 + $0x1e8] sm:$0xf]
          %v2334 = vld [vmem:[%s221 + $0x1ec] sm:$0xf]
          %v2335 = vld [vmem:[%s221 + $0x1f0] sm:$0xf]
          %v2336 = vld [vmem:[%s221 + $0x1f4] sm:$0xf]
          %v2337 = vld [vmem:[%s221 + $0x1f8] sm:$0xf]
          %v2338 = vld [vmem:[%s221 + $0x1fc] sm:$0xf]
          %v2339 = vld [vmem:[%s221 + $0x200] sm:$0xf]
          %v2340 = vld [vmem:[%s221 + $0x204] sm:$0xf]
          %v2341 = vld [vmem:[%s221 + $0x208] sm:$0xf]
          %v2342 = vld [vmem:[%s221 + $0x20c] sm:$0xf]
          %v2343 = vld [vmem:[%s221 + $0x210] sm:$0xf]
          %v2344 = vld [vmem:[%s221 + $0x214] sm:$0xf]
          %v2345 = vld [vmem:[%s221 + $0x218] sm:$0xf]
          %v2346 = vld [vmem:[%s221 + $0x21c] sm:$0xf]
          %v2347 = vld [vmem:[%s221 + $0x220] sm:$0xf]
          %v2348 = vld [vmem:[%s221 + $0x224] sm:$0xf]
          %v2349 = vld [vmem:[%s221 + $0x228] sm:$0xf]
          %v2350 = vld [vmem:[%s221 + $0x22c] sm:$0xf]
          %v2351 = vld [vmem:[%s221 + $0x230] sm:$0xf]
          %v2352 = vld [vmem:[%s221 + $0x234] sm:$0xf]
          %v2353 = vld [vmem:[%s221 + $0x238] sm:$0xf]
          %v2354 = vld [vmem:[%s221 + $0x23c] sm:$0xf]
          %v2355 = vld [vmem:[%s221 + $0x240] sm:$0xf]
          %v2356 = vld [vmem:[%s221 + $0x244] sm:$0xf]
          %v2357 = vld [vmem:[%s221 + $0x248] sm:$0xf]
          %v2358 = vld [vmem:[%s221 + $0x24c] sm:$0xf]
          %v2359 = vld [vmem:[%s221 + $0x250] sm:$0xf]
          %v2360 = vld [vmem:[%s221 + $0x254] sm:$0xf]
          %v2361 = vld [vmem:[%s221 + $0x258] sm:$0xf]
          %v2362 = vld [vmem:[%s221 + $0x25c] sm:$0xf]
          %v2363 = vld [vmem:[%s221 + $0x260] sm:$0xf]
          %v2364 = vld [vmem:[%s221 + $0x264] sm:$0xf]
          %v2365 = vld [vmem:[%s221 + $0x268] sm:$0xf]
          %v2366 = vld [vmem:[%s221 + $0x26c] sm:$0xf]
          %v2367 = vld [vmem:[%s221 + $0x270] sm:$0xf]
          %v2368 = vld [vmem:[%s221 + $0x274] sm:$0xf]
          %v2369 = vld [vmem:[%s221 + $0x278] sm:$0xf]
          %v2370 = vld [vmem:[%s221 + $0x27c] sm:$0xf]
          %v2371 = vld [vmem:[%s221 + $0x280] sm:$0xf]
          %v2372 = vld [vmem:[%s221 + $0x284] sm:$0xf]
          %v2373 = vld [vmem:[%s221 + $0x288] sm:$0xf]
          %v2374 = vld [vmem:[%s221 + $0x28c] sm:$0xf]
          %v2375 = vld [vmem:[%s221 + $0x290] sm:$0xf]
          %v2376 = vld [vmem:[%s221 + $0x294] sm:$0xf]
          %v2377 = vld [vmem:[%s221 + $0x298] sm:$0xf]
          %v2378 = vld [vmem:[%s221 + $0x29c] sm:$0xf]
          %v2379 = vld [vmem:[%s221 + $0x2a0] sm:$0xf]
          %v2380 = vld [vmem:[%s221 + $0x2a4] sm:$0xf]
          %v2381 = vld [vmem:[%s221 + $0x2a8] sm:$0xf]
          %v2382 = vld [vmem:[%s221 + $0x2ac] sm:$0xf]
          %v2383 = vld [vmem:[%s221 + $0x2b0] sm:$0xf]
          %v2384 = vld [vmem:[%s221 + $0x2b4] sm:$0xf]
          %v2385 = vld [vmem:[%s221 + $0x2b8] sm:$0xf]
          %v2386 = vld [vmem:[%s221 + $0x2bc] sm:$0xf]
          %v2387 = vld [vmem:[%s221 + $0x2c0] sm:$0xf]
          %v2388 = vld [vmem:[%s221 + $0x2c4] sm:$0xf]
          %v2389 = vld [vmem:[%s221 + $0x2c8] sm:$0xf]
          %v2390 = vld [vmem:[%s221 + $0x2cc] sm:$0xf]
          %v2391 = vld [vmem:[%s221 + $0x2d0] sm:$0xf]
          %v2392 = vld [vmem:[%s221 + $0x2d4] sm:$0xf]
          %v2393 = vld [vmem:[%s221 + $0x2d8] sm:$0xf]
          %v2394 = vld [vmem:[%s221 + $0x2dc] sm:$0xf]
          %v2395 = vld [vmem:[%s221 + $0x2e0] sm:$0xf]
          %v2396 = vld [vmem:[%s221 + $0x2e4] sm:$0xf]
          %v2397 = vld [vmem:[%s221 + $0x2e8] sm:$0xf]
          %v2398 = vld [vmem:[%s221 + $0x2ec] sm:$0xf]
          %v2399 = vld [vmem:[%s221 + $0x2f0] sm:$0xf]
          %v2400 = vld [vmem:[%s221 + $0x2f4] sm:$0xf]
          %v2401 = vld [vmem:[%s221 + $0x2f8] sm:$0xf]
          %v2402 = vld [vmem:[%s221 + $0x2fc] sm:$0xf]
          %v2403 = vld [vmem:[%s221 + $0x300] sm:$0xf]
          %v2404 = vld [vmem:[%s221 + $0x304] sm:$0xf]
          %v2405 = vld [vmem:[%s221 + $0x308] sm:$0xf]
          %v2406 = vld [vmem:[%s221 + $0x30c] sm:$0xf]
          %v2407 = vld [vmem:[%s221 + $0x310] sm:$0xf]
          %v2408 = vld [vmem:[%s221 + $0x314] sm:$0xf]
          %v2409 = vld [vmem:[%s221 + $0x318] sm:$0xf]
          %v2410 = vld [vmem:[%s221 + $0x31c] sm:$0xf]
          %v2411 = vld [vmem:[%s221 + $0x320] sm:$0xf]
          %v2412 = vld [vmem:[%s221 + $0x324] sm:$0xf]
          %v2413 = vld [vmem:[%s221 + $0x328] sm:$0xf]
          %v2414 = vld [vmem:[%s221 + $0x32c] sm:$0xf]
          %v2415 = vld [vmem:[%s221 + $0x330] sm:$0xf]
          %v2416 = vld [vmem:[%s221 + $0x334] sm:$0xf]
          %v2417 = vld [vmem:[%s221 + $0x338] sm:$0xf]
          %v2418 = vld [vmem:[%s221 + $0x33c] sm:$0xf]
          %v2419 = vld [vmem:[%s221 + $0x340] sm:$0xf]
          %v2420 = vld [vmem:[%s221 + $0x344] sm:$0xf]
          %v2421 = vld [vmem:[%s221 + $0x348] sm:$0xf]
          %v2422 = vld [vmem:[%s221 + $0x34c] sm:$0xf]
          %v2423 = vld [vmem:[%s221 + $0x350] sm:$0xf]
          %v2424 = vld [vmem:[%s221 + $0x354] sm:$0xf]
          %v2425 = vld [vmem:[%s221 + $0x358] sm:$0xf]
          %v2426 = vld [vmem:[%s221 + $0x35c] sm:$0xf]
          %v2427 = vld [vmem:[%s221 + $0x360] sm:$0xf]
          %v2428 = vld [vmem:[%s221 + $0x364] sm:$0xf]
          %v2429 = vld [vmem:[%s221 + $0x368] sm:$0xf]
          %v2430 = vld [vmem:[%s221 + $0x36c] sm:$0xf]
          %v2431 = vld [vmem:[%s221 + $0x370] sm:$0xf]
          %v2432 = vld [vmem:[%s221 + $0x374] sm:$0xf]
          %v2433 = vld [vmem:[%s221 + $0x378] sm:$0xf]
          %v2434 = vld [vmem:[%s221 + $0x37c] sm:$0xf]
          %v2435 = vld [vmem:[%s221 + $0x380] sm:$0xf]
          %v2436 = vld [vmem:[%s221 + $0x384] sm:$0xf]
          %v2437 = vld [vmem:[%s221 + $0x388] sm:$0xf]
          %v2438 = vld [vmem:[%s221 + $0x38c] sm:$0xf]
          %v2439 = vld [vmem:[%s221 + $0x390] sm:$0xf]
          %v2440 = vld [vmem:[%s221 + $0x394] sm:$0xf]
          %v2441 = vld [vmem:[%s221 + $0x398] sm:$0xf]
          %v2442 = vld [vmem:[%s221 + $0x39c] sm:$0xf]
          %v2443 = vld [vmem:[%s221 + $0x3a0] sm:$0xf]
          %v2444 = vld [vmem:[%s221 + $0x3a4] sm:$0xf]
          %v2445 = vld [vmem:[%s221 + $0x3a8] sm:$0xf]
          %v2446 = vld [vmem:[%s221 + $0x3ac] sm:$0xf]
          %v2447 = vld [vmem:[%s221 + $0x3b0] sm:$0xf]
          %v2448 = vld [vmem:[%s221 + $0x3b4] sm:$0xf]
          %v2449 = vld [vmem:[%s221 + $0x3b8] sm:$0xf]
          %v2450 = vld [vmem:[%s221 + $0x3bc] sm:$0xf]
          %v2451 = vld [vmem:[%s221 + $0x3c0] sm:$0xf]
          %v2452 = vld [vmem:[%s221 + $0x3c4] sm:$0xf]
          %v2453 = vld [vmem:[%s221 + $0x3c8] sm:$0xf]
          %v2454 = vld [vmem:[%s221 + $0x3cc] sm:$0xf]
          %v2455 = vld [vmem:[%s221 + $0x3d0] sm:$0xf]
          %v2456 = vld [vmem:[%s221 + $0x3d4] sm:$0xf]
          %v2457 = vld [vmem:[%s221 + $0x3d8] sm:$0xf]
          %v2458 = vld [vmem:[%s221 + $0x3dc] sm:$0xf]
          %v2459 = vld [vmem:[%s221 + $0x3e0] sm:$0xf]
          %v2460 = vld [vmem:[%s221 + $0x3e4] sm:$0xf]
          %v2461 = vld [vmem:[%s221 + $0x3e8] sm:$0xf]
          %v2462 = vld [vmem:[%s221 + $0x3ec] sm:$0xf]
          %v2463 = vld [vmem:[%s221 + $0x3f0] sm:$0xf]
          %v2464 = vld [vmem:[%s221 + $0x3f4] sm:$0xf]
          %v2465 = vld [vmem:[%s221 + $0x3f8] sm:$0xf]
          %v2466 = vld [vmem:[%s221 + $0x3fc] sm:$0xf]
          %v2723 = vunpack.c.l.b16 %v2211
          %v2724 = vunpack.c.l.b16 %v2212
          %v2725 = vunpack.c.l.b16 %v2213
          %v2726 = vunpack.c.l.b16 %v2214
          %v2727 = vunpack.c.l.b16 %v2215
          %v2728 = vunpack.c.l.b16 %v2216
          %v2729 = vunpack.c.l.b16 %v2217
          %v2730 = vunpack.c.l.b16 %v2218
          %v2731 = vunpack.c.l.b16 %v2219
          %v2732 = vunpack.c.l.b16 %v2220
          %v2733 = vunpack.c.l.b16 %v2221
          %v2734 = vunpack.c.l.b16 %v2222
          %v2735 = vunpack.c.l.b16 %v2223
          %v2736 = vunpack.c.l.b16 %v2224
          %v2737 = vunpack.c.l.b16 %v2225
          %v2738 = vunpack.c.l.b16 %v2226
          %v2739 = vunpack.c.l.b16 %v2227
          %v2740 = vunpack.c.l.b16 %v2228
          %v2741 = vunpack.c.l.b16 %v2229
          %v2742 = vunpack.c.l.b16 %v2230
          %v2743 = vunpack.c.l.b16 %v2231
          %v2744 = vunpack.c.l.b16 %v2232
          %v2745 = vunpack.c.l.b16 %v2233
          %v2746 = vunpack.c.l.b16 %v2234
          %v2747 = vunpack.c.l.b16 %v2235
          %v2748 = vunpack.c.l.b16 %v2236
          %v2749 = vunpack.c.l.b16 %v2237
          %v2750 = vunpack.c.l.b16 %v2238
          %v2751 = vunpack.c.l.b16 %v2239
          %v2752 = vunpack.c.l.b16 %v2240
          %v2753 = vunpack.c.l.b16 %v2241
          %v2754 = vunpack.c.l.b16 %v2242
          %v2755 = vunpack.c.l.b16 %v2243
          %v2756 = vunpack.c.l.b16 %v2244
          %v2757 = vunpack.c.l.b16 %v2245
          %v2758 = vunpack.c.l.b16 %v2246
          %v2759 = vunpack.c.l.b16 %v2247
          %v2760 = vunpack.c.l.b16 %v2248
          %v2761 = vunpack.c.l.b16 %v2249
          %v2762 = vunpack.c.l.b16 %v2250
          %v2763 = vunpack.c.l.b16 %v2251
          %v2764 = vunpack.c.l.b16 %v2252
          %v2765 = vunpack.c.l.b16 %v2253
          %v2766 = vunpack.c.l.b16 %v2254
          %v2767 = vunpack.c.l.b16 %v2255
          %v2768 = vunpack.c.l.b16 %v2256
          %v2769 = vunpack.c.l.b16 %v2257
          %v2770 = vunpack.c.l.b16 %v2258
          %v2771 = vunpack.c.l.b16 %v2259
          %v2772 = vunpack.c.l.b16 %v2260
          %v2773 = vunpack.c.l.b16 %v2261
          %v2774 = vunpack.c.l.b16 %v2262
          %v2775 = vunpack.c.l.b16 %v2263
          %v2776 = vunpack.c.l.b16 %v2264
          %v2777 = vunpack.c.l.b16 %v2265
          %v2778 = vunpack.c.l.b16 %v2266
          %v2779 = vunpack.c.l.b16 %v2267
          %v2780 = vunpack.c.l.b16 %v2268
          %v2781 = vunpack.c.l.b16 %v2269
          %v2782 = vunpack.c.l.b16 %v2270
          %v2783 = vunpack.c.l.b16 %v2271
          %v2784 = vunpack.c.l.b16 %v2272
          %v2785 = vunpack.c.l.b16 %v2273
          %v2786 = vunpack.c.l.b16 %v2274
          %v2787 = vunpack.c.l.b16 %v2275
          %v2788 = vunpack.c.l.b16 %v2276
          %v2789 = vunpack.c.l.b16 %v2277
          %v2790 = vunpack.c.l.b16 %v2278
          %v2791 = vunpack.c.l.b16 %v2279
          %v2792 = vunpack.c.l.b16 %v2280
          %v2793 = vunpack.c.l.b16 %v2281
          %v2794 = vunpack.c.l.b16 %v2282
          %v2795 = vunpack.c.l.b16 %v2283
          %v2796 = vunpack.c.l.b16 %v2284
          %v2797 = vunpack.c.l.b16 %v2285
          %v2798 = vunpack.c.l.b16 %v2286
          %v2799 = vunpack.c.l.b16 %v2287
          %v2800 = vunpack.c.l.b16 %v2288
          %v2801 = vunpack.c.l.b16 %v2289
          %v2802 = vunpack.c.l.b16 %v2290
          %v2803 = vunpack.c.l.b16 %v2291
          %v2804 = vunpack.c.l.b16 %v2292
          %v2805 = vunpack.c.l.b16 %v2293
          %v2806 = vunpack.c.l.b16 %v2294
          %v2807 = vunpack.c.l.b16 %v2295
          %v2808 = vunpack.c.l.b16 %v2296
          %v2809 = vunpack.c.l.b16 %v2297
          %v2810 = vunpack.c.l.b16 %v2298
          %v2811 = vunpack.c.l.b16 %v2299
          %v2812 = vunpack.c.l.b16 %v2300
          %v2813 = vunpack.c.l.b16 %v2301
          %v2814 = vunpack.c.l.b16 %v2302
          %v2815 = vunpack.c.l.b16 %v2303
          %v2816 = vunpack.c.l.b16 %v2304
          %v2817 = vunpack.c.l.b16 %v2305
          %v2818 = vunpack.c.l.b16 %v2306
          %v2819 = vunpack.c.l.b16 %v2307
          %v2820 = vunpack.c.l.b16 %v2308
          %v2821 = vunpack.c.l.b16 %v2309
          %v2822 = vunpack.c.l.b16 %v2310
          %v2823 = vunpack.c.l.b16 %v2311
          %v2824 = vunpack.c.l.b16 %v2312
          %v2825 = vunpack.c.l.b16 %v2313
          %v2826 = vunpack.c.l.b16 %v2314
          %v2827 = vunpack.c.l.b16 %v2315
          %v2828 = vunpack.c.l.b16 %v2316
          %v2829 = vunpack.c.l.b16 %v2317
          %v2830 = vunpack.c.l.b16 %v2318
          %v2831 = vunpack.c.l.b16 %v2319
          %v2832 = vunpack.c.l.b16 %v2320
          %v2833 = vunpack.c.l.b16 %v2321
          %v2834 = vunpack.c.l.b16 %v2322
          %v2835 = vunpack.c.l.b16 %v2323
          %v2836 = vunpack.c.l.b16 %v2324
          %v2837 = vunpack.c.l.b16 %v2325
          %v2838 = vunpack.c.l.b16 %v2326
          %v2839 = vunpack.c.l.b16 %v2327
          %v2840 = vunpack.c.l.b16 %v2328
          %v2841 = vunpack.c.l.b16 %v2329
          %v2842 = vunpack.c.l.b16 %v2330
          %v2843 = vunpack.c.l.b16 %v2331
          %v2844 = vunpack.c.l.b16 %v2332
          %v2845 = vunpack.c.l.b16 %v2333
          %v2846 = vunpack.c.l.b16 %v2334
          %v2847 = vunpack.c.l.b16 %v2335
          %v2848 = vunpack.c.l.b16 %v2336
          %v2849 = vunpack.c.l.b16 %v2337
          %v2850 = vunpack.c.l.b16 %v2338
          %v2851 = vunpack.c.l.b16 %v2339
          %v2852 = vunpack.c.l.b16 %v2340
          %v2853 = vunpack.c.l.b16 %v2341
          %v2854 = vunpack.c.l.b16 %v2342
          %v2855 = vunpack.c.l.b16 %v2343
          %v2856 = vunpack.c.l.b16 %v2344
          %v2857 = vunpack.c.l.b16 %v2345
          %v2858 = vunpack.c.l.b16 %v2346
          %v2859 = vunpack.c.l.b16 %v2347
          %v2860 = vunpack.c.l.b16 %v2348
          %v2861 = vunpack.c.l.b16 %v2349
          %v2862 = vunpack.c.l.b16 %v2350
          %v2863 = vunpack.c.l.b16 %v2351
          %v2864 = vunpack.c.l.b16 %v2352
          %v2865 = vunpack.c.l.b16 %v2353
          %v2866 = vunpack.c.l.b16 %v2354
          %v2867 = vunpack.c.l.b16 %v2355
          %v2868 = vunpack.c.l.b16 %v2356
          %v2869 = vunpack.c.l.b16 %v2357
          %v2870 = vunpack.c.l.b16 %v2358
          %v2871 = vunpack.c.l.b16 %v2359
          %v2872 = vunpack.c.l.b16 %v2360
          %v2873 = vunpack.c.l.b16 %v2361
          %v2874 = vunpack.c.l.b16 %v2362
          %v2875 = vunpack.c.l.b16 %v2363
          %v2876 = vunpack.c.l.b16 %v2364
          %v2877 = vunpack.c.l.b16 %v2365
          %v2878 = vunpack.c.l.b16 %v2366
          %v2879 = vunpack.c.l.b16 %v2367
          %v2880 = vunpack.c.l.b16 %v2368
          %v2881 = vunpack.c.l.b16 %v2369
          %v2882 = vunpack.c.l.b16 %v2370
          %v2883 = vunpack.c.l.b16 %v2371
          %v2884 = vunpack.c.l.b16 %v2372
          %v2885 = vunpack.c.l.b16 %v2373
          %v2886 = vunpack.c.l.b16 %v2374
          %v2887 = vunpack.c.l.b16 %v2375
          %v2888 = vunpack.c.l.b16 %v2376
          %v2889 = vunpack.c.l.b16 %v2377
          %v2890 = vunpack.c.l.b16 %v2378
          %v2891 = vunpack.c.l.b16 %v2379
          %v2892 = vunpack.c.l.b16 %v2380
          %v2893 = vunpack.c.l.b16 %v2381
          %v2894 = vunpack.c.l.b16 %v2382
          %v2895 = vunpack.c.l.b16 %v2383
          %v2896 = vunpack.c.l.b16 %v2384
          %v2897 = vunpack.c.l.b16 %v2385
          %v2898 = vunpack.c.l.b16 %v2386
          %v2899 = vunpack.c.l.b16 %v2387
          %v2900 = vunpack.c.l.b16 %v2388
          %v2901 = vunpack.c.l.b16 %v2389
          %v2902 = vunpack.c.l.b16 %v2390
          %v2903 = vunpack.c.l.b16 %v2391
          %v2904 = vunpack.c.l.b16 %v2392
          %v2905 = vunpack.c.l.b16 %v2393
          %v2906 = vunpack.c.l.b16 %v2394
          %v2907 = vunpack.c.l.b16 %v2395
          %v2908 = vunpack.c.l.b16 %v2396
          %v2909 = vunpack.c.l.b16 %v2397
          %v2910 = vunpack.c.l.b16 %v2398
          %v2911 = vunpack.c.l.b16 %v2399
          %v2912 = vunpack.c.l.b16 %v2400
          %v2913 = vunpack.c.l.b16 %v2401
          %v2914 = vunpack.c.l.b16 %v2402
          %v2915 = vunpack.c.l.b16 %v2403
          %v2916 = vunpack.c.l.b16 %v2404
          %v2917 = vunpack.c.l.b16 %v2405
          %v2918 = vunpack.c.l.b16 %v2406
          %v2919 = vunpack.c.l.b16 %v2407
          %v2920 = vunpack.c.l.b16 %v2408
          %v2921 = vunpack.c.l.b16 %v2409
          %v2922 = vunpack.c.l.b16 %v2410
          %v2923 = vunpack.c.l.b16 %v2411
          %v2924 = vunpack.c.l.b16 %v2412
          %v2925 = vunpack.c.l.b16 %v2413
          %v2926 = vunpack.c.l.b16 %v2414
          %v2927 = vunpack.c.l.b16 %v2415
          %v2928 = vunpack.c.l.b16 %v2416
          %v2929 = vunpack.c.l.b16 %v2417
          %v2930 = vunpack.c.l.b16 %v2418
          %v2931 = vunpack.c.l.b16 %v2419
          %v2932 = vunpack.c.l.b16 %v2420
          %v2933 = vunpack.c.l.b16 %v2421
          %v2934 = vunpack.c.l.b16 %v2422
          %v2935 = vunpack.c.l.b16 %v2423
          %v2936 = vunpack.c.l.b16 %v2424
          %v2937 = vunpack.c.l.b16 %v2425
          %v2938 = vunpack.c.l.b16 %v2426
          %v2939 = vunpack.c.l.b16 %v2427
          %v2940 = vunpack.c.l.b16 %v2428
          %v2941 = vunpack.c.l.b16 %v2429
          %v2942 = vunpack.c.l.b16 %v2430
          %v2943 = vunpack.c.l.b16 %v2431
          %v2944 = vunpack.c.l.b16 %v2432
          %v2945 = vunpack.c.l.b16 %v2433
          %v2946 = vunpack.c.l.b16 %v2434
          %v2947 = vunpack.c.l.b16 %v2435
          %v2948 = vunpack.c.l.b16 %v2436
          %v2949 = vunpack.c.l.b16 %v2437
          %v2950 = vunpack.c.l.b16 %v2438
          %v2951 = vunpack.c.l.b16 %v2439
          %v2952 = vunpack.c.l.b16 %v2440
          %v2953 = vunpack.c.l.b16 %v2441
          %v2954 = vunpack.c.l.b16 %v2442
          %v2955 = vunpack.c.l.b16 %v2443
          %v2956 = vunpack.c.l.b16 %v2444
          %v2957 = vunpack.c.l.b16 %v2445
          %v2958 = vunpack.c.l.b16 %v2446
          %v2959 = vunpack.c.l.b16 %v2447
          %v2960 = vunpack.c.l.b16 %v2448
          %v2961 = vunpack.c.l.b16 %v2449
          %v2962 = vunpack.c.l.b16 %v2450
          %v2963 = vunpack.c.l.b16 %v2451
          %v2964 = vunpack.c.l.b16 %v2452
          %v2965 = vunpack.c.l.b16 %v2453
          %v2966 = vunpack.c.l.b16 %v2454
          %v2967 = vunpack.c.l.b16 %v2455
          %v2968 = vunpack.c.l.b16 %v2456
          %v2969 = vunpack.c.l.b16 %v2457
          %v2970 = vunpack.c.l.b16 %v2458
          %v2971 = vunpack.c.l.b16 %v2459
          %v2972 = vunpack.c.l.b16 %v2460
          %v2973 = vunpack.c.l.b16 %v2461
          %v2974 = vunpack.c.l.b16 %v2462
          %v2975 = vunpack.c.l.b16 %v2463
          %v2976 = vunpack.c.l.b16 %v2464
          %v2977 = vunpack.c.l.b16 %v2465
          %v2978 = vunpack.c.l.b16 %v2466
          %v2979 = vpack.c.b16 %v2724, %v2723
          %v2980 = vpack.c.b16 %v2726, %v2725
          %v2981 = vpack.c.b16 %v2728, %v2727
          %v2982 = vpack.c.b16 %v2730, %v2729
          %v2983 = vpack.c.b16 %v2732, %v2731
          %v2984 = vpack.c.b16 %v2734, %v2733
          %v2985 = vpack.c.b16 %v2736, %v2735
          %v2986 = vpack.c.b16 %v2738, %v2737
          %v2987 = vpack.c.b16 %v2740, %v2739
          %v2988 = vpack.c.b16 %v2742, %v2741
          %v2989 = vpack.c.b16 %v2744, %v2743
          %v2990 = vpack.c.b16 %v2746, %v2745
          %v2991 = vpack.c.b16 %v2748, %v2747
          %v2992 = vpack.c.b16 %v2750, %v2749
          %v2993 = vpack.c.b16 %v2752, %v2751
          %v2994 = vpack.c.b16 %v2754, %v2753
          %v2995 = vpack.c.b16 %v2756, %v2755
          %v2996 = vpack.c.b16 %v2758, %v2757
          %v2997 = vpack.c.b16 %v2760, %v2759
          %v2998 = vpack.c.b16 %v2762, %v2761
          %v2999 = vpack.c.b16 %v2764, %v2763
          %v3000 = vpack.c.b16 %v2766, %v2765
          %v3001 = vpack.c.b16 %v2768, %v2767
          %v3002 = vpack.c.b16 %v2770, %v2769
          %v3003 = vpack.c.b16 %v2772, %v2771
          %v3004 = vpack.c.b16 %v2774, %v2773
          %v3005 = vpack.c.b16 %v2776, %v2775
          %v3006 = vpack.c.b16 %v2778, %v2777
          %v3007 = vpack.c.b16 %v2780, %v2779
          %v3008 = vpack.c.b16 %v2782, %v2781
          %v3009 = vpack.c.b16 %v2784, %v2783
          %v3010 = vpack.c.b16 %v2786, %v2785
          %v3011 = vpack.c.b16 %v2788, %v2787
          %v3012 = vpack.c.b16 %v2790, %v2789
          %v3013 = vpack.c.b16 %v2792, %v2791
          %v3014 = vpack.c.b16 %v2794, %v2793
          %v3015 = vpack.c.b16 %v2796, %v2795
          %v3016 = vpack.c.b16 %v2798, %v2797
          %v3017 = vpack.c.b16 %v2800, %v2799
          %v3018 = vpack.c.b16 %v2802, %v2801
          %v3019 = vpack.c.b16 %v2804, %v2803
          %v3020 = vpack.c.b16 %v2806, %v2805
          %v3021 = vpack.c.b16 %v2808, %v2807
          %v3022 = vpack.c.b16 %v2810, %v2809
          %v3023 = vpack.c.b16 %v2812, %v2811
          %v3024 = vpack.c.b16 %v2814, %v2813
          %v3025 = vpack.c.b16 %v2816, %v2815
          %v3026 = vpack.c.b16 %v2818, %v2817
          %v3027 = vpack.c.b16 %v2820, %v2819
          %v3028 = vpack.c.b16 %v2822, %v2821
          %v3029 = vpack.c.b16 %v2824, %v2823
          %v3030 = vpack.c.b16 %v2826, %v2825
          %v3031 = vpack.c.b16 %v2828, %v2827
          %v3032 = vpack.c.b16 %v2830, %v2829
          %v3033 = vpack.c.b16 %v2832, %v2831
          %v3034 = vpack.c.b16 %v2834, %v2833
          %v3035 = vpack.c.b16 %v2836, %v2835
          %v3036 = vpack.c.b16 %v2838, %v2837
          %v3037 = vpack.c.b16 %v2840, %v2839
          %v3038 = vpack.c.b16 %v2842, %v2841
          %v3039 = vpack.c.b16 %v2844, %v2843
          %v3040 = vpack.c.b16 %v2846, %v2845
          %v3041 = vpack.c.b16 %v2848, %v2847
          %v3042 = vpack.c.b16 %v2850, %v2849
          %v3043 = vpack.c.b16 %v2852, %v2851
          %v3044 = vpack.c.b16 %v2854, %v2853
          %v3045 = vpack.c.b16 %v2856, %v2855
          %v3046 = vpack.c.b16 %v2858, %v2857
          %v3047 = vpack.c.b16 %v2860, %v2859
          %v3048 = vpack.c.b16 %v2862, %v2861
          %v3049 = vpack.c.b16 %v2864, %v2863
          %v3050 = vpack.c.b16 %v2866, %v2865
          %v3051 = vpack.c.b16 %v2868, %v2867
          %v3052 = vpack.c.b16 %v2870, %v2869
          %v3053 = vpack.c.b16 %v2872, %v2871
          %v3054 = vpack.c.b16 %v2874, %v2873
          %v3055 = vpack.c.b16 %v2876, %v2875
          %v3056 = vpack.c.b16 %v2878, %v2877
          %v3057 = vpack.c.b16 %v2880, %v2879
          %v3058 = vpack.c.b16 %v2882, %v2881
          %v3059 = vpack.c.b16 %v2884, %v2883
          %v3060 = vpack.c.b16 %v2886, %v2885
          %v3061 = vpack.c.b16 %v2888, %v2887
          %v3062 = vpack.c.b16 %v2890, %v2889
          %v3063 = vpack.c.b16 %v2892, %v2891
          %v3064 = vpack.c.b16 %v2894, %v2893
          %v3065 = vpack.c.b16 %v2896, %v2895
          %v3066 = vpack.c.b16 %v2898, %v2897
          %v3067 = vpack.c.b16 %v2900, %v2899
          %v3068 = vpack.c.b16 %v2902, %v2901
          %v3069 = vpack.c.b16 %v2904, %v2903
          %v3070 = vpack.c.b16 %v2906, %v2905
          %v3071 = vpack.c.b16 %v2908, %v2907
          %v3072 = vpack.c.b16 %v2910, %v2909
          %v3073 = vpack.c.b16 %v2912, %v2911
          %v3074 = vpack.c.b16 %v2914, %v2913
          %v3075 = vpack.c.b16 %v2916, %v2915
          %v3076 = vpack.c.b16 %v2918, %v2917
          %v3077 = vpack.c.b16 %v2920, %v2919
          %v3078 = vpack.c.b16 %v2922, %v2921
          %v3079 = vpack.c.b16 %v2924, %v2923
          %v3080 = vpack.c.b16 %v2926, %v2925
          %v3081 = vpack.c.b16 %v2928, %v2927
          %v3082 = vpack.c.b16 %v2930, %v2929
          %v3083 = vpack.c.b16 %v2932, %v2931
          %v3084 = vpack.c.b16 %v2934, %v2933
          %v3085 = vpack.c.b16 %v2936, %v2935
          %v3086 = vpack.c.b16 %v2938, %v2937
          %v3087 = vpack.c.b16 %v2940, %v2939
          %v3088 = vpack.c.b16 %v2942, %v2941
          %v3089 = vpack.c.b16 %v2944, %v2943
          %v3090 = vpack.c.b16 %v2946, %v2945
          %v3091 = vpack.c.b16 %v2948, %v2947
          %v3092 = vpack.c.b16 %v2950, %v2949
          %v3093 = vpack.c.b16 %v2952, %v2951
          %v3094 = vpack.c.b16 %v2954, %v2953
          %v3095 = vpack.c.b16 %v2956, %v2955
          %v3096 = vpack.c.b16 %v2958, %v2957
          %v3097 = vpack.c.b16 %v2960, %v2959
          %v3098 = vpack.c.b16 %v2962, %v2961
          %v3099 = vpack.c.b16 %v2964, %v2963
          %v3100 = vpack.c.b16 %v2966, %v2965
          %v3101 = vpack.c.b16 %v2968, %v2967
          %v3102 = vpack.c.b16 %v2970, %v2969
          %v3103 = vpack.c.b16 %v2972, %v2971
          %v3104 = vpack.c.b16 %v2974, %v2973
          %v3105 = vpack.c.b16 %v2976, %v2975
          %v3106 = vpack.c.b16 %v2978, %v2977
          %3235 = vmatpush.bf16.msra.mxu0 %v2986
          %3236 = vmatpush.bf16.msra.mxu0 %v2985
          %3237 = vmatpush.bf16.msra.mxu0 %v2984
          %3238 = vmatpush.bf16.msra.mxu0 %v2983
          %3239 = vmatpush.bf16.msra.mxu0 %v2982
          %3240 = vmatpush.bf16.msra.mxu0 %v2981
          %3241 = vmatpush.bf16.msra.mxu0 %v2980
          %3242 = vmatpush.bf16.msra.mxu0 %v2979
          %3243 = vmatmul.bf16.gmra.mxu0 %v1923
          %v3244 = vpop.f32.mrf.mxu0
          %v3245 = vadd.f32 0.0, %v3244
          %v3246 = vpop.f32.mrf.mxu0
          %v3247 = vadd.f32 0.0, %v3246
          %3248 = vmatmul.bf16.gmra.mxu0 %v1939
          %v3249 = vpop.f32.mrf.mxu0
          %v3250 = vadd.f32 0.0, %v3249
          %v3251 = vpop.f32.mrf.mxu0
          %v3252 = vadd.f32 0.0, %v3251
          %3253 = vmatmul.bf16.gmra.mxu0 %v1955
          %v3254 = vpop.f32.mrf.mxu0
          %v3255 = vadd.f32 0.0, %v3254
          %v3256 = vpop.f32.mrf.mxu0
          %v3257 = vadd.f32 0.0, %v3256
          %3258 = vmatmul.bf16.gmra.mxu0 %v1971
          %v3259 = vpop.f32.mrf.mxu0
          %v3260 = vadd.f32 0.0, %v3259
          %v3261 = vpop.f32.mrf.mxu0
          %v3262 = vadd.f32 0.0, %v3261
          %3263 = vmatmul.bf16.gmra.mxu0 %v1987
          %v3264 = vpop.f32.mrf.mxu0
          %v3265 = vadd.f32 0.0, %v3264
          %v3266 = vpop.f32.mrf.mxu0
          %v3267 = vadd.f32 0.0, %v3266
          %3268 = vmatmul.bf16.gmra.mxu0 %v2003
          %v3269 = vpop.f32.mrf.mxu0
          %v3270 = vadd.f32 0.0, %v3269
          %v3271 = vpop.f32.mrf.mxu0
          %v3272 = vadd.f32 0.0, %v3271
          %3273 = vmatmul.bf16.gmra.mxu0 %v2019
          %v3274 = vpop.f32.mrf.mxu0
          %v3275 = vadd.f32 0.0, %v3274
          %v3276 = vpop.f32.mrf.mxu0
          %v3277 = vadd.f32 0.0, %v3276
          %3278 = vmatmul.bf16.gmra.mxu0 %v2035
          %v3279 = vpop.f32.mrf.mxu0
          %v3280 = vadd.f32 0.0, %v3279
          %v3281 = vpop.f32.mrf.mxu0
          %v3282 = vadd.f32 0.0, %v3281
          %3283 = vmatmul.bf16.gmra.mxu0 %v2051
          %v3284 = vpop.f32.mrf.mxu0
          %v3285 = vadd.f32 0.0, %v3284
          %v3286 = vpop.f32.mrf.mxu0
          %v3287 = vadd.f32 0.0, %v3286
          %3288 = vmatmul.bf16.gmra.mxu0 %v2067
          %v3289 = vpop.f32.mrf.mxu0
          %v3290 = vadd.f32 0.0, %v3289
          %v3291 = vpop.f32.mrf.mxu0
          %v3292 = vadd.f32 0.0, %v3291
          %3293 = vmatmul.bf16.gmra.mxu0 %v2083
          %v3294 = vpop.f32.mrf.mxu0
          %v3295 = vadd.f32 0.0, %v3294
          %v3296 = vpop.f32.mrf.mxu0
          %v3297 = vadd.f32 0.0, %v3296
          %3298 = vmatmul.bf16.gmra.mxu0 %v2099
          %v3299 = vpop.f32.mrf.mxu0
          %v3300 = vadd.f32 0.0, %v3299
          %v3301 = vpop.f32.mrf.mxu0
          %v3302 = vadd.f32 0.0, %v3301
          %3303 = vmatmul.bf16.gmra.mxu0 %v2115
          %v3304 = vpop.f32.mrf.mxu0
          %v3305 = vadd.f32 0.0, %v3304
          %v3306 = vpop.f32.mrf.mxu0
          %v3307 = vadd.f32 0.0, %v3306
          %3308 = vmatmul.bf16.gmra.mxu0 %v2131
          %v3309 = vpop.f32.mrf.mxu0
          %v3310 = vadd.f32 0.0, %v3309
          %v3311 = vpop.f32.mrf.mxu0
          %v3312 = vadd.f32 0.0, %v3311
          %3313 = vmatmul.bf16.gmra.mxu0 %v2147
          %v3314 = vpop.f32.mrf.mxu0
          %v3315 = vadd.f32 0.0, %v3314
          %v3316 = vpop.f32.mrf.mxu0
          %v3317 = vadd.f32 0.0, %v3316
          %3318 = vmatmul.bf16.gmra.mxu0 %v2163
          %v3319 = vpop.f32.mrf.mxu0
          %v3320 = vadd.f32 0.0, %v3319
          %v3321 = vpop.f32.mrf.mxu0
          %v3322 = vadd.f32 0.0, %v3321
          %3323 = vdwg.mxu0
          %3324 = vmatpush.bf16.msra.mxu0 %v2994
          %3325 = vmatpush.bf16.msra.mxu0 %v2993
          %3326 = vmatpush.bf16.msra.mxu0 %v2992
          %3327 = vmatpush.bf16.msra.mxu0 %v2991
          %3328 = vmatpush.bf16.msra.mxu0 %v2990
          %3329 = vmatpush.bf16.msra.mxu0 %v2989
          %3330 = vmatpush.bf16.msra.mxu0 %v2988
          %3331 = vmatpush.bf16.msra.mxu0 %v2987
          %3332 = vmatmul.bf16.gmra.mxu0 %v1924
          %v3333 = vpop.f32.mrf.mxu0
          %v3334 = vadd.f32 %v3245, %v3333
          %v3335 = vpop.f32.mrf.mxu0
          %v3336 = vadd.f32 %v3247, %v3335
          %3337 = vmatmul.bf16.gmra.mxu0 %v1940
          %v3338 = vpop.f32.mrf.mxu0
          %v3339 = vadd.f32 %v3250, %v3338
          %v3340 = vpop.f32.mrf.mxu0
          %v3341 = vadd.f32 %v3252, %v3340
          %3342 = vmatmul.bf16.gmra.mxu0 %v1956
          %v3343 = vpop.f32.mrf.mxu0
          %v3344 = vadd.f32 %v3255, %v3343
          %v3345 = vpop.f32.mrf.mxu0
          %v3346 = vadd.f32 %v3257, %v3345
          %3347 = vmatmul.bf16.gmra.mxu0 %v1972
          %v3348 = vpop.f32.mrf.mxu0
          %v3349 = vadd.f32 %v3260, %v3348
          %v3350 = vpop.f32.mrf.mxu0
          %v3351 = vadd.f32 %v3262, %v3350
          %3352 = vmatmul.bf16.gmra.mxu0 %v1988
          %v3353 = vpop.f32.mrf.mxu0
          %v3354 = vadd.f32 %v3265, %v3353
          %v3355 = vpop.f32.mrf.mxu0
          %v3356 = vadd.f32 %v3267, %v3355
          %3357 = vmatmul.bf16.gmra.mxu0 %v2004
          %v3358 = vpop.f32.mrf.mxu0
          %v3359 = vadd.f32 %v3270, %v3358
          %v3360 = vpop.f32.mrf.mxu0
          %v3361 = vadd.f32 %v3272, %v3360
          %3362 = vmatmul.bf16.gmra.mxu0 %v2020
          %v3363 = vpop.f32.mrf.mxu0
          %v3364 = vadd.f32 %v3275, %v3363
          %v3365 = vpop.f32.mrf.mxu0
          %v3366 = vadd.f32 %v3277, %v3365
          %3367 = vmatmul.bf16.gmra.mxu0 %v2036
          %v3368 = vpop.f32.mrf.mxu0
          %v3369 = vadd.f32 %v3280, %v3368
          %v3370 = vpop.f32.mrf.mxu0
          %v3371 = vadd.f32 %v3282, %v3370
          %3372 = vmatmul.bf16.gmra.mxu0 %v2052
          %v3373 = vpop.f32.mrf.mxu0
          %v3374 = vadd.f32 %v3285, %v3373
          %v3375 = vpop.f32.mrf.mxu0
          %v3376 = vadd.f32 %v3287, %v3375
          %3377 = vmatmul.bf16.gmra.mxu0 %v2068
          %v3378 = vpop.f32.mrf.mxu0
          %v3379 = vadd.f32 %v3290, %v3378
          %v3380 = vpop.f32.mrf.mxu0
          %v3381 = vadd.f32 %v3292, %v3380
          %3382 = vmatmul.bf16.gmra.mxu0 %v2084
          %v3383 = vpop.f32.mrf.mxu0
          %v3384 = vadd.f32 %v3295, %v3383
          %v3385 = vpop.f32.mrf.mxu0
          %v3386 = vadd.f32 %v3297, %v3385
          %3387 = vmatmul.bf16.gmra.mxu0 %v2100
          %v3388 = vpop.f32.mrf.mxu0
          %v3389 = vadd.f32 %v3300, %v3388
          %v3390 = vpop.f32.mrf.mxu0
          %v3391 = vadd.f32 %v3302, %v3390
          %3392 = vmatmul.bf16.gmra.mxu0 %v2116
          %v3393 = vpop.f32.mrf.mxu0
          %v3394 = vadd.f32 %v3305, %v3393
          %v3395 = vpop.f32.mrf.mxu0
          %v3396 = vadd.f32 %v3307, %v3395
          %3397 = vmatmul.bf16.gmra.mxu0 %v2132
          %v3398 = vpop.f32.mrf.mxu0
          %v3399 = vadd.f32 %v3310, %v3398
          %v3400 = vpop.f32.mrf.mxu0
          %v3401 = vadd.f32 %v3312, %v3400
          %3402 = vmatmul.bf16.gmra.mxu0 %v2148
          %v3403 = vpop.f32.mrf.mxu0
          %v3404 = vadd.f32 %v3315, %v3403
          %v3405 = vpop.f32.mrf.mxu0
          %v3406 = vadd.f32 %v3317, %v3405
          %3407 = vmatmul.bf16.gmra.mxu0 %v2164
          %v3408 = vpop.f32.mrf.mxu0
          %v3409 = vadd.f32 %v3320, %v3408
          %v3410 = vpop.f32.mrf.mxu0
          %v3411 = vadd.f32 %v3322, %v3410
          %3412 = vdwg.mxu0
          %3413 = vmatpush.bf16.msra.mxu0 %v3002
          %3414 = vmatpush.bf16.msra.mxu0 %v3001
          %3415 = vmatpush.bf16.msra.mxu0 %v3000
          %3416 = vmatpush.bf16.msra.mxu0 %v2999
          %3417 = vmatpush.bf16.msra.mxu0 %v2998
          %3418 = vmatpush.bf16.msra.mxu0 %v2997
          %3419 = vmatpush.bf16.msra.mxu0 %v2996
          %3420 = vmatpush.bf16.msra.mxu0 %v2995
          %3421 = vmatmul.bf16.gmra.mxu0 %v1925
          %v3422 = vpop.f32.mrf.mxu0
          %v3423 = vadd.f32 %v3334, %v3422
          %v3424 = vpop.f32.mrf.mxu0
          %v3425 = vadd.f32 %v3336, %v3424
          %3426 = vmatmul.bf16.gmra.mxu0 %v1941
          %v3427 = vpop.f32.mrf.mxu0
          %v3428 = vadd.f32 %v3339, %v3427
          %v3429 = vpop.f32.mrf.mxu0
          %v3430 = vadd.f32 %v3341, %v3429
          %3431 = vmatmul.bf16.gmra.mxu0 %v1957
          %v3432 = vpop.f32.mrf.mxu0
          %v3433 = vadd.f32 %v3344, %v3432
          %v3434 = vpop.f32.mrf.mxu0
          %v3435 = vadd.f32 %v3346, %v3434
          %3436 = vmatmul.bf16.gmra.mxu0 %v1973
          %v3437 = vpop.f32.mrf.mxu0
          %v3438 = vadd.f32 %v3349, %v3437
          %v3439 = vpop.f32.mrf.mxu0
          %v3440 = vadd.f32 %v3351, %v3439
          %3441 = vmatmul.bf16.gmra.mxu0 %v1989
          %v3442 = vpop.f32.mrf.mxu0
          %v3443 = vadd.f32 %v3354, %v3442
          %v3444 = vpop.f32.mrf.mxu0
          %v3445 = vadd.f32 %v3356, %v3444
          %3446 = vmatmul.bf16.gmra.mxu0 %v2005
          %v3447 = vpop.f32.mrf.mxu0
          %v3448 = vadd.f32 %v3359, %v3447
          %v3449 = vpop.f32.mrf.mxu0
          %v3450 = vadd.f32 %v3361, %v3449
          %3451 = vmatmul.bf16.gmra.mxu0 %v2021
          %v3452 = vpop.f32.mrf.mxu0
          %v3453 = vadd.f32 %v3364, %v3452
          %v3454 = vpop.f32.mrf.mxu0
          %v3455 = vadd.f32 %v3366, %v3454
          %3456 = vmatmul.bf16.gmra.mxu0 %v2037
          %v3457 = vpop.f32.mrf.mxu0
          %v3458 = vadd.f32 %v3369, %v3457
          %v3459 = vpop.f32.mrf.mxu0
          %v3460 = vadd.f32 %v3371, %v3459
          %3461 = vmatmul.bf16.gmra.mxu0 %v2053
          %v3462 = vpop.f32.mrf.mxu0
          %v3463 = vadd.f32 %v3374, %v3462
          %v3464 = vpop.f32.mrf.mxu0
          %v3465 = vadd.f32 %v3376, %v3464
          %3466 = vmatmul.bf16.gmra.mxu0 %v2069
          %v3467 = vpop.f32.mrf.mxu0
          %v3468 = vadd.f32 %v3379, %v3467
          %v3469 = vpop.f32.mrf.mxu0
          %v3470 = vadd.f32 %v3381, %v3469
          %3471 = vmatmul.bf16.gmra.mxu0 %v2085
          %v3472 = vpop.f32.mrf.mxu0
          %v3473 = vadd.f32 %v3384, %v3472
          %v3474 = vpop.f32.mrf.mxu0
          %v3475 = vadd.f32 %v3386, %v3474
          %3476 = vmatmul.bf16.gmra.mxu0 %v2101
          %v3477 = vpop.f32.mrf.mxu0
          %v3478 = vadd.f32 %v3389, %v3477
          %v3479 = vpop.f32.mrf.mxu0
          %v3480 = vadd.f32 %v3391, %v3479
          %3481 = vmatmul.bf16.gmra.mxu0 %v2117
          %v3482 = vpop.f32.mrf.mxu0
          %v3483 = vadd.f32 %v3394, %v3482
          %v3484 = vpop.f32.mrf.mxu0
          %v3485 = vadd.f32 %v3396, %v3484
          %3486 = vmatmul.bf16.gmra.mxu0 %v2133
          %v3487 = vpop.f32.mrf.mxu0
          %v3488 = vadd.f32 %v3399, %v3487
          %v3489 = vpop.f32.mrf.mxu0
          %v3490 = vadd.f32 %v3401, %v3489
          %3491 = vmatmul.bf16.gmra.mxu0 %v2149
          %v3492 = vpop.f32.mrf.mxu0
          %v3493 = vadd.f32 %v3404, %v3492
          %v3494 = vpop.f32.mrf.mxu0
          %v3495 = vadd.f32 %v3406, %v3494
          %3496 = vmatmul.bf16.gmra.mxu0 %v2165
          %v3497 = vpop.f32.mrf.mxu0
          %v3498 = vadd.f32 %v3409, %v3497
          %v3499 = vpop.f32.mrf.mxu0
          %v3500 = vadd.f32 %v3411, %v3499
          %3501 = vdwg.mxu0
          %3502 = vmatpush.bf16.msra.mxu0 %v3010
          %3503 = vmatpush.bf16.msra.mxu0 %v3009
          %3504 = vmatpush.bf16.msra.mxu0 %v3008
          %3505 = vmatpush.bf16.msra.mxu0 %v3007
          %3506 = vmatpush.bf16.msra.mxu0 %v3006
          %3507 = vmatpush.bf16.msra.mxu0 %v3005
          %3508 = vmatpush.bf16.msra.mxu0 %v3004
          %3509 = vmatpush.bf16.msra.mxu0 %v3003
          %3510 = vmatmul.bf16.gmra.mxu0 %v1926
          %v3511 = vpop.f32.mrf.mxu0
          %v3512 = vadd.f32 %v3423, %v3511
          %v3513 = vpop.f32.mrf.mxu0
          %v3514 = vadd.f32 %v3425, %v3513
          %3515 = vmatmul.bf16.gmra.mxu0 %v1942
          %v3516 = vpop.f32.mrf.mxu0
          %v3517 = vadd.f32 %v3428, %v3516
          %v3518 = vpop.f32.mrf.mxu0
          %v3519 = vadd.f32 %v3430, %v3518
          %3520 = vmatmul.bf16.gmra.mxu0 %v1958
          %v3521 = vpop.f32.mrf.mxu0
          %v3522 = vadd.f32 %v3433, %v3521
          %v3523 = vpop.f32.mrf.mxu0
          %v3524 = vadd.f32 %v3435, %v3523
          %3525 = vmatmul.bf16.gmra.mxu0 %v1974
          %v3526 = vpop.f32.mrf.mxu0
          %v3527 = vadd.f32 %v3438, %v3526
          %v3528 = vpop.f32.mrf.mxu0
          %v3529 = vadd.f32 %v3440, %v3528
          %3530 = vmatmul.bf16.gmra.mxu0 %v1990
          %v3531 = vpop.f32.mrf.mxu0
          %v3532 = vadd.f32 %v3443, %v3531
          %v3533 = vpop.f32.mrf.mxu0
          %v3534 = vadd.f32 %v3445, %v3533
          %3535 = vmatmul.bf16.gmra.mxu0 %v2006
          %v3536 = vpop.f32.mrf.mxu0
          %v3537 = vadd.f32 %v3448, %v3536
          %v3538 = vpop.f32.mrf.mxu0
          %v3539 = vadd.f32 %v3450, %v3538
          %3540 = vmatmul.bf16.gmra.mxu0 %v2022
          %v3541 = vpop.f32.mrf.mxu0
          %v3542 = vadd.f32 %v3453, %v3541
          %v3543 = vpop.f32.mrf.mxu0
          %v3544 = vadd.f32 %v3455, %v3543
          %3545 = vmatmul.bf16.gmra.mxu0 %v2038
          %v3546 = vpop.f32.mrf.mxu0
          %v3547 = vadd.f32 %v3458, %v3546
          %v3548 = vpop.f32.mrf.mxu0
          %v3549 = vadd.f32 %v3460, %v3548
          %3550 = vmatmul.bf16.gmra.mxu0 %v2054
          %v3551 = vpop.f32.mrf.mxu0
          %v3552 = vadd.f32 %v3463, %v3551
          %v3553 = vpop.f32.mrf.mxu0
          %v3554 = vadd.f32 %v3465, %v3553
          %3555 = vmatmul.bf16.gmra.mxu0 %v2070
          %v3556 = vpop.f32.mrf.mxu0
          %v3557 = vadd.f32 %v3468, %v3556
          %v3558 = vpop.f32.mrf.mxu0
          %v3559 = vadd.f32 %v3470, %v3558
          %3560 = vmatmul.bf16.gmra.mxu0 %v2086
          %v3561 = vpop.f32.mrf.mxu0
          %v3562 = vadd.f32 %v3473, %v3561
          %v3563 = vpop.f32.mrf.mxu0
          %v3564 = vadd.f32 %v3475, %v3563
          %3565 = vmatmul.bf16.gmra.mxu0 %v2102
          %v3566 = vpop.f32.mrf.mxu0
          %v3567 = vadd.f32 %v3478, %v3566
          %v3568 = vpop.f32.mrf.mxu0
          %v3569 = vadd.f32 %v3480, %v3568
          %3570 = vmatmul.bf16.gmra.mxu0 %v2118
          %v3571 = vpop.f32.mrf.mxu0
          %v3572 = vadd.f32 %v3483, %v3571
          %v3573 = vpop.f32.mrf.mxu0
          %v3574 = vadd.f32 %v3485, %v3573
          %3575 = vmatmul.bf16.gmra.mxu0 %v2134
          %v3576 = vpop.f32.mrf.mxu0
          %v3577 = vadd.f32 %v3488, %v3576
          %v3578 = vpop.f32.mrf.mxu0
          %v3579 = vadd.f32 %v3490, %v3578
          %3580 = vmatmul.bf16.gmra.mxu0 %v2150
          %v3581 = vpop.f32.mrf.mxu0
          %v3582 = vadd.f32 %v3493, %v3581
          %v3583 = vpop.f32.mrf.mxu0
          %v3584 = vadd.f32 %v3495, %v3583
          %3585 = vmatmul.bf16.gmra.mxu0 %v2166
          %v3586 = vpop.f32.mrf.mxu0
          %v3587 = vadd.f32 %v3498, %v3586
          %v3588 = vpop.f32.mrf.mxu0
          %v3589 = vadd.f32 %v3500, %v3588
          %3590 = vdwg.mxu0
          %3591 = vmatpush.bf16.msra.mxu0 %v3018
          %3592 = vmatpush.bf16.msra.mxu0 %v3017
          %3593 = vmatpush.bf16.msra.mxu0 %v3016
          %3594 = vmatpush.bf16.msra.mxu0 %v3015
          %3595 = vmatpush.bf16.msra.mxu0 %v3014
          %3596 = vmatpush.bf16.msra.mxu0 %v3013
          %3597 = vmatpush.bf16.msra.mxu0 %v3012
          %3598 = vmatpush.bf16.msra.mxu0 %v3011
          %3599 = vmatmul.bf16.gmra.mxu0 %v1927
          %v3600 = vpop.f32.mrf.mxu0
          %v3601 = vadd.f32 %v3512, %v3600
          %v3602 = vpop.f32.mrf.mxu0
          %v3603 = vadd.f32 %v3514, %v3602
          %3604 = vmatmul.bf16.gmra.mxu0 %v1943
          %v3605 = vpop.f32.mrf.mxu0
          %v3606 = vadd.f32 %v3517, %v3605
          %v3607 = vpop.f32.mrf.mxu0
          %v3608 = vadd.f32 %v3519, %v3607
          %3609 = vmatmul.bf16.gmra.mxu0 %v1959
          %v3610 = vpop.f32.mrf.mxu0
          %v3611 = vadd.f32 %v3522, %v3610
          %v3612 = vpop.f32.mrf.mxu0
          %v3613 = vadd.f32 %v3524, %v3612
          %3614 = vmatmul.bf16.gmra.mxu0 %v1975
          %v3615 = vpop.f32.mrf.mxu0
          %v3616 = vadd.f32 %v3527, %v3615
          %v3617 = vpop.f32.mrf.mxu0
          %v3618 = vadd.f32 %v3529, %v3617
          %3619 = vmatmul.bf16.gmra.mxu0 %v1991
          %v3620 = vpop.f32.mrf.mxu0
          %v3621 = vadd.f32 %v3532, %v3620
          %v3622 = vpop.f32.mrf.mxu0
          %v3623 = vadd.f32 %v3534, %v3622
          %3624 = vmatmul.bf16.gmra.mxu0 %v2007
          %v3625 = vpop.f32.mrf.mxu0
          %v3626 = vadd.f32 %v3537, %v3625
          %v3627 = vpop.f32.mrf.mxu0
          %v3628 = vadd.f32 %v3539, %v3627
          %3629 = vmatmul.bf16.gmra.mxu0 %v2023
          %v3630 = vpop.f32.mrf.mxu0
          %v3631 = vadd.f32 %v3542, %v3630
          %v3632 = vpop.f32.mrf.mxu0
          %v3633 = vadd.f32 %v3544, %v3632
          %3634 = vmatmul.bf16.gmra.mxu0 %v2039
          %v3635 = vpop.f32.mrf.mxu0
          %v3636 = vadd.f32 %v3547, %v3635
          %v3637 = vpop.f32.mrf.mxu0
          %v3638 = vadd.f32 %v3549, %v3637
          %3639 = vmatmul.bf16.gmra.mxu0 %v2055
          %v3640 = vpop.f32.mrf.mxu0
          %v3641 = vadd.f32 %v3552, %v3640
          %v3642 = vpop.f32.mrf.mxu0
          %v3643 = vadd.f32 %v3554, %v3642
          %3644 = vmatmul.bf16.gmra.mxu0 %v2071
          %v3645 = vpop.f32.mrf.mxu0
          %v3646 = vadd.f32 %v3557, %v3645
          %v3647 = vpop.f32.mrf.mxu0
          %v3648 = vadd.f32 %v3559, %v3647
          %3649 = vmatmul.bf16.gmra.mxu0 %v2087
          %v3650 = vpop.f32.mrf.mxu0
          %v3651 = vadd.f32 %v3562, %v3650
          %v3652 = vpop.f32.mrf.mxu0
          %v3653 = vadd.f32 %v3564, %v3652
          %3654 = vmatmul.bf16.gmra.mxu0 %v2103
          %v3655 = vpop.f32.mrf.mxu0
          %v3656 = vadd.f32 %v3567, %v3655
          %v3657 = vpop.f32.mrf.mxu0
          %v3658 = vadd.f32 %v3569, %v3657
          %3659 = vmatmul.bf16.gmra.mxu0 %v2119
          %v3660 = vpop.f32.mrf.mxu0
          %v3661 = vadd.f32 %v3572, %v3660
          %v3662 = vpop.f32.mrf.mxu0
          %v3663 = vadd.f32 %v3574, %v3662
          %3664 = vmatmul.bf16.gmra.mxu0 %v2135
          %v3665 = vpop.f32.mrf.mxu0
          %v3666 = vadd.f32 %v3577, %v3665
          %v3667 = vpop.f32.mrf.mxu0
          %v3668 = vadd.f32 %v3579, %v3667
          %3669 = vmatmul.bf16.gmra.mxu0 %v2151
          %v3670 = vpop.f32.mrf.mxu0
          %v3671 = vadd.f32 %v3582, %v3670
          %v3672 = vpop.f32.mrf.mxu0
          %v3673 = vadd.f32 %v3584, %v3672
          %3674 = vmatmul.bf16.gmra.mxu0 %v2167
          %v3675 = vpop.f32.mrf.mxu0
          %v3676 = vadd.f32 %v3587, %v3675
          %v3677 = vpop.f32.mrf.mxu0
          %v3678 = vadd.f32 %v3589, %v3677
          %3679 = vdwg.mxu0
          %3680 = vmatpush.bf16.msra.mxu0 %v3026
          %3681 = vmatpush.bf16.msra.mxu0 %v3025
          %3682 = vmatpush.bf16.msra.mxu0 %v3024
          %3683 = vmatpush.bf16.msra.mxu0 %v3023
          %3684 = vmatpush.bf16.msra.mxu0 %v3022
          %3685 = vmatpush.bf16.msra.mxu0 %v3021
          %3686 = vmatpush.bf16.msra.mxu0 %v3020
          %3687 = vmatpush.bf16.msra.mxu0 %v3019
          %3688 = vmatmul.bf16.gmra.mxu0 %v1928
          %v3689 = vpop.f32.mrf.mxu0
          %v3690 = vadd.f32 %v3601, %v3689
          %v3691 = vpop.f32.mrf.mxu0
          %v3692 = vadd.f32 %v3603, %v3691
          %3693 = vmatmul.bf16.gmra.mxu0 %v1944
          %v3694 = vpop.f32.mrf.mxu0
          %v3695 = vadd.f32 %v3606, %v3694
          %v3696 = vpop.f32.mrf.mxu0
          %v3697 = vadd.f32 %v3608, %v3696
          %3698 = vmatmul.bf16.gmra.mxu0 %v1960
          %v3699 = vpop.f32.mrf.mxu0
          %v3700 = vadd.f32 %v3611, %v3699
          %v3701 = vpop.f32.mrf.mxu0
          %v3702 = vadd.f32 %v3613, %v3701
          %3703 = vmatmul.bf16.gmra.mxu0 %v1976
          %v3704 = vpop.f32.mrf.mxu0
          %v3705 = vadd.f32 %v3616, %v3704
          %v3706 = vpop.f32.mrf.mxu0
          %v3707 = vadd.f32 %v3618, %v3706
          %3708 = vmatmul.bf16.gmra.mxu0 %v1992
          %v3709 = vpop.f32.mrf.mxu0
          %v3710 = vadd.f32 %v3621, %v3709
          %v3711 = vpop.f32.mrf.mxu0
          %v3712 = vadd.f32 %v3623, %v3711
          %3713 = vmatmul.bf16.gmra.mxu0 %v2008
          %v3714 = vpop.f32.mrf.mxu0
          %v3715 = vadd.f32 %v3626, %v3714
          %v3716 = vpop.f32.mrf.mxu0
          %v3717 = vadd.f32 %v3628, %v3716
          %3718 = vmatmul.bf16.gmra.mxu0 %v2024
          %v3719 = vpop.f32.mrf.mxu0
          %v3720 = vadd.f32 %v3631, %v3719
          %v3721 = vpop.f32.mrf.mxu0
          %v3722 = vadd.f32 %v3633, %v3721
          %3723 = vmatmul.bf16.gmra.mxu0 %v2040
          %v3724 = vpop.f32.mrf.mxu0
          %v3725 = vadd.f32 %v3636, %v3724
          %v3726 = vpop.f32.mrf.mxu0
          %v3727 = vadd.f32 %v3638, %v3726
          %3728 = vmatmul.bf16.gmra.mxu0 %v2056
          %v3729 = vpop.f32.mrf.mxu0
          %v3730 = vadd.f32 %v3641, %v3729
          %v3731 = vpop.f32.mrf.mxu0
          %v3732 = vadd.f32 %v3643, %v3731
          %3733 = vmatmul.bf16.gmra.mxu0 %v2072
          %v3734 = vpop.f32.mrf.mxu0
          %v3735 = vadd.f32 %v3646, %v3734
          %v3736 = vpop.f32.mrf.mxu0
          %v3737 = vadd.f32 %v3648, %v3736
          %3738 = vmatmul.bf16.gmra.mxu0 %v2088
          %v3739 = vpop.f32.mrf.mxu0
          %v3740 = vadd.f32 %v3651, %v3739
          %v3741 = vpop.f32.mrf.mxu0
          %v3742 = vadd.f32 %v3653, %v3741
          %3743 = vmatmul.bf16.gmra.mxu0 %v2104
          %v3744 = vpop.f32.mrf.mxu0
          %v3745 = vadd.f32 %v3656, %v3744
          %v3746 = vpop.f32.mrf.mxu0
          %v3747 = vadd.f32 %v3658, %v3746
          %3748 = vmatmul.bf16.gmra.mxu0 %v2120
          %v3749 = vpop.f32.mrf.mxu0
          %v3750 = vadd.f32 %v3661, %v3749
          %v3751 = vpop.f32.mrf.mxu0
          %v3752 = vadd.f32 %v3663, %v3751
          %3753 = vmatmul.bf16.gmra.mxu0 %v2136
          %v3754 = vpop.f32.mrf.mxu0
          %v3755 = vadd.f32 %v3666, %v3754
          %v3756 = vpop.f32.mrf.mxu0
          %v3757 = vadd.f32 %v3668, %v3756
          %3758 = vmatmul.bf16.gmra.mxu0 %v2152
          %v3759 = vpop.f32.mrf.mxu0
          %v3760 = vadd.f32 %v3671, %v3759
          %v3761 = vpop.f32.mrf.mxu0
          %v3762 = vadd.f32 %v3673, %v3761
          %3763 = vmatmul.bf16.gmra.mxu0 %v2168
          %v3764 = vpop.f32.mrf.mxu0
          %v3765 = vadd.f32 %v3676, %v3764
          %v3766 = vpop.f32.mrf.mxu0
          %v3767 = vadd.f32 %v3678, %v3766
          %3768 = vdwg.mxu0
          %3769 = vmatpush.bf16.msra.mxu0 %v3034
          %3770 = vmatpush.bf16.msra.mxu0 %v3033
          %3771 = vmatpush.bf16.msra.mxu0 %v3032
          %3772 = vmatpush.bf16.msra.mxu0 %v3031
          %3773 = vmatpush.bf16.msra.mxu0 %v3030
          %3774 = vmatpush.bf16.msra.mxu0 %v3029
          %3775 = vmatpush.bf16.msra.mxu0 %v3028
          %3776 = vmatpush.bf16.msra.mxu0 %v3027
          %3777 = vmatmul.bf16.gmra.mxu0 %v1929
          %v3778 = vpop.f32.mrf.mxu0
          %v3779 = vadd.f32 %v3690, %v3778
          %v3780 = vpop.f32.mrf.mxu0
          %v3781 = vadd.f32 %v3692, %v3780
          %3782 = vmatmul.bf16.gmra.mxu0 %v1945
          %v3783 = vpop.f32.mrf.mxu0
          %v3784 = vadd.f32 %v3695, %v3783
          %v3785 = vpop.f32.mrf.mxu0
          %v3786 = vadd.f32 %v3697, %v3785
          %3787 = vmatmul.bf16.gmra.mxu0 %v1961
          %v3788 = vpop.f32.mrf.mxu0
          %v3789 = vadd.f32 %v3700, %v3788
          %v3790 = vpop.f32.mrf.mxu0
          %v3791 = vadd.f32 %v3702, %v3790
          %3792 = vmatmul.bf16.gmra.mxu0 %v1977
          %v3793 = vpop.f32.mrf.mxu0
          %v3794 = vadd.f32 %v3705, %v3793
          %v3795 = vpop.f32.mrf.mxu0
          %v3796 = vadd.f32 %v3707, %v3795
          %3797 = vmatmul.bf16.gmra.mxu0 %v1993
          %v3798 = vpop.f32.mrf.mxu0
          %v3799 = vadd.f32 %v3710, %v3798
          %v3800 = vpop.f32.mrf.mxu0
          %v3801 = vadd.f32 %v3712, %v3800
          %3802 = vmatmul.bf16.gmra.mxu0 %v2009
          %v3803 = vpop.f32.mrf.mxu0
          %v3804 = vadd.f32 %v3715, %v3803
          %v3805 = vpop.f32.mrf.mxu0
          %v3806 = vadd.f32 %v3717, %v3805
          %3807 = vmatmul.bf16.gmra.mxu0 %v2025
          %v3808 = vpop.f32.mrf.mxu0
          %v3809 = vadd.f32 %v3720, %v3808
          %v3810 = vpop.f32.mrf.mxu0
          %v3811 = vadd.f32 %v3722, %v3810
          %3812 = vmatmul.bf16.gmra.mxu0 %v2041
          %v3813 = vpop.f32.mrf.mxu0
          %v3814 = vadd.f32 %v3725, %v3813
          %v3815 = vpop.f32.mrf.mxu0
          %v3816 = vadd.f32 %v3727, %v3815
          %3817 = vmatmul.bf16.gmra.mxu0 %v2057
          %v3818 = vpop.f32.mrf.mxu0
          %v3819 = vadd.f32 %v3730, %v3818
          %v3820 = vpop.f32.mrf.mxu0
          %v3821 = vadd.f32 %v3732, %v3820
          %3822 = vmatmul.bf16.gmra.mxu0 %v2073
          %v3823 = vpop.f32.mrf.mxu0
          %v3824 = vadd.f32 %v3735, %v3823
          %v3825 = vpop.f32.mrf.mxu0
          %v3826 = vadd.f32 %v3737, %v3825
          %3827 = vmatmul.bf16.gmra.mxu0 %v2089
          %v3828 = vpop.f32.mrf.mxu0
          %v3829 = vadd.f32 %v3740, %v3828
          %v3830 = vpop.f32.mrf.mxu0
          %v3831 = vadd.f32 %v3742, %v3830
          %3832 = vmatmul.bf16.gmra.mxu0 %v2105
          %v3833 = vpop.f32.mrf.mxu0
          %v3834 = vadd.f32 %v3745, %v3833
          %v3835 = vpop.f32.mrf.mxu0
          %v3836 = vadd.f32 %v3747, %v3835
          %3837 = vmatmul.bf16.gmra.mxu0 %v2121
          %v3838 = vpop.f32.mrf.mxu0
          %v3839 = vadd.f32 %v3750, %v3838
          %v3840 = vpop.f32.mrf.mxu0
          %v3841 = vadd.f32 %v3752, %v3840
          %3842 = vmatmul.bf16.gmra.mxu0 %v2137
          %v3843 = vpop.f32.mrf.mxu0
          %v3844 = vadd.f32 %v3755, %v3843
          %v3845 = vpop.f32.mrf.mxu0
          %v3846 = vadd.f32 %v3757, %v3845
          %3847 = vmatmul.bf16.gmra.mxu0 %v2153
          %v3848 = vpop.f32.mrf.mxu0
          %v3849 = vadd.f32 %v3760, %v3848
          %v3850 = vpop.f32.mrf.mxu0
          %v3851 = vadd.f32 %v3762, %v3850
          %3852 = vmatmul.bf16.gmra.mxu0 %v2169
          %v3853 = vpop.f32.mrf.mxu0
          %v3854 = vadd.f32 %v3765, %v3853
          %v3855 = vpop.f32.mrf.mxu0
          %v3856 = vadd.f32 %v3767, %v3855
          %3857 = vdwg.mxu0
          %3858 = vmatpush.bf16.msra.mxu0 %v3042
          %3859 = vmatpush.bf16.msra.mxu0 %v3041
          %3860 = vmatpush.bf16.msra.mxu0 %v3040
          %3861 = vmatpush.bf16.msra.mxu0 %v3039
          %3862 = vmatpush.bf16.msra.mxu0 %v3038
          %3863 = vmatpush.bf16.msra.mxu0 %v3037
          %3864 = vmatpush.bf16.msra.mxu0 %v3036
          %3865 = vmatpush.bf16.msra.mxu0 %v3035
          %3866 = vmatmul.bf16.gmra.mxu0 %v1930
          %v3867 = vpop.f32.mrf.mxu0
          %v3868 = vadd.f32 %v3779, %v3867
          %v3869 = vpop.f32.mrf.mxu0
          %v3870 = vadd.f32 %v3781, %v3869
          %3871 = vmatmul.bf16.gmra.mxu0 %v1946
          %v3872 = vpop.f32.mrf.mxu0
          %v3873 = vadd.f32 %v3784, %v3872
          %v3874 = vpop.f32.mrf.mxu0
          %v3875 = vadd.f32 %v3786, %v3874
          %3876 = vmatmul.bf16.gmra.mxu0 %v1962
          %v3877 = vpop.f32.mrf.mxu0
          %v3878 = vadd.f32 %v3789, %v3877
          %v3879 = vpop.f32.mrf.mxu0
          %v3880 = vadd.f32 %v3791, %v3879
          %3881 = vmatmul.bf16.gmra.mxu0 %v1978
          %v3882 = vpop.f32.mrf.mxu0
          %v3883 = vadd.f32 %v3794, %v3882
          %v3884 = vpop.f32.mrf.mxu0
          %v3885 = vadd.f32 %v3796, %v3884
          %3886 = vmatmul.bf16.gmra.mxu0 %v1994
          %v3887 = vpop.f32.mrf.mxu0
          %v3888 = vadd.f32 %v3799, %v3887
          %v3889 = vpop.f32.mrf.mxu0
          %v3890 = vadd.f32 %v3801, %v3889
          %3891 = vmatmul.bf16.gmra.mxu0 %v2010
          %v3892 = vpop.f32.mrf.mxu0
          %v3893 = vadd.f32 %v3804, %v3892
          %v3894 = vpop.f32.mrf.mxu0
          %v3895 = vadd.f32 %v3806, %v3894
          %3896 = vmatmul.bf16.gmra.mxu0 %v2026
          %v3897 = vpop.f32.mrf.mxu0
          %v3898 = vadd.f32 %v3809, %v3897
          %v3899 = vpop.f32.mrf.mxu0
          %v3900 = vadd.f32 %v3811, %v3899
          %3901 = vmatmul.bf16.gmra.mxu0 %v2042
          %v3902 = vpop.f32.mrf.mxu0
          %v3903 = vadd.f32 %v3814, %v3902
          %v3904 = vpop.f32.mrf.mxu0
          %v3905 = vadd.f32 %v3816, %v3904
          %3906 = vmatmul.bf16.gmra.mxu0 %v2058
          %v3907 = vpop.f32.mrf.mxu0
          %v3908 = vadd.f32 %v3819, %v3907
          %v3909 = vpop.f32.mrf.mxu0
          %v3910 = vadd.f32 %v3821, %v3909
          %3911 = vmatmul.bf16.gmra.mxu0 %v2074
          %v3912 = vpop.f32.mrf.mxu0
          %v3913 = vadd.f32 %v3824, %v3912
          %v3914 = vpop.f32.mrf.mxu0
          %v3915 = vadd.f32 %v3826, %v3914
          %3916 = vmatmul.bf16.gmra.mxu0 %v2090
          %v3917 = vpop.f32.mrf.mxu0
          %v3918 = vadd.f32 %v3829, %v3917
          %v3919 = vpop.f32.mrf.mxu0
          %v3920 = vadd.f32 %v3831, %v3919
          %3921 = vmatmul.bf16.gmra.mxu0 %v2106
          %v3922 = vpop.f32.mrf.mxu0
          %v3923 = vadd.f32 %v3834, %v3922
          %v3924 = vpop.f32.mrf.mxu0
          %v3925 = vadd.f32 %v3836, %v3924
          %3926 = vmatmul.bf16.gmra.mxu0 %v2122
          %v3927 = vpop.f32.mrf.mxu0
          %v3928 = vadd.f32 %v3839, %v3927
          %v3929 = vpop.f32.mrf.mxu0
          %v3930 = vadd.f32 %v3841, %v3929
          %3931 = vmatmul.bf16.gmra.mxu0 %v2138
          %v3932 = vpop.f32.mrf.mxu0
          %v3933 = vadd.f32 %v3844, %v3932
          %v3934 = vpop.f32.mrf.mxu0
          %v3935 = vadd.f32 %v3846, %v3934
          %3936 = vmatmul.bf16.gmra.mxu0 %v2154
          %v3937 = vpop.f32.mrf.mxu0
          %v3938 = vadd.f32 %v3849, %v3937
          %v3939 = vpop.f32.mrf.mxu0
          %v3940 = vadd.f32 %v3851, %v3939
          %3941 = vmatmul.bf16.gmra.mxu0 %v2170
          %v3942 = vpop.f32.mrf.mxu0
          %v3943 = vadd.f32 %v3854, %v3942
          %v3944 = vpop.f32.mrf.mxu0
          %v3945 = vadd.f32 %v3856, %v3944
          %3946 = vdwg.mxu0
          %3947 = vmatpush.bf16.msra.mxu0 %v3050
          %3948 = vmatpush.bf16.msra.mxu0 %v3049
          %3949 = vmatpush.bf16.msra.mxu0 %v3048
          %3950 = vmatpush.bf16.msra.mxu0 %v3047
          %3951 = vmatpush.bf16.msra.mxu0 %v3046
          %3952 = vmatpush.bf16.msra.mxu0 %v3045
          %3953 = vmatpush.bf16.msra.mxu0 %v3044
          %3954 = vmatpush.bf16.msra.mxu0 %v3043
          %3955 = vmatmul.bf16.gmra.mxu0 %v1931
          %v3956 = vpop.f32.mrf.mxu0
          %v3957 = vadd.f32 %v3868, %v3956
          %v3958 = vpop.f32.mrf.mxu0
          %v3959 = vadd.f32 %v3870, %v3958
          %3960 = vmatmul.bf16.gmra.mxu0 %v1947
          %v3961 = vpop.f32.mrf.mxu0
          %v3962 = vadd.f32 %v3873, %v3961
          %v3963 = vpop.f32.mrf.mxu0
          %v3964 = vadd.f32 %v3875, %v3963
          %3965 = vmatmul.bf16.gmra.mxu0 %v1963
          %v3966 = vpop.f32.mrf.mxu0
          %v3967 = vadd.f32 %v3878, %v3966
          %v3968 = vpop.f32.mrf.mxu0
          %v3969 = vadd.f32 %v3880, %v3968
          %3970 = vmatmul.bf16.gmra.mxu0 %v1979
          %v3971 = vpop.f32.mrf.mxu0
          %v3972 = vadd.f32 %v3883, %v3971
          %v3973 = vpop.f32.mrf.mxu0
          %v3974 = vadd.f32 %v3885, %v3973
          %3975 = vmatmul.bf16.gmra.mxu0 %v1995
          %v3976 = vpop.f32.mrf.mxu0
          %v3977 = vadd.f32 %v3888, %v3976
          %v3978 = vpop.f32.mrf.mxu0
          %v3979 = vadd.f32 %v3890, %v3978
          %3980 = vmatmul.bf16.gmra.mxu0 %v2011
          %v3981 = vpop.f32.mrf.mxu0
          %v3982 = vadd.f32 %v3893, %v3981
          %v3983 = vpop.f32.mrf.mxu0
          %v3984 = vadd.f32 %v3895, %v3983
          %3985 = vmatmul.bf16.gmra.mxu0 %v2027
          %v3986 = vpop.f32.mrf.mxu0
          %v3987 = vadd.f32 %v3898, %v3986
          %v3988 = vpop.f32.mrf.mxu0
          %v3989 = vadd.f32 %v3900, %v3988
          %3990 = vmatmul.bf16.gmra.mxu0 %v2043
          %v3991 = vpop.f32.mrf.mxu0
          %v3992 = vadd.f32 %v3903, %v3991
          %v3993 = vpop.f32.mrf.mxu0
          %v3994 = vadd.f32 %v3905, %v3993
          %3995 = vmatmul.bf16.gmra.mxu0 %v2059
          %v3996 = vpop.f32.mrf.mxu0
          %v3997 = vadd.f32 %v3908, %v3996
          %v3998 = vpop.f32.mrf.mxu0
          %v3999 = vadd.f32 %v3910, %v3998
          %4000 = vmatmul.bf16.gmra.mxu0 %v2075
          %v4001 = vpop.f32.mrf.mxu0
          %v4002 = vadd.f32 %v3913, %v4001
          %v4003 = vpop.f32.mrf.mxu0
          %v4004 = vadd.f32 %v3915, %v4003
          %4005 = vmatmul.bf16.gmra.mxu0 %v2091
          %v4006 = vpop.f32.mrf.mxu0
          %v4007 = vadd.f32 %v3918, %v4006
          %v4008 = vpop.f32.mrf.mxu0
          %v4009 = vadd.f32 %v3920, %v4008
          %4010 = vmatmul.bf16.gmra.mxu0 %v2107
          %v4011 = vpop.f32.mrf.mxu0
          %v4012 = vadd.f32 %v3923, %v4011
          %v4013 = vpop.f32.mrf.mxu0
          %v4014 = vadd.f32 %v3925, %v4013
          %4015 = vmatmul.bf16.gmra.mxu0 %v2123
          %v4016 = vpop.f32.mrf.mxu0
          %v4017 = vadd.f32 %v3928, %v4016
          %v4018 = vpop.f32.mrf.mxu0
          %v4019 = vadd.f32 %v3930, %v4018
          %4020 = vmatmul.bf16.gmra.mxu0 %v2139
          %v4021 = vpop.f32.mrf.mxu0
          %v4022 = vadd.f32 %v3933, %v4021
          %v4023 = vpop.f32.mrf.mxu0
          %v4024 = vadd.f32 %v3935, %v4023
          %4025 = vmatmul.bf16.gmra.mxu0 %v2155
          %v4026 = vpop.f32.mrf.mxu0
          %v4027 = vadd.f32 %v3938, %v4026
          %v4028 = vpop.f32.mrf.mxu0
          %v4029 = vadd.f32 %v3940, %v4028
          %4030 = vmatmul.bf16.gmra.mxu0 %v2171
          %v4031 = vpop.f32.mrf.mxu0
          %v4032 = vadd.f32 %v3943, %v4031
          %v4033 = vpop.f32.mrf.mxu0
          %v4034 = vadd.f32 %v3945, %v4033
          %4035 = vdwg.mxu0
          %4036 = vmatpush.bf16.msra.mxu0 %v3058
          %4037 = vmatpush.bf16.msra.mxu0 %v3057
          %4038 = vmatpush.bf16.msra.mxu0 %v3056
          %4039 = vmatpush.bf16.msra.mxu0 %v3055
          %4040 = vmatpush.bf16.msra.mxu0 %v3054
          %4041 = vmatpush.bf16.msra.mxu0 %v3053
          %4042 = vmatpush.bf16.msra.mxu0 %v3052
          %4043 = vmatpush.bf16.msra.mxu0 %v3051
          %4044 = vmatmul.bf16.gmra.mxu0 %v1932
          %v4045 = vpop.f32.mrf.mxu0
          %v4046 = vadd.f32 %v3957, %v4045
          %v4047 = vpop.f32.mrf.mxu0
          %v4048 = vadd.f32 %v3959, %v4047
          %4049 = vmatmul.bf16.gmra.mxu0 %v1948
          %v4050 = vpop.f32.mrf.mxu0
          %v4051 = vadd.f32 %v3962, %v4050
          %v4052 = vpop.f32.mrf.mxu0
          %v4053 = vadd.f32 %v3964, %v4052
          %4054 = vmatmul.bf16.gmra.mxu0 %v1964
          %v4055 = vpop.f32.mrf.mxu0
          %v4056 = vadd.f32 %v3967, %v4055
          %v4057 = vpop.f32.mrf.mxu0
          %v4058 = vadd.f32 %v3969, %v4057
          %4059 = vmatmul.bf16.gmra.mxu0 %v1980
          %v4060 = vpop.f32.mrf.mxu0
          %v4061 = vadd.f32 %v3972, %v4060
          %v4062 = vpop.f32.mrf.mxu0
          %v4063 = vadd.f32 %v3974, %v4062
          %4064 = vmatmul.bf16.gmra.mxu0 %v1996
          %v4065 = vpop.f32.mrf.mxu0
          %v4066 = vadd.f32 %v3977, %v4065
          %v4067 = vpop.f32.mrf.mxu0
          %v4068 = vadd.f32 %v3979, %v4067
          %4069 = vmatmul.bf16.gmra.mxu0 %v2012
          %v4070 = vpop.f32.mrf.mxu0
          %v4071 = vadd.f32 %v3982, %v4070
          %v4072 = vpop.f32.mrf.mxu0
          %v4073 = vadd.f32 %v3984, %v4072
          %4074 = vmatmul.bf16.gmra.mxu0 %v2028
          %v4075 = vpop.f32.mrf.mxu0
          %v4076 = vadd.f32 %v3987, %v4075
          %v4077 = vpop.f32.mrf.mxu0
          %v4078 = vadd.f32 %v3989, %v4077
          %4079 = vmatmul.bf16.gmra.mxu0 %v2044
          %v4080 = vpop.f32.mrf.mxu0
          %v4081 = vadd.f32 %v3992, %v4080
          %v4082 = vpop.f32.mrf.mxu0
          %v4083 = vadd.f32 %v3994, %v4082
          %4084 = vmatmul.bf16.gmra.mxu0 %v2060
          %v4085 = vpop.f32.mrf.mxu0
          %v4086 = vadd.f32 %v3997, %v4085
          %v4087 = vpop.f32.mrf.mxu0
          %v4088 = vadd.f32 %v3999, %v4087
          %4089 = vmatmul.bf16.gmra.mxu0 %v2076
          %v4090 = vpop.f32.mrf.mxu0
          %v4091 = vadd.f32 %v4002, %v4090
          %v4092 = vpop.f32.mrf.mxu0
          %v4093 = vadd.f32 %v4004, %v4092
          %4094 = vmatmul.bf16.gmra.mxu0 %v2092
          %v4095 = vpop.f32.mrf.mxu0
          %v4096 = vadd.f32 %v4007, %v4095
          %v4097 = vpop.f32.mrf.mxu0
          %v4098 = vadd.f32 %v4009, %v4097
          %4099 = vmatmul.bf16.gmra.mxu0 %v2108
          %v4100 = vpop.f32.mrf.mxu0
          %v4101 = vadd.f32 %v4012, %v4100
          %v4102 = vpop.f32.mrf.mxu0
          %v4103 = vadd.f32 %v4014, %v4102
          %4104 = vmatmul.bf16.gmra.mxu0 %v2124
          %v4105 = vpop.f32.mrf.mxu0
          %v4106 = vadd.f32 %v4017, %v4105
          %v4107 = vpop.f32.mrf.mxu0
          %v4108 = vadd.f32 %v4019, %v4107
          %4109 = vmatmul.bf16.gmra.mxu0 %v2140
          %v4110 = vpop.f32.mrf.mxu0
          %v4111 = vadd.f32 %v4022, %v4110
          %v4112 = vpop.f32.mrf.mxu0
          %v4113 = vadd.f32 %v4024, %v4112
          %4114 = vmatmul.bf16.gmra.mxu0 %v2156
          %v4115 = vpop.f32.mrf.mxu0
          %v4116 = vadd.f32 %v4027, %v4115
          %v4117 = vpop.f32.mrf.mxu0
          %v4118 = vadd.f32 %v4029, %v4117
          %4119 = vmatmul.bf16.gmra.mxu0 %v2172
          %v4120 = vpop.f32.mrf.mxu0
          %v4121 = vadd.f32 %v4032, %v4120
          %v4122 = vpop.f32.mrf.mxu0
          %v4123 = vadd.f32 %v4034, %v4122
          %4124 = vdwg.mxu0
          %4125 = vmatpush.bf16.msra.mxu0 %v3066
          %4126 = vmatpush.bf16.msra.mxu0 %v3065
          %4127 = vmatpush.bf16.msra.mxu0 %v3064
          %4128 = vmatpush.bf16.msra.mxu0 %v3063
          %4129 = vmatpush.bf16.msra.mxu0 %v3062
          %4130 = vmatpush.bf16.msra.mxu0 %v3061
          %4131 = vmatpush.bf16.msra.mxu0 %v3060
          %4132 = vmatpush.bf16.msra.mxu0 %v3059
          %4133 = vmatmul.bf16.gmra.mxu0 %v1933
          %v4134 = vpop.f32.mrf.mxu0
          %v4135 = vadd.f32 %v4046, %v4134
          %v4136 = vpop.f32.mrf.mxu0
          %v4137 = vadd.f32 %v4048, %v4136
          %4138 = vmatmul.bf16.gmra.mxu0 %v1949
          %v4139 = vpop.f32.mrf.mxu0
          %v4140 = vadd.f32 %v4051, %v4139
          %v4141 = vpop.f32.mrf.mxu0
          %v4142 = vadd.f32 %v4053, %v4141
          %4143 = vmatmul.bf16.gmra.mxu0 %v1965
          %v4144 = vpop.f32.mrf.mxu0
          %v4145 = vadd.f32 %v4056, %v4144
          %v4146 = vpop.f32.mrf.mxu0
          %v4147 = vadd.f32 %v4058, %v4146
          %4148 = vmatmul.bf16.gmra.mxu0 %v1981
          %v4149 = vpop.f32.mrf.mxu0
          %v4150 = vadd.f32 %v4061, %v4149
          %v4151 = vpop.f32.mrf.mxu0
          %v4152 = vadd.f32 %v4063, %v4151
          %4153 = vmatmul.bf16.gmra.mxu0 %v1997
          %v4154 = vpop.f32.mrf.mxu0
          %v4155 = vadd.f32 %v4066, %v4154
          %v4156 = vpop.f32.mrf.mxu0
          %v4157 = vadd.f32 %v4068, %v4156
          %4158 = vmatmul.bf16.gmra.mxu0 %v2013
          %v4159 = vpop.f32.mrf.mxu0
          %v4160 = vadd.f32 %v4071, %v4159
          %v4161 = vpop.f32.mrf.mxu0
          %v4162 = vadd.f32 %v4073, %v4161
          %4163 = vmatmul.bf16.gmra.mxu0 %v2029
          %v4164 = vpop.f32.mrf.mxu0
          %v4165 = vadd.f32 %v4076, %v4164
          %v4166 = vpop.f32.mrf.mxu0
          %v4167 = vadd.f32 %v4078, %v4166
          %4168 = vmatmul.bf16.gmra.mxu0 %v2045
          %v4169 = vpop.f32.mrf.mxu0
          %v4170 = vadd.f32 %v4081, %v4169
          %v4171 = vpop.f32.mrf.mxu0
          %v4172 = vadd.f32 %v4083, %v4171
          %4173 = vmatmul.bf16.gmra.mxu0 %v2061
          %v4174 = vpop.f32.mrf.mxu0
          %v4175 = vadd.f32 %v4086, %v4174
          %v4176 = vpop.f32.mrf.mxu0
          %v4177 = vadd.f32 %v4088, %v4176
          %4178 = vmatmul.bf16.gmra.mxu0 %v2077
          %v4179 = vpop.f32.mrf.mxu0
          %v4180 = vadd.f32 %v4091, %v4179
          %v4181 = vpop.f32.mrf.mxu0
          %v4182 = vadd.f32 %v4093, %v4181
          %4183 = vmatmul.bf16.gmra.mxu0 %v2093
          %v4184 = vpop.f32.mrf.mxu0
          %v4185 = vadd.f32 %v4096, %v4184
          %v4186 = vpop.f32.mrf.mxu0
          %v4187 = vadd.f32 %v4098, %v4186
          %4188 = vmatmul.bf16.gmra.mxu0 %v2109
          %v4189 = vpop.f32.mrf.mxu0
          %v4190 = vadd.f32 %v4101, %v4189
          %v4191 = vpop.f32.mrf.mxu0
          %v4192 = vadd.f32 %v4103, %v4191
          %4193 = vmatmul.bf16.gmra.mxu0 %v2125
          %v4194 = vpop.f32.mrf.mxu0
          %v4195 = vadd.f32 %v4106, %v4194
          %v4196 = vpop.f32.mrf.mxu0
          %v4197 = vadd.f32 %v4108, %v4196
          %4198 = vmatmul.bf16.gmra.mxu0 %v2141
          %v4199 = vpop.f32.mrf.mxu0
          %v4200 = vadd.f32 %v4111, %v4199
          %v4201 = vpop.f32.mrf.mxu0
          %v4202 = vadd.f32 %v4113, %v4201
          %4203 = vmatmul.bf16.gmra.mxu0 %v2157
          %v4204 = vpop.f32.mrf.mxu0
          %v4205 = vadd.f32 %v4116, %v4204
          %v4206 = vpop.f32.mrf.mxu0
          %v4207 = vadd.f32 %v4118, %v4206
          %4208 = vmatmul.bf16.gmra.mxu0 %v2173
          %v4209 = vpop.f32.mrf.mxu0
          %v4210 = vadd.f32 %v4121, %v4209
          %v4211 = vpop.f32.mrf.mxu0
          %v4212 = vadd.f32 %v4123, %v4211
          %4213 = vdwg.mxu0
          %4214 = vmatpush.bf16.msra.mxu0 %v3074
          %4215 = vmatpush.bf16.msra.mxu0 %v3073
          %4216 = vmatpush.bf16.msra.mxu0 %v3072
          %4217 = vmatpush.bf16.msra.mxu0 %v3071
          %4218 = vmatpush.bf16.msra.mxu0 %v3070
          %4219 = vmatpush.bf16.msra.mxu0 %v3069
          %4220 = vmatpush.bf16.msra.mxu0 %v3068
          %4221 = vmatpush.bf16.msra.mxu0 %v3067
          %4222 = vmatmul.bf16.gmra.mxu0 %v1934
          %v4223 = vpop.f32.mrf.mxu0
          %v4224 = vadd.f32 %v4135, %v4223
          %v4225 = vpop.f32.mrf.mxu0
          %v4226 = vadd.f32 %v4137, %v4225
          %4227 = vmatmul.bf16.gmra.mxu0 %v1950
          %v4228 = vpop.f32.mrf.mxu0
          %v4229 = vadd.f32 %v4140, %v4228
          %v4230 = vpop.f32.mrf.mxu0
          %v4231 = vadd.f32 %v4142, %v4230
          %4232 = vmatmul.bf16.gmra.mxu0 %v1966
          %v4233 = vpop.f32.mrf.mxu0
          %v4234 = vadd.f32 %v4145, %v4233
          %v4235 = vpop.f32.mrf.mxu0
          %v4236 = vadd.f32 %v4147, %v4235
          %4237 = vmatmul.bf16.gmra.mxu0 %v1982
          %v4238 = vpop.f32.mrf.mxu0
          %v4239 = vadd.f32 %v4150, %v4238
          %v4240 = vpop.f32.mrf.mxu0
          %v4241 = vadd.f32 %v4152, %v4240
          %4242 = vmatmul.bf16.gmra.mxu0 %v1998
          %v4243 = vpop.f32.mrf.mxu0
          %v4244 = vadd.f32 %v4155, %v4243
          %v4245 = vpop.f32.mrf.mxu0
          %v4246 = vadd.f32 %v4157, %v4245
          %4247 = vmatmul.bf16.gmra.mxu0 %v2014
          %v4248 = vpop.f32.mrf.mxu0
          %v4249 = vadd.f32 %v4160, %v4248
          %v4250 = vpop.f32.mrf.mxu0
          %v4251 = vadd.f32 %v4162, %v4250
          %4252 = vmatmul.bf16.gmra.mxu0 %v2030
          %v4253 = vpop.f32.mrf.mxu0
          %v4254 = vadd.f32 %v4165, %v4253
          %v4255 = vpop.f32.mrf.mxu0
          %v4256 = vadd.f32 %v4167, %v4255
          %4257 = vmatmul.bf16.gmra.mxu0 %v2046
          %v4258 = vpop.f32.mrf.mxu0
          %v4259 = vadd.f32 %v4170, %v4258
          %v4260 = vpop.f32.mrf.mxu0
          %v4261 = vadd.f32 %v4172, %v4260
          %4262 = vmatmul.bf16.gmra.mxu0 %v2062
          %v4263 = vpop.f32.mrf.mxu0
          %v4264 = vadd.f32 %v4175, %v4263
          %v4265 = vpop.f32.mrf.mxu0
          %v4266 = vadd.f32 %v4177, %v4265
          %4267 = vmatmul.bf16.gmra.mxu0 %v2078
          %v4268 = vpop.f32.mrf.mxu0
          %v4269 = vadd.f32 %v4180, %v4268
          %v4270 = vpop.f32.mrf.mxu0
          %v4271 = vadd.f32 %v4182, %v4270
          %4272 = vmatmul.bf16.gmra.mxu0 %v2094
          %v4273 = vpop.f32.mrf.mxu0
          %v4274 = vadd.f32 %v4185, %v4273
          %v4275 = vpop.f32.mrf.mxu0
          %v4276 = vadd.f32 %v4187, %v4275
          %4277 = vmatmul.bf16.gmra.mxu0 %v2110
          %v4278 = vpop.f32.mrf.mxu0
          %v4279 = vadd.f32 %v4190, %v4278
          %v4280 = vpop.f32.mrf.mxu0
          %v4281 = vadd.f32 %v4192, %v4280
          %4282 = vmatmul.bf16.gmra.mxu0 %v2126
          %v4283 = vpop.f32.mrf.mxu0
          %v4284 = vadd.f32 %v4195, %v4283
          %v4285 = vpop.f32.mrf.mxu0
          %v4286 = vadd.f32 %v4197, %v4285
          %4287 = vmatmul.bf16.gmra.mxu0 %v2142
          %v4288 = vpop.f32.mrf.mxu0
          %v4289 = vadd.f32 %v4200, %v4288
          %v4290 = vpop.f32.mrf.mxu0
          %v4291 = vadd.f32 %v4202, %v4290
          %4292 = vmatmul.bf16.gmra.mxu0 %v2158
          %v4293 = vpop.f32.mrf.mxu0
          %v4294 = vadd.f32 %v4205, %v4293
          %v4295 = vpop.f32.mrf.mxu0
          %v4296 = vadd.f32 %v4207, %v4295
          %4297 = vmatmul.bf16.gmra.mxu0 %v2174
          %v4298 = vpop.f32.mrf.mxu0
          %v4299 = vadd.f32 %v4210, %v4298
          %v4300 = vpop.f32.mrf.mxu0
          %v4301 = vadd.f32 %v4212, %v4300
          %4302 = vdwg.mxu0
          %4303 = vmatpush.bf16.msra.mxu0 %v3082
          %4304 = vmatpush.bf16.msra.mxu0 %v3081
          %4305 = vmatpush.bf16.msra.mxu0 %v3080
          %4306 = vmatpush.bf16.msra.mxu0 %v3079
          %4307 = vmatpush.bf16.msra.mxu0 %v3078
          %4308 = vmatpush.bf16.msra.mxu0 %v3077
          %4309 = vmatpush.bf16.msra.mxu0 %v3076
          %4310 = vmatpush.bf16.msra.mxu0 %v3075
          %4311 = vmatmul.bf16.gmra.mxu0 %v1935
          %v4312 = vpop.f32.mrf.mxu0
          %v4313 = vadd.f32 %v4224, %v4312
          %v4314 = vpop.f32.mrf.mxu0
          %v4315 = vadd.f32 %v4226, %v4314
          %4316 = vmatmul.bf16.gmra.mxu0 %v1951
          %v4317 = vpop.f32.mrf.mxu0
          %v4318 = vadd.f32 %v4229, %v4317
          %v4319 = vpop.f32.mrf.mxu0
          %v4320 = vadd.f32 %v4231, %v4319
          %4321 = vmatmul.bf16.gmra.mxu0 %v1967
          %v4322 = vpop.f32.mrf.mxu0
          %v4323 = vadd.f32 %v4234, %v4322
          %v4324 = vpop.f32.mrf.mxu0
          %v4325 = vadd.f32 %v4236, %v4324
          %4326 = vmatmul.bf16.gmra.mxu0 %v1983
          %v4327 = vpop.f32.mrf.mxu0
          %v4328 = vadd.f32 %v4239, %v4327
          %v4329 = vpop.f32.mrf.mxu0
          %v4330 = vadd.f32 %v4241, %v4329
          %4331 = vmatmul.bf16.gmra.mxu0 %v1999
          %v4332 = vpop.f32.mrf.mxu0
          %v4333 = vadd.f32 %v4244, %v4332
          %v4334 = vpop.f32.mrf.mxu0
          %v4335 = vadd.f32 %v4246, %v4334
          %4336 = vmatmul.bf16.gmra.mxu0 %v2015
          %v4337 = vpop.f32.mrf.mxu0
          %v4338 = vadd.f32 %v4249, %v4337
          %v4339 = vpop.f32.mrf.mxu0
          %v4340 = vadd.f32 %v4251, %v4339
          %4341 = vmatmul.bf16.gmra.mxu0 %v2031
          %v4342 = vpop.f32.mrf.mxu0
          %v4343 = vadd.f32 %v4254, %v4342
          %v4344 = vpop.f32.mrf.mxu0
          %v4345 = vadd.f32 %v4256, %v4344
          %4346 = vmatmul.bf16.gmra.mxu0 %v2047
          %v4347 = vpop.f32.mrf.mxu0
          %v4348 = vadd.f32 %v4259, %v4347
          %v4349 = vpop.f32.mrf.mxu0
          %v4350 = vadd.f32 %v4261, %v4349
          %4351 = vmatmul.bf16.gmra.mxu0 %v2063
          %v4352 = vpop.f32.mrf.mxu0
          %v4353 = vadd.f32 %v4264, %v4352
          %v4354 = vpop.f32.mrf.mxu0
          %v4355 = vadd.f32 %v4266, %v4354
          %4356 = vmatmul.bf16.gmra.mxu0 %v2079
          %v4357 = vpop.f32.mrf.mxu0
          %v4358 = vadd.f32 %v4269, %v4357
          %v4359 = vpop.f32.mrf.mxu0
          %v4360 = vadd.f32 %v4271, %v4359
          %4361 = vmatmul.bf16.gmra.mxu0 %v2095
          %v4362 = vpop.f32.mrf.mxu0
          %v4363 = vadd.f32 %v4274, %v4362
          %v4364 = vpop.f32.mrf.mxu0
          %v4365 = vadd.f32 %v4276, %v4364
          %4366 = vmatmul.bf16.gmra.mxu0 %v2111
          %v4367 = vpop.f32.mrf.mxu0
          %v4368 = vadd.f32 %v4279, %v4367
          %v4369 = vpop.f32.mrf.mxu0
          %v4370 = vadd.f32 %v4281, %v4369
          %4371 = vmatmul.bf16.gmra.mxu0 %v2127
          %v4372 = vpop.f32.mrf.mxu0
          %v4373 = vadd.f32 %v4284, %v4372
          %v4374 = vpop.f32.mrf.mxu0
          %v4375 = vadd.f32 %v4286, %v4374
          %4376 = vmatmul.bf16.gmra.mxu0 %v2143
          %v4377 = vpop.f32.mrf.mxu0
          %v4378 = vadd.f32 %v4289, %v4377
          %v4379 = vpop.f32.mrf.mxu0
          %v4380 = vadd.f32 %v4291, %v4379
          %4381 = vmatmul.bf16.gmra.mxu0 %v2159
          %v4382 = vpop.f32.mrf.mxu0
          %v4383 = vadd.f32 %v4294, %v4382
          %v4384 = vpop.f32.mrf.mxu0
          %v4385 = vadd.f32 %v4296, %v4384
          %4386 = vmatmul.bf16.gmra.mxu0 %v2175
          %v4387 = vpop.f32.mrf.mxu0
          %v4388 = vadd.f32 %v4299, %v4387
          %v4389 = vpop.f32.mrf.mxu0
          %v4390 = vadd.f32 %v4301, %v4389
          %4391 = vdwg.mxu0
          %4392 = vmatpush.bf16.msra.mxu0 %v3090
          %4393 = vmatpush.bf16.msra.mxu0 %v3089
          %4394 = vmatpush.bf16.msra.mxu0 %v3088
          %4395 = vmatpush.bf16.msra.mxu0 %v3087
          %4396 = vmatpush.bf16.msra.mxu0 %v3086
          %4397 = vmatpush.bf16.msra.mxu0 %v3085
          %4398 = vmatpush.bf16.msra.mxu0 %v3084
          %4399 = vmatpush.bf16.msra.mxu0 %v3083
          %4400 = vmatmul.bf16.gmra.mxu0 %v1936
          %v4401 = vpop.f32.mrf.mxu0
          %v4402 = vadd.f32 %v4313, %v4401
          %v4403 = vpop.f32.mrf.mxu0
          %v4404 = vadd.f32 %v4315, %v4403
          %4405 = vmatmul.bf16.gmra.mxu0 %v1952
          %v4406 = vpop.f32.mrf.mxu0
          %v4407 = vadd.f32 %v4318, %v4406
          %v4408 = vpop.f32.mrf.mxu0
          %v4409 = vadd.f32 %v4320, %v4408
          %4410 = vmatmul.bf16.gmra.mxu0 %v1968
          %v4411 = vpop.f32.mrf.mxu0
          %v4412 = vadd.f32 %v4323, %v4411
          %v4413 = vpop.f32.mrf.mxu0
          %v4414 = vadd.f32 %v4325, %v4413
          %4415 = vmatmul.bf16.gmra.mxu0 %v1984
          %v4416 = vpop.f32.mrf.mxu0
          %v4417 = vadd.f32 %v4328, %v4416
          %v4418 = vpop.f32.mrf.mxu0
          %v4419 = vadd.f32 %v4330, %v4418
          %4420 = vmatmul.bf16.gmra.mxu0 %v2000
          %v4421 = vpop.f32.mrf.mxu0
          %v4422 = vadd.f32 %v4333, %v4421
          %v4423 = vpop.f32.mrf.mxu0
          %v4424 = vadd.f32 %v4335, %v4423
          %4425 = vmatmul.bf16.gmra.mxu0 %v2016
          %v4426 = vpop.f32.mrf.mxu0
          %v4427 = vadd.f32 %v4338, %v4426
          %v4428 = vpop.f32.mrf.mxu0
          %v4429 = vadd.f32 %v4340, %v4428
          %4430 = vmatmul.bf16.gmra.mxu0 %v2032
          %v4431 = vpop.f32.mrf.mxu0
          %v4432 = vadd.f32 %v4343, %v4431
          %v4433 = vpop.f32.mrf.mxu0
          %v4434 = vadd.f32 %v4345, %v4433
          %4435 = vmatmul.bf16.gmra.mxu0 %v2048
          %v4436 = vpop.f32.mrf.mxu0
          %v4437 = vadd.f32 %v4348, %v4436
          %v4438 = vpop.f32.mrf.mxu0
          %v4439 = vadd.f32 %v4350, %v4438
          %4440 = vmatmul.bf16.gmra.mxu0 %v2064
          %v4441 = vpop.f32.mrf.mxu0
          %v4442 = vadd.f32 %v4353, %v4441
          %v4443 = vpop.f32.mrf.mxu0
          %v4444 = vadd.f32 %v4355, %v4443
          %4445 = vmatmul.bf16.gmra.mxu0 %v2080
          %v4446 = vpop.f32.mrf.mxu0
          %v4447 = vadd.f32 %v4358, %v4446
          %v4448 = vpop.f32.mrf.mxu0
          %v4449 = vadd.f32 %v4360, %v4448
          %4450 = vmatmul.bf16.gmra.mxu0 %v2096
          %v4451 = vpop.f32.mrf.mxu0
          %v4452 = vadd.f32 %v4363, %v4451
          %v4453 = vpop.f32.mrf.mxu0
          %v4454 = vadd.f32 %v4365, %v4453
          %4455 = vmatmul.bf16.gmra.mxu0 %v2112
          %v4456 = vpop.f32.mrf.mxu0
          %v4457 = vadd.f32 %v4368, %v4456
          %v4458 = vpop.f32.mrf.mxu0
          %v4459 = vadd.f32 %v4370, %v4458
          %4460 = vmatmul.bf16.gmra.mxu0 %v2128
          %v4461 = vpop.f32.mrf.mxu0
          %v4462 = vadd.f32 %v4373, %v4461
          %v4463 = vpop.f32.mrf.mxu0
          %v4464 = vadd.f32 %v4375, %v4463
          %4465 = vmatmul.bf16.gmra.mxu0 %v2144
          %v4466 = vpop.f32.mrf.mxu0
          %v4467 = vadd.f32 %v4378, %v4466
          %v4468 = vpop.f32.mrf.mxu0
          %v4469 = vadd.f32 %v4380, %v4468
          %4470 = vmatmul.bf16.gmra.mxu0 %v2160
          %v4471 = vpop.f32.mrf.mxu0
          %v4472 = vadd.f32 %v4383, %v4471
          %v4473 = vpop.f32.mrf.mxu0
          %v4474 = vadd.f32 %v4385, %v4473
          %4475 = vmatmul.bf16.gmra.mxu0 %v2176
          %v4476 = vpop.f32.mrf.mxu0
          %v4477 = vadd.f32 %v4388, %v4476
          %v4478 = vpop.f32.mrf.mxu0
          %v4479 = vadd.f32 %v4390, %v4478
          %4480 = vdwg.mxu0
          %4481 = vmatpush.bf16.msra.mxu0 %v3098
          %4482 = vmatpush.bf16.msra.mxu0 %v3097
          %4483 = vmatpush.bf16.msra.mxu0 %v3096
          %4484 = vmatpush.bf16.msra.mxu0 %v3095
          %4485 = vmatpush.bf16.msra.mxu0 %v3094
          %4486 = vmatpush.bf16.msra.mxu0 %v3093
          %4487 = vmatpush.bf16.msra.mxu0 %v3092
          %4488 = vmatpush.bf16.msra.mxu0 %v3091
          %4489 = vmatmul.bf16.gmra.mxu0 %v1937
          %v4490 = vpop.f32.mrf.mxu0
          %v4491 = vadd.f32 %v4402, %v4490
          %v4492 = vpop.f32.mrf.mxu0
          %v4493 = vadd.f32 %v4404, %v4492
          %4494 = vmatmul.bf16.gmra.mxu0 %v1953
          %v4495 = vpop.f32.mrf.mxu0
          %v4496 = vadd.f32 %v4407, %v4495
          %v4497 = vpop.f32.mrf.mxu0
          %v4498 = vadd.f32 %v4409, %v4497
          %4499 = vmatmul.bf16.gmra.mxu0 %v1969
          %v4500 = vpop.f32.mrf.mxu0
          %v4501 = vadd.f32 %v4412, %v4500
          %v4502 = vpop.f32.mrf.mxu0
          %v4503 = vadd.f32 %v4414, %v4502
          %4504 = vmatmul.bf16.gmra.mxu0 %v1985
          %v4505 = vpop.f32.mrf.mxu0
          %v4506 = vadd.f32 %v4417, %v4505
          %v4507 = vpop.f32.mrf.mxu0
          %v4508 = vadd.f32 %v4419, %v4507
          %4509 = vmatmul.bf16.gmra.mxu0 %v2001
          %v4510 = vpop.f32.mrf.mxu0
          %v4511 = vadd.f32 %v4422, %v4510
          %v4512 = vpop.f32.mrf.mxu0
          %v4513 = vadd.f32 %v4424, %v4512
          %4514 = vmatmul.bf16.gmra.mxu0 %v2017
          %v4515 = vpop.f32.mrf.mxu0
          %v4516 = vadd.f32 %v4427, %v4515
          %v4517 = vpop.f32.mrf.mxu0
          %v4518 = vadd.f32 %v4429, %v4517
          %4519 = vmatmul.bf16.gmra.mxu0 %v2033
          %v4520 = vpop.f32.mrf.mxu0
          %v4521 = vadd.f32 %v4432, %v4520
          %v4522 = vpop.f32.mrf.mxu0
          %v4523 = vadd.f32 %v4434, %v4522
          %4524 = vmatmul.bf16.gmra.mxu0 %v2049
          %v4525 = vpop.f32.mrf.mxu0
          %v4526 = vadd.f32 %v4437, %v4525
          %v4527 = vpop.f32.mrf.mxu0
          %v4528 = vadd.f32 %v4439, %v4527
          %4529 = vmatmul.bf16.gmra.mxu0 %v2065
          %v4530 = vpop.f32.mrf.mxu0
          %v4531 = vadd.f32 %v4442, %v4530
          %v4532 = vpop.f32.mrf.mxu0
          %v4533 = vadd.f32 %v4444, %v4532
          %4534 = vmatmul.bf16.gmra.mxu0 %v2081
          %v4535 = vpop.f32.mrf.mxu0
          %v4536 = vadd.f32 %v4447, %v4535
          %v4537 = vpop.f32.mrf.mxu0
          %v4538 = vadd.f32 %v4449, %v4537
          %4539 = vmatmul.bf16.gmra.mxu0 %v2097
          %v4540 = vpop.f32.mrf.mxu0
          %v4541 = vadd.f32 %v4452, %v4540
          %v4542 = vpop.f32.mrf.mxu0
          %v4543 = vadd.f32 %v4454, %v4542
          %4544 = vmatmul.bf16.gmra.mxu0 %v2113
          %v4545 = vpop.f32.mrf.mxu0
          %v4546 = vadd.f32 %v4457, %v4545
          %v4547 = vpop.f32.mrf.mxu0
          %v4548 = vadd.f32 %v4459, %v4547
          %4549 = vmatmul.bf16.gmra.mxu0 %v2129
          %v4550 = vpop.f32.mrf.mxu0
          %v4551 = vadd.f32 %v4462, %v4550
          %v4552 = vpop.f32.mrf.mxu0
          %v4553 = vadd.f32 %v4464, %v4552
          %4554 = vmatmul.bf16.gmra.mxu0 %v2145
          %v4555 = vpop.f32.mrf.mxu0
          %v4556 = vadd.f32 %v4467, %v4555
          %v4557 = vpop.f32.mrf.mxu0
          %v4558 = vadd.f32 %v4469, %v4557
          %4559 = vmatmul.bf16.gmra.mxu0 %v2161
          %v4560 = vpop.f32.mrf.mxu0
          %v4561 = vadd.f32 %v4472, %v4560
          %v4562 = vpop.f32.mrf.mxu0
          %v4563 = vadd.f32 %v4474, %v4562
          %4564 = vmatmul.bf16.gmra.mxu0 %v2177
          %v4565 = vpop.f32.mrf.mxu0
          %v4566 = vadd.f32 %v4477, %v4565
          %v4567 = vpop.f32.mrf.mxu0
          %v4568 = vadd.f32 %v4479, %v4567
          %4569 = vdwg.mxu0
          %4570 = vmatpush.bf16.msra.mxu0 %v3106
          %4571 = vmatpush.bf16.msra.mxu0 %v3105
          %4572 = vmatpush.bf16.msra.mxu0 %v3104
          %4573 = vmatpush.bf16.msra.mxu0 %v3103
          %4574 = vmatpush.bf16.msra.mxu0 %v3102
          %4575 = vmatpush.bf16.msra.mxu0 %v3101
          %4576 = vmatpush.bf16.msra.mxu0 %v3100
          %4577 = vmatpush.bf16.msra.mxu0 %v3099
          %4578 = vmatmul.bf16.gmra.mxu0 %v1938
          %v4579 = vpop.f32.mrf.mxu0
          %v4580 = vadd.f32 %v4491, %v4579
          %v4581 = vpop.f32.mrf.mxu0
          %v4582 = vadd.f32 %v4493, %v4581
          %4583 = vmatmul.bf16.gmra.mxu0 %v1954
          %v4584 = vpop.f32.mrf.mxu0
          %v4585 = vadd.f32 %v4496, %v4584
          %v4586 = vpop.f32.mrf.mxu0
          %v4587 = vadd.f32 %v4498, %v4586
          %4588 = vmatmul.bf16.gmra.mxu0 %v1970
          %v4589 = vpop.f32.mrf.mxu0
          %v4590 = vadd.f32 %v4501, %v4589
          %v4591 = vpop.f32.mrf.mxu0
          %v4592 = vadd.f32 %v4503, %v4591
          %4593 = vmatmul.bf16.gmra.mxu0 %v1986
          %v4594 = vpop.f32.mrf.mxu0
          %v4595 = vadd.f32 %v4506, %v4594
          %v4596 = vpop.f32.mrf.mxu0
          %v4597 = vadd.f32 %v4508, %v4596
          %4598 = vmatmul.bf16.gmra.mxu0 %v2002
          %v4599 = vpop.f32.mrf.mxu0
          %v4600 = vadd.f32 %v4511, %v4599
          %v4601 = vpop.f32.mrf.mxu0
          %v4602 = vadd.f32 %v4513, %v4601
          %4603 = vmatmul.bf16.gmra.mxu0 %v2018
          %v4604 = vpop.f32.mrf.mxu0
          %v4605 = vadd.f32 %v4516, %v4604
          %v4606 = vpop.f32.mrf.mxu0
          %v4607 = vadd.f32 %v4518, %v4606
          %4608 = vmatmul.bf16.gmra.mxu0 %v2034
          %v4609 = vpop.f32.mrf.mxu0
          %v4610 = vadd.f32 %v4521, %v4609
          %v4611 = vpop.f32.mrf.mxu0
          %v4612 = vadd.f32 %v4523, %v4611
          %4613 = vmatmul.bf16.gmra.mxu0 %v2050
          %v4614 = vpop.f32.mrf.mxu0
          %v4615 = vadd.f32 %v4526, %v4614
          %v4616 = vpop.f32.mrf.mxu0
          %v4617 = vadd.f32 %v4528, %v4616
          %4618 = vmatmul.bf16.gmra.mxu0 %v2066
          %v4619 = vpop.f32.mrf.mxu0
          %v4620 = vadd.f32 %v4531, %v4619
          %v4621 = vpop.f32.mrf.mxu0
          %v4622 = vadd.f32 %v4533, %v4621
          %4623 = vmatmul.bf16.gmra.mxu0 %v2082
          %v4624 = vpop.f32.mrf.mxu0
          %v4625 = vadd.f32 %v4536, %v4624
          %v4626 = vpop.f32.mrf.mxu0
          %v4627 = vadd.f32 %v4538, %v4626
          %4628 = vmatmul.bf16.gmra.mxu0 %v2098
          %v4629 = vpop.f32.mrf.mxu0
          %v4630 = vadd.f32 %v4541, %v4629
          %v4631 = vpop.f32.mrf.mxu0
          %v4632 = vadd.f32 %v4543, %v4631
          %4633 = vmatmul.bf16.gmra.mxu0 %v2114
          %v4634 = vpop.f32.mrf.mxu0
          %v4635 = vadd.f32 %v4546, %v4634
          %v4636 = vpop.f32.mrf.mxu0
          %v4637 = vadd.f32 %v4548, %v4636
          %4638 = vmatmul.bf16.gmra.mxu0 %v2130
          %v4639 = vpop.f32.mrf.mxu0
          %v4640 = vadd.f32 %v4551, %v4639
          %v4641 = vpop.f32.mrf.mxu0
          %v4642 = vadd.f32 %v4553, %v4641
          %4643 = vmatmul.bf16.gmra.mxu0 %v2146
          %v4644 = vpop.f32.mrf.mxu0
          %v4645 = vadd.f32 %v4556, %v4644
          %v4646 = vpop.f32.mrf.mxu0
          %v4647 = vadd.f32 %v4558, %v4646
          %4648 = vmatmul.bf16.gmra.mxu0 %v2162
          %v4649 = vpop.f32.mrf.mxu0
          %v4650 = vadd.f32 %v4561, %v4649
          %v4651 = vpop.f32.mrf.mxu0
          %v4652 = vadd.f32 %v4563, %v4651
          %4653 = vmatmul.bf16.gmra.mxu0 %v2178
          %v4654 = vpop.f32.mrf.mxu0
          %v4655 = vadd.f32 %v4566, %v4654
          %v4656 = vpop.f32.mrf.mxu0
          %v4657 = vadd.f32 %v4568, %v4656
          %4658 = vdwg.mxu0
          %v4659 = vadd.f32 %v2179, %v4580
          %v4660 = vadd.f32 %v2180, %v4582
          %v4661 = vadd.f32 %v2181, %v4585
          %v4662 = vadd.f32 %v2182, %v4587
          %v4663 = vadd.f32 %v2183, %v4590
          %v4664 = vadd.f32 %v2184, %v4592
          %v4665 = vadd.f32 %v2185, %v4595
          %v4666 = vadd.f32 %v2186, %v4597
          %v4667 = vadd.f32 %v2187, %v4600
          %v4668 = vadd.f32 %v2188, %v4602
          %v4669 = vadd.f32 %v2189, %v4605
          %v4670 = vadd.f32 %v2190, %v4607
          %v4671 = vadd.f32 %v2191, %v4610
          %v4672 = vadd.f32 %v2192, %v4612
          %v4673 = vadd.f32 %v2193, %v4615
          %v4674 = vadd.f32 %v2194, %v4617
          %v4675 = vadd.f32 %v2195, %v4620
          %v4676 = vadd.f32 %v2196, %v4622
          %v4677 = vadd.f32 %v2197, %v4625
          %v4678 = vadd.f32 %v2198, %v4627
          %v4679 = vadd.f32 %v2199, %v4630
          %v4680 = vadd.f32 %v2200, %v4632
          %v4681 = vadd.f32 %v2201, %v4635
          %v4682 = vadd.f32 %v2202, %v4637
          %v4683 = vadd.f32 %v2203, %v4640
          %v4684 = vadd.f32 %v2204, %v4642
          %v4685 = vadd.f32 %v2205, %v4645
          %v4686 = vadd.f32 %v2206, %v4647
          %v4687 = vadd.f32 %v2207, %v4650
          %v4688 = vadd.f32 %v2208, %v4652
          %v4689 = vadd.f32 %v2209, %v4655
          %v4690 = vadd.f32 %v2210, %v4657
          %4691 = vst [vmem:[%s247] sm:$0xff] %v4659
          %4692 = vst [vmem:[%s247 + $0x8] sm:$0xff] %v4660
          %4693 = vst [vmem:[%s247 + $0x10] sm:$0xff] %v4661
          %4694 = vst [vmem:[%s247 + $0x18] sm:$0xff] %v4662
          %4695 = vst [vmem:[%s247 + $0x20] sm:$0xff] %v4663
          %4696 = vst [vmem:[%s247 + $0x28] sm:$0xff] %v4664
          %4697 = vst [vmem:[%s247 + $0x30] sm:$0xff] %v4665
          %4698 = vst [vmem:[%s247 + $0x38] sm:$0xff] %v4666
          %4699 = vst [vmem:[%s247 + $0x40] sm:$0xff] %v4667
          %4700 = vst [vmem:[%s247 + $0x48] sm:$0xff] %v4668
          %4701 = vst [vmem:[%s247 + $0x50] sm:$0xff] %v4669
          %4702 = vst [vmem:[%s247 + $0x58] sm:$0xff] %v4670
          %4703 = vst [vmem:[%s247 + $0x60] sm:$0xff] %v4671
          %4704 = vst [vmem:[%s247 + $0x68] sm:$0xff] %v4672
          %4705 = vst [vmem:[%s247 + $0x70] sm:$0xff] %v4673
          %4706 = vst [vmem:[%s247 + $0x78] sm:$0xff] %v4674
          %4707 = vst [vmem:[%s247 + $0x80] sm:$0xff] %v4675
          %4708 = vst [vmem:[%s247 + $0x88] sm:$0xff] %v4676
          %4709 = vst [vmem:[%s247 + $0x90] sm:$0xff] %v4677
          %4710 = vst [vmem:[%s247 + $0x98] sm:$0xff] %v4678
          %4711 = vst [vmem:[%s247 + $0xa0] sm:$0xff] %v4679
          %4712 = vst [vmem:[%s247 + $0xa8] sm:$0xff] %v4680
          %4713 = vst [vmem:[%s247 + $0xb0] sm:$0xff] %v4681
          %4714 = vst [vmem:[%s247 + $0xb8] sm:$0xff] %v4682
          %4715 = vst [vmem:[%s247 + $0xc0] sm:$0xff] %v4683
          %4716 = vst [vmem:[%s247 + $0xc8] sm:$0xff] %v4684
          %4717 = vst [vmem:[%s247 + $0xd0] sm:$0xff] %v4685
          %4718 = vst [vmem:[%s247 + $0xd8] sm:$0xff] %v4686
          %4719 = vst [vmem:[%s247 + $0xe0] sm:$0xff] %v4687
          %4720 = vst [vmem:[%s247 + $0xe8] sm:$0xff] %v4688
          %4721 = vst [vmem:[%s247 + $0xf0] sm:$0xff] %v4689
          %4722 = vst [vmem:[%s247 + $0xf8] sm:$0xff] %v4690
        $region44: #{tpu_custom_call.1} parent=27 // pred_fallthru
          _
        %p4723 = scmp.eq.s32.totalorder %s42, 1
        // Predicated region
        $region45: #{tpu_custom_call.1} parent=27 // pred_check
          %p4724 = pneg %p4723
        $region46: #{tpu_custom_call.1} parent=27 // pred_check_branch
          %4726 = sbr.rel (%p4724) target = $region48
        $region47: #{tpu_custom_call.1} parent=27 // pred_region
          %v4727 = vld [vmem:[%s247] sm:$0xff]
          %v4728 = vld [vmem:[%s247 + $0x8] sm:$0xff]
          %v4729 = vld [vmem:[%s247 + $0x10] sm:$0xff]
          %v4730 = vld [vmem:[%s247 + $0x18] sm:$0xff]
          %v4731 = vld [vmem:[%s247 + $0x20] sm:$0xff]
          %v4732 = vld [vmem:[%s247 + $0x28] sm:$0xff]
          %v4733 = vld [vmem:[%s247 + $0x30] sm:$0xff]
          %v4734 = vld [vmem:[%s247 + $0x38] sm:$0xff]
          %v4735 = vld [vmem:[%s247 + $0x40] sm:$0xff]
          %v4736 = vld [vmem:[%s247 + $0x48] sm:$0xff]
          %v4737 = vld [vmem:[%s247 + $0x50] sm:$0xff]
          %v4738 = vld [vmem:[%s247 + $0x58] sm:$0xff]
          %v4739 = vld [vmem:[%s247 + $0x60] sm:$0xff]
          %v4740 = vld [vmem:[%s247 + $0x68] sm:$0xff]
          %v4741 = vld [vmem:[%s247 + $0x70] sm:$0xff]
          %v4742 = vld [vmem:[%s247 + $0x78] sm:$0xff]
          %v4743 = vld [vmem:[%s247 + $0x80] sm:$0xff]
          %v4744 = vld [vmem:[%s247 + $0x88] sm:$0xff]
          %v4745 = vld [vmem:[%s247 + $0x90] sm:$0xff]
          %v4746 = vld [vmem:[%s247 + $0x98] sm:$0xff]
          %v4747 = vld [vmem:[%s247 + $0xa0] sm:$0xff]
          %v4748 = vld [vmem:[%s247 + $0xa8] sm:$0xff]
          %v4749 = vld [vmem:[%s247 + $0xb0] sm:$0xff]
          %v4750 = vld [vmem:[%s247 + $0xb8] sm:$0xff]
          %v4751 = vld [vmem:[%s247 + $0xc0] sm:$0xff]
          %v4752 = vld [vmem:[%s247 + $0xc8] sm:$0xff]
          %v4753 = vld [vmem:[%s247 + $0xd0] sm:$0xff]
          %v4754 = vld [vmem:[%s247 + $0xd8] sm:$0xff]
          %v4755 = vld [vmem:[%s247 + $0xe0] sm:$0xff]
          %v4756 = vld [vmem:[%s247 + $0xe8] sm:$0xff]
          %v4757 = vld [vmem:[%s247 + $0xf0] sm:$0xff]
          %v4758 = vld [vmem:[%s247 + $0xf8] sm:$0xff]
          %v4759 = vmul.f32 %v4727, 0.31622776
          %v4760 = vmul.f32 %v4728, 0.31622776
          %v4761 = vmul.f32 %v4729, 0.31622776
          %v4762 = vmul.f32 %v4730, 0.31622776
          %v4763 = vmul.f32 %v4731, 0.31622776
          %v4764 = vmul.f32 %v4732, 0.31622776
          %v4765 = vmul.f32 %v4733, 0.31622776
          %v4766 = vmul.f32 %v4734, 0.31622776
          %v4767 = vmul.f32 %v4735, 0.31622776
          %v4768 = vmul.f32 %v4736, 0.31622776
          %v4769 = vmul.f32 %v4737, 0.31622776
          %v4770 = vmul.f32 %v4738, 0.31622776
          %v4771 = vmul.f32 %v4739, 0.31622776
          %v4772 = vmul.f32 %v4740, 0.31622776
          %v4773 = vmul.f32 %v4741, 0.31622776
          %v4774 = vmul.f32 %v4742, 0.31622776
          %v4775 = vmul.f32 %v4743, 0.31622776
          %v4776 = vmul.f32 %v4744, 0.31622776
          %v4777 = vmul.f32 %v4745, 0.31622776
          %v4778 = vmul.f32 %v4746, 0.31622776
          %v4779 = vmul.f32 %v4747, 0.31622776
          %v4780 = vmul.f32 %v4748, 0.31622776
          %v4781 = vmul.f32 %v4749, 0.31622776
          %v4782 = vmul.f32 %v4750, 0.31622776
          %v4783 = vmul.f32 %v4751, 0.31622776
          %v4784 = vmul.f32 %v4752, 0.31622776
          %v4785 = vmul.f32 %v4753, 0.31622776
          %v4786 = vmul.f32 %v4754, 0.31622776
          %v4787 = vmul.f32 %v4755, 0.31622776
          %v4788 = vmul.f32 %v4756, 0.31622776
          %v4789 = vmul.f32 %v4757, 0.31622776
          %v4790 = vmul.f32 %v4758, 0.31622776
          %4791 = vst [vmem:[%s247] sm:$0xff] %v4759
          %4792 = vst [vmem:[%s247 + $0x8] sm:$0xff] %v4760
          %4793 = vst [vmem:[%s247 + $0x10] sm:$0xff] %v4761
          %4794 = vst [vmem:[%s247 + $0x18] sm:$0xff] %v4762
          %4795 = vst [vmem:[%s247 + $0x20] sm:$0xff] %v4763
          %4796 = vst [vmem:[%s247 + $0x28] sm:$0xff] %v4764
          %4797 = vst [vmem:[%s247 + $0x30] sm:$0xff] %v4765
          %4798 = vst [vmem:[%s247 + $0x38] sm:$0xff] %v4766
          %4799 = vst [vmem:[%s247 + $0x40] sm:$0xff] %v4767
          %4800 = vst [vmem:[%s247 + $0x48] sm:$0xff] %v4768
          %4801 = vst [vmem:[%s247 + $0x50] sm:$0xff] %v4769
          %4802 = vst [vmem:[%s247 + $0x58] sm:$0xff] %v4770
          %4803 = vst [vmem:[%s247 + $0x60] sm:$0xff] %v4771
          %4804 = vst [vmem:[%s247 + $0x68] sm:$0xff] %v4772
          %4805 = vst [vmem:[%s247 + $0x70] sm:$0xff] %v4773
          %4806 = vst [vmem:[%s247 + $0x78] sm:$0xff] %v4774
          %4807 = vst [vmem:[%s247 + $0x80] sm:$0xff] %v4775
          %4808 = vst [vmem:[%s247 + $0x88] sm:$0xff] %v4776
          %4809 = vst [vmem:[%s247 + $0x90] sm:$0xff] %v4777
          %4810 = vst [vmem:[%s247 + $0x98] sm:$0xff] %v4778
          %4811 = vst [vmem:[%s247 + $0xa0] sm:$0xff] %v4779
          %4812 = vst [vmem:[%s247 + $0xa8] sm:$0xff] %v4780
          %4813 = vst [vmem:[%s247 + $0xb0] sm:$0xff] %v4781
          %4814 = vst [vmem:[%s247 + $0xb8] sm:$0xff] %v4782
          %4815 = vst [vmem:[%s247 + $0xc0] sm:$0xff] %v4783
          %4816 = vst [vmem:[%s247 + $0xc8] sm:$0xff] %v4784
          %4817 = vst [vmem:[%s247 + $0xd0] sm:$0xff] %v4785
          %4818 = vst [vmem:[%s247 + $0xd8] sm:$0xff] %v4786
          %4819 = vst [vmem:[%s247 + $0xe0] sm:$0xff] %v4787
          %4820 = vst [vmem:[%s247 + $0xe8] sm:$0xff] %v4788
          %4821 = vst [vmem:[%s247 + $0xf0] sm:$0xff] %v4789
          %4822 = vst [vmem:[%s247 + $0xf8] sm:$0xff] %v4790
        $region48: #{tpu_custom_call.1} parent=27 // pred_fallthru
          _
        %s4823 = sand.u32 %s121, 1
        %s4824 = scalar_lea.sflag [#allocation7], %s4823
        %s4825 = sand.u32 %s121, 1
        %s4826 = smul.addr %s4825, 256
        %s4827 = scalar_lea.vmem [#allocation10], %s4826
        // Predicated region
        $region49: #{tpu_custom_call.1} parent=27 // pred_check
          %p4828 = pneg %p131
        $region50: #{tpu_custom_call.1} parent=27 // pred_check_branch
          %4830 = sbr.rel (%p4828) target = $region52
        $region51: #{tpu_custom_call.1} parent=27 // pred_region
          %s4831 = smul.u32 32, %s41
          %s4832 = ssub.s32 75, %s4831
          %p4833 = scmp.lt.s32.totalorder %s4832, 32
          %s4834 = scalar_select %p4833, %s4832, 32
          %s4835 = smul.u32 8, %s4834
          %s4836 = ssub.s32 256, %s4835
          %s4837 = sshll.u32 %s4836, 4
          %4838 = vsyncadd %s4824, %s4837
          %p4839 = scmp.ne.s32.totalorder 0, %s4835
          %s4840 = smul.addr %s4831, 8
          %s4841 = scalar_lea.hbm %s4, %s4840
          %s4842 = smul.u32 8, %s4834
          %s4843 = sshll.u32 %s4827, 4
          %s4844 = int_to_ptr.vmem [resolvable:$true] %s4843
          %s4845 = sshll.u32 %s4841, 4
          %s4846 = int_to_ptr.hbm [resolvable:$true] %s4845
          %s4847 = sshll.u32 %s4842, 4
          %4851 = dma.vmem_to_hbm [thread:$0]  (%p4839), %s4844, %s4847, %s4846, %s4824, 128, 128, 8
        $region52: #{tpu_custom_call.1} parent=27 // pred_fallthru
          _
      $region28: #{tpu_custom_call.1} parent=5 // pred_fallthru
        _
      %p4852 = scmp.le.s32.totalorder 2, %s32
      // Predicated region
      $region53: #{tpu_custom_call.1} parent=5 // pred_check
        %p4853 = pneg %p4852
      $region54: #{tpu_custom_call.1} parent=5 // pred_check_branch
        %4855 = sbr.rel (%p4853) target = $region56
      $region55: #{tpu_custom_call.1} parent=5 // pred_region
        %s4856 = ssub.s32 %s32, 2
        // Predicated region
        $region57: #{tpu_custom_call.1} parent=55 // pred_check
          %p4857 = pneg %p137
        $region58: #{tpu_custom_call.1} parent=55 // pred_check_branch
          %4859 = sbr.rel (%p4857) target = $region60
        $region59: #{tpu_custom_call.1} parent=55 // pred_region
          %s4860 = sand.u32 %s122, 1
          %s4861 = scalar_lea.sflag [#allocation7], %s4860
          %s4862 = sand.u32 %s122, 1
          %s4863 = smul.addr %s4862, 256
          %s4864 = scalar_lea.vmem [#allocation10], %s4863
          %4866 = dma.done %s4861, 4096
        $region60: #{tpu_custom_call.1} parent=55 // pred_fallthru
          _
      $region56: #{tpu_custom_call.1} parent=5 // pred_fallthru
        _
    $region6: #{tpu_custom_call.1} parent=1 // loop_footer
      %s36 = sadd.s32 1, %s32
    $region7: #{tpu_custom_call.1} parent=1 // loop_footer_branch
      %31 = sbr.rel target = $region3
    $region8: #{tpu_custom_call.1} parent=1 // loop_exit
      _
    %4867 = vsyncpa [#allocation6], 1
    %s4868 = scalar_lea.sflag [#allocation6], 1
    %4869 = vsyncpa %s4868, 1
    %4870 = vsyncpa [#allocation9], 1
    %s4871 = scalar_lea.sflag [#allocation9], 1
    %4872 = vsyncpa %s4871, 1
    %4873 = vsyncpa [#allocation7], 1
    %s4874 = scalar_lea.sflag [#allocation7], 1
    %4875 = vsyncpa %s4874, 1

</llo_original>
